<compile_context>
chip_gen: v6e
topology: v6e:2x2x1
jax: 0.10.0
libtpu: 0.0.40
codegen_flags: <defaults>
</compile_context>

<pallas_src>
import functools
import math

import jax
import jax.numpy as jnp
from jax.experimental import pallas as pl
from jax.experimental.pallas import tpu as pltpu

EPS = 1e-5  # nn.LayerNorm default


def _layernorm(x, g, b):
    mu = jnp.mean(x, axis=-1, keepdims=True)
    var = jnp.mean((x - mu) ** 2, axis=-1, keepdims=True)
    return (x - mu) * jax.lax.rsqrt(var + EPS) * g + b


def _erf(x):
    # Abramowitz & Stegun 7.1.26 (|abs err| < 1.5e-7): matches exact erf to f32
    # noise using only exp + VPU ops (safe lowering on v5e/v6e/v7x Mosaic).
    p = 0.3275911
    a1, a2, a3, a4, a5 = (0.254829592, -0.284496736, 1.421413741,
                          -1.453152027, 1.061405429)
    s = jnp.where(x >= 0.0, 1.0, -1.0)
    ax = jnp.abs(x)
    t = 1.0 / (1.0 + p * ax)
    poly = ((((a5 * t + a4) * t + a3) * t + a2) * t + a1) * t
    return s * (1.0 - poly * jnp.exp(-ax * ax))


def _gelu(x):
    # PyTorch nn.GELU default is the exact erf form.
    return 0.5 * x * (1.0 + _erf(x * 0.7071067811865476))


def _bf16(x):
    return x.astype(jnp.bfloat16)


# ------------------------------ fused kernel ------------------------------

def mesh_encoder_kernel(feats_ref, centers_ref, w_pe_ref, w_pos1_ref, w_pos2_ref,
                        evec_ref, w_qkv_ref, w_proj_ref, w_fc1_ref, w_fc2_ref,
                        bvec_ref, out_ref, av_sc, *, num_heads, batch, pad_to):
    BN = feats_ref.shape[0]
    depth, D, _ = w_proj_ref.shape
    B = batch
    N = BN // B
    hd = D // num_heads

    # Packed embed/pos/final-norm vectors: rows = [b_pe, ln_pe_g, ln_pe_b,
    #                                              b_pos1, b_pos2, ln_f_g, ln_f_b, 0]
    ev = evec_ref[...]
    b_pe, ln_pe_g, ln_pe_b = ev[0:1, 0:D], ev[1:2, 0:D], ev[2:3, 0:D]
    b_pos1 = ev[3:4, 0:128]
    b_pos2 = ev[4:5, 0:D]
    ln_f_g, ln_f_b = ev[5:6, 0:D], ev[6:7, 0:D]

    # --- to_patch_embedding: Rearrange('b c h p -> b h (p c)') done wrapper-side,
    #     so this is ONE lane-dense (BN, P*C) @ (P*C, D) MXU contraction.
    tok = jnp.dot(feats_ref[...], w_pe_ref[...],
                  preferred_element_type=jnp.float32) + b_pe
    tok = _layernorm(tok, ln_pe_g, ln_pe_b)

    # --- pos_embedding on precomputed per-patch centers:
    #     Linear(3->128, rows zero-padded to 8) -> GELU -> Linear(128->D).
    h = jnp.dot(centers_ref[...], w_pos1_ref[...],
                preferred_element_type=jnp.float32) + b_pos1
    h = _gelu(h)
    pos = jnp.dot(_bf16(h), w_pos2_ref[...],
                  preferred_element_type=jnp.float32) + b_pos2
    tok = tok + pos                                              # (BN, D) f32

    # --- transformer blocks (timm Block: x += Attn(LN1(x)); x += MLP(LN2(x));
    #     drop_path is stochastic depth -> identity at inference).
    for l in range(depth):
        bv = bvec_ref[l]                                         # (8, 128) packed f32 rows
        x = tok
        hpre = _layernorm(x, bv[0:1, 0:D], bv[1:2, 0:D])
        qkv = jnp.dot(_bf16(hpre), w_qkv_ref[l],
                      preferred_element_type=jnp.float32) + bv[2:3, 0:3 * D]
        # 1/sqrt(hd) is already folded into the Q columns of W_qkv (and its bias).
        q = _bf16(qkv[:, 0:D].reshape(B, N, D))
        k = _bf16(qkv[:, D:2 * D].reshape(B, N, D))
        v = _bf16(qkv[:, 2 * D:3 * D].reshape(B, N, D))

        # Per-batch, per-head attention: (B, N, N) scores per head, no cross-batch
        # waste, no additive mask; each head's output goes into its lane slice of
        # the VMEM scratch.
        for hh in range(num_heads):
            sl = slice(hh * hd, (hh + 1) * hd)
            s = jnp.einsum('bqd,bkd->bqk', q[:, :, sl], k[:, :, sl],
                           preferred_element_type=jnp.float32)   # (B, N, N) f32
            s = s - jnp.max(s, axis=-1, keepdims=True)
            e = jnp.exp(s)
            a = e * pl.reciprocal(jnp.sum(e, axis=-1, keepdims=True), approx=True)
            av_sc[:, :, sl] = jnp.einsum('bqk,bkd->bqd', _bf16(a), v[:, :, sl],
                                         preferred_element_type=jnp.float32)

        # Single (BN, D) @ (D, D) output projection over all heads (no per-head
        # depth-8 matmuls, no head concat).
        attn_out = jnp.dot(_bf16(av_sc[...].reshape(BN, D)), w_proj_ref[l],
                           preferred_element_type=jnp.float32) + bv[3:4, 0:D]
        x1 = x + attn_out

        h2 = _layernorm(x1, bv[4:5, 0:D], bv[5:6, 0:D])
        m = _gelu(jnp.dot(_bf16(h2), w_fc1_ref[l],
                          preferred_element_type=jnp.float32) + bv[6:7, 0:4 * D])
        m = jnp.dot(_bf16(m), w_fc2_ref[l],
                    preferred_element_type=jnp.float32) + bv[7:8, 0:D]
        tok = x1 + m

    # --- final LayerNorm, zero-pad to 256 tokens, MaxPool2d((256,1)).squeeze(1)
    #     == per-batch max over the sequence, clamped at 0 by the zero padding.
    xf = _layernorm(tok, ln_f_g, ln_f_b).reshape(B, N, D)
    pooled = jnp.max(xf, axis=1)                                 # (B, D)
    if N < pad_to:
        # zero padding rows (256 - N of them) clamp the max at zero; no clamp when
        # N == pad_to (matches the PyTorch concat semantics at the boundary).
        pooled = jnp.maximum(pooled, 0.0)
    out_ref[...] = pooled


# ------------------------------ params / wrapper ------------------------------

def _xavier(key, fan_in, fan_out):
    a = math.sqrt(6.0 / (fan_in + fan_out))
    return jax.random.uniform(key, (fan_in, fan_out), jnp.float32, -a, a)


def init_params(key, *, channels, patch_size, embed_dim, depth, num_heads):
    C, P, D = channels, patch_size, embed_dim
    W = max(128, 4 * D)                       # packed-vector lane width
    hd = D // num_heads
    scale = 1.0 / math.sqrt(hd)
    keys = iter(jax.random.split(key, 3 + 4 * depth))
    z = lambda n: jnp.zeros((n,), jnp.float32)
    o = lambda n: jnp.ones((n,), jnp.float32)
    row = lambda v: jnp.pad(v, (0, W - v.shape[0]))

    # Linear(C*P -> D); the Rearrange layout is produced by the wrapper's
    # transpose+reshape, so this is the plain (P*C, D) matrix.
    w_pe = _xavier(next(keys), P * C, D)

    # Linear(3 -> 128): rows 3..7 zero-padded so the MXU contraction depth is 8.
    w_pos1 = jnp.pad(_xavier(next(keys), 3, 128), ((0, 5), (0, 0)))
    w_pos2 = _xavier(next(keys), 128, D)

    embed_vec = jnp.stack([
        row(z(D)),    # b_pe
        row(o(D)),    # to_patch_embedding LayerNorm gamma
        row(z(D)),    # to_patch_embedding LayerNorm beta
        row(z(128)),  # b_pos1
        row(z(D)),    # b_pos2
        row(o(D)),    # final norm gamma
        row(z(D)),    # final norm beta
        row(z(D)),    # unused
    ])

    w_qkv, w_proj, w_fc1, w_fc2, bvec = [], [], [], [], []
    for _ in range(depth):
        # Fold the 1/sqrt(head_dim) attention scale into the Q columns of W_qkv
        # (and the matching bias entries, which are 0 per _init_weights).
        wq = _xavier(next(keys), D, 3 * D)
        wq = wq.at[:, 0:D].multiply(scale)
        b_qkv = z(3 * D).at[0:D].multiply(scale)
        w_qkv.append(wq)
        w_proj.append(_xavier(next(keys), D, D))
        w_fc1.append(_xavier(next(keys), D, 4 * D))
        w_fc2.append(_xavier(next(keys), 4 * D, D))
        bvec.append(jnp.stack([
            row(o(D)), row(z(D)),          # ln1 gamma / beta
            row(b_qkv), row(z(D)),         # qkv bias (Q part pre-scaled) / proj bias
            row(o(D)), row(z(D)),          # ln2 gamma / beta
            row(z(4 * D)), row(z(D)),      # fc1 bias / fc2 bias
        ]))

    bf = lambda x: x.astype(jnp.bfloat16)
    return {
        # MXU weights in bf16 (v6e/v7x MXU-native, fine on v5e MXU); vector
        # (bias / LayerNorm) params stay f32 for v5e VPU/EUP.
        "w_pe": bf(w_pe), "w_pos1": bf(w_pos1), "w_pos2": bf(w_pos2),
        "embed_vec": embed_vec,
        "w_qkv": bf(jnp.stack(w_qkv)), "w_proj": bf(jnp.stack(w_proj)),
        "w_fc1": bf(jnp.stack(w_fc1)), "w_fc2": bf(jnp.stack(w_fc2)),
        "blk_vec": jnp.stack(bvec),
    }


def mesh_encoder_forward(params, faces, feats, centers, Fs, cordinates, *, num_heads):
    del faces, Fs, cordinates  # unused by the reference forward pass
    B, C, N, P = feats.shape
    D = params["w_pos2"].shape[1]
    assert N <= 256, "MaxPool2d((256,1)) assumes num_patches <= 256"

    # Rearrange('b c h p -> b h (p c)') as one XLA transpose+reshape so the kernel's
    # patch embedding is a single lane-dense (B*N, P*C) matmul.
    feats2 = jnp.transpose(feats, (0, 2, 3, 1)).reshape(B * N, P * C)
    feats2 = feats2.astype(jnp.bfloat16)

    # torch.sum(centers, dim=2) / 64 (trivial fused XLA reduction); pad 3 -> 8 lanes
    # to match the zero-padded w_pos1 rows.
    centers_mean = (jnp.sum(centers, axis=2) / 64.0).reshape(B * N, 3)
    centers_mean = jnp.pad(centers_mean, ((0, 0), (0, 5))).astype(jnp.bfloat16)

    vmem = lambda: pl.BlockSpec(memory_space=pltpu.MemorySpace.VMEM)
    kernel = functools.partial(mesh_encoder_kernel, num_heads=num_heads,
                               batch=B, pad_to=256)
    # TODO(synk): for realistic mesh sizes, add a grid over batch / token tiles with
    # dimension_semantics=("parallel", ...) (v7x has 2 TensorCores, 64 MiB VMEM).
    return pl.pallas_call(
        kernel,
        out_shape=jax.ShapeDtypeStruct((B, D), jnp.float32),
        in_specs=[vmem() for _ in range(11)],
        out_specs=vmem(),
        scratch_shapes=[pltpu.VMEM((B, N, D), jnp.float32)],
    )(feats2, centers_mean, params["w_pe"], params["w_pos1"], params["w_pos2"],
      params["embed_vec"], params["w_qkv"], params["w_proj"],
      params["w_fc1"], params["w_fc2"], params["blk_vec"])


if __name__ == "__main__":
    B, C, N, P = 2, 10, 8, 64          # batch, channels, num_patches, patch_size
    D, H, depth = 32, 4, 2             # embed_dim, num_heads, encoder_depth

    key = jax.random.PRNGKey(0)
    kp, kf, kc = jax.random.split(key, 3)
    params = init_params(kp, channels=C, patch_size=P, embed_dim=D, depth=depth,
                         num_heads=H)

    feats = jax.random.normal(kf, (B, C, N, P), jnp.float32)
    centers = jax.random.normal(kc, (B, N, 64, 3), jnp.float32)
    faces = jnp.zeros((B, N, 64, 3), jnp.int32)            # unused by forward
    Fs = jnp.full((B,), N * 64, jnp.int32)                 # unused by forward
    cordinates = jnp.zeros((B, N, 64, 3), jnp.float32)     # unused by forward

    out = mesh_encoder_forward(params, faces, feats, centers, Fs, cordinates,
                               num_heads=H)
    out = jax.block_until_ready(out)
    assert out.shape == (B, D) and out.dtype == jnp.float32
    print("KERNEL_OK")
</pallas_src>

<mosaic_0001>
module attributes {stable_mosaic.version = 11 : i64} {
  func.func @mesh_encoder_kernel(%arg0: memref<16x640xbf16, #tpu.memory_space<vmem>>, %arg1: memref<16x8xbf16, #tpu.memory_space<vmem>>, %arg2: memref<640x32xbf16, #tpu.memory_space<vmem>>, %arg3: memref<8x128xbf16, #tpu.memory_space<vmem>>, %arg4: memref<128x32xbf16, #tpu.memory_space<vmem>>, %arg5: memref<8x128xf32, #tpu.memory_space<vmem>>, %arg6: memref<2x32x96xbf16, #tpu.memory_space<vmem>>, %arg7: memref<2x32x32xbf16, #tpu.memory_space<vmem>>, %arg8: memref<2x32x128xbf16, #tpu.memory_space<vmem>>, %arg9: memref<2x128x32xbf16, #tpu.memory_space<vmem>>, %arg10: memref<2x8x128xf32, #tpu.memory_space<vmem>>, %arg11: memref<2x32xf32, #tpu.memory_space<vmem>>, %arg12: memref<2x8x32xf32, #tpu.memory_space<vmem>>) attributes {dimension_semantics = [], scalar_prefetch = 0 : i64, scratch_operands = 1 : i64, tpu.core_type = #tpu.core_type<tc>} {
    %c0 = arith.constant 0 : index
    %c0_0 = arith.constant 0 : index
    %0 = vector.load %arg5[%c0, %c0_0] : memref<8x128xf32, #tpu.memory_space<vmem>>, vector<8x128xf32>
    %1 = vector.extract_strided_slice %0 {offsets = [0, 0], sizes = [1, 32], strides = [1, 1]} : vector<8x128xf32> to vector<1x32xf32>
    %2 = vector.extract_strided_slice %0 {offsets = [1, 0], sizes = [1, 32], strides = [1, 1]} : vector<8x128xf32> to vector<1x32xf32>
    %3 = vector.extract_strided_slice %0 {offsets = [2, 0], sizes = [1, 32], strides = [1, 1]} : vector<8x128xf32> to vector<1x32xf32>
    %4 = vector.extract_strided_slice %0 {offsets = [3, 0], sizes = [1, 128], strides = [1, 1]} : vector<8x128xf32> to vector<1x128xf32>
    %5 = vector.extract_strided_slice %0 {offsets = [4, 0], sizes = [1, 32], strides = [1, 1]} : vector<8x128xf32> to vector<1x32xf32>
    %6 = vector.extract_strided_slice %0 {offsets = [5, 0], sizes = [1, 32], strides = [1, 1]} : vector<8x128xf32> to vector<1x32xf32>
    %7 = vector.extract_strided_slice %0 {offsets = [6, 0], sizes = [1, 32], strides = [1, 1]} : vector<8x128xf32> to vector<1x32xf32>
    %c0_1 = arith.constant 0 : index
    %c0_2 = arith.constant 0 : index
    %8 = vector.load %arg0[%c0_1, %c0_2] : memref<16x640xbf16, #tpu.memory_space<vmem>>, vector<16x640xbf16>
    %c0_3 = arith.constant 0 : index
    %c0_4 = arith.constant 0 : index
    %9 = vector.load %arg2[%c0_3, %c0_4] : memref<640x32xbf16, #tpu.memory_space<vmem>>, vector<640x32xbf16>
    %cst = arith.constant dense<0.000000e+00> : vector<16x32xf32>
    %10 = tpu.matmul %8, %9, %cst {dimension_numbers = #tpu.dot_dimension_numbers<[1], [0], [0], [1], [0, 0, 1, 1], [], []>} : vector<16x640xbf16>, vector<640x32xbf16>, vector<16x32xf32> -> vector<16x32xf32>
    %11 = vector.broadcast %1 : vector<1x32xf32> to vector<16x32xf32>
    %12 = arith.addf %10, %11 : vector<16x32xf32>
    %cst_5 = arith.constant dense<0.000000e+00> : vector<16xf32>
    %13 = vector.multi_reduction <add>, %12, %cst_5 [1] : vector<16x32xf32> to vector<16xf32>
    %14 = vector.shape_cast %13 : vector<16xf32> to vector<16x1xf32>
    %cst_6 = arith.constant 3.200000e+01 : f32
    %15 = vector.broadcast %cst_6 : f32 to vector<16x1xf32>
    %16 = arith.divf %14, %15 : vector<16x1xf32>
    %17 = vector.broadcast %16 : vector<16x1xf32> to vector<16x32xf32>
    %18 = arith.subf %12, %17 : vector<16x32xf32>
    %19 = arith.mulf %18, %18 : vector<16x32xf32>
    %cst_7 = arith.constant dense<0.000000e+00> : vector<16xf32>
    %20 = vector.multi_reduction <add>, %19, %cst_7 [1] : vector<16x32xf32> to vector<16xf32>
    %21 = vector.shape_cast %20 : vector<16xf32> to vector<16x1xf32>
    %cst_8 = arith.constant 3.200000e+01 : f32
    %22 = vector.broadcast %cst_8 : f32 to vector<16x1xf32>
    %23 = arith.divf %21, %22 : vector<16x1xf32>
    %24 = vector.broadcast %16 : vector<16x1xf32> to vector<16x32xf32>
    %25 = arith.subf %12, %24 : vector<16x32xf32>
    %cst_9 = arith.constant 9.99999974E-6 : f32
    %26 = vector.broadcast %cst_9 : f32 to vector<16x1xf32>
    %27 = arith.addf %23, %26 : vector<16x1xf32>
    %28 = math.rsqrt %27 : vector<16x1xf32>
    %29 = vector.broadcast %28 : vector<16x1xf32> to vector<16x32xf32>
    %30 = arith.mulf %25, %29 : vector<16x32xf32>
    %31 = vector.broadcast %2 : vector<1x32xf32> to vector<16x32xf32>
    %32 = arith.mulf %30, %31 : vector<16x32xf32>
    %33 = vector.broadcast %3 : vector<1x32xf32> to vector<16x32xf32>
    %34 = arith.addf %32, %33 : vector<16x32xf32>
    %c0_10 = arith.constant 0 : index
    %c0_11 = arith.constant 0 : index
    %35 = vector.load %arg1[%c0_10, %c0_11] : memref<16x8xbf16, #tpu.memory_space<vmem>>, vector<16x8xbf16>
    %c0_12 = arith.constant 0 : index
    %c0_13 = arith.constant 0 : index
    %36 = vector.load %arg3[%c0_12, %c0_13] : memref<8x128xbf16, #tpu.memory_space<vmem>>, vector<8x128xbf16>
    %cst_14 = arith.constant dense<0.000000e+00> : vector<16x128xf32>
    %37 = tpu.matmul %35, %36, %cst_14 {dimension_numbers = #tpu.dot_dimension_numbers<[1], [0], [0], [1], [0, 0, 1, 1], [], []>} : vector<16x8xbf16>, vector<8x128xbf16>, vector<16x128xf32> -> vector<16x128xf32>
    %38 = vector.broadcast %4 : vector<1x128xf32> to vector<16x128xf32>
    %39 = arith.addf %37, %38 : vector<16x128xf32>
    %cst_15 = arith.constant 5.000000e-01 : f32
    %40 = vector.broadcast %cst_15 : f32 to vector<16x128xf32>
    %41 = arith.mulf %40, %39 : vector<16x128xf32>
    %cst_16 = arith.constant 0.707106769 : f32
    %42 = vector.broadcast %cst_16 : f32 to vector<16x128xf32>
    %43 = arith.mulf %39, %42 : vector<16x128xf32>
    %cst_17 = arith.constant 0.000000e+00 : f32
    %44 = vector.broadcast %cst_17 : f32 to vector<16x128xf32>
    %45 = arith.cmpf oge, %43, %44 : vector<16x128xf32>
    %cst_18 = arith.constant 1.000000e+00 : f32
    %cst_19 = arith.constant -1.000000e+00 : f32
    %46 = vector.broadcast %cst_18 : f32 to vector<16x128xf32>
    %47 = vector.broadcast %cst_19 : f32 to vector<16x128xf32>
    %48 = arith.select %45, %46, %47 : vector<16x128xi1>, vector<16x128xf32>
    %49 = math.absf %43 : vector<16x128xf32>
    %cst_20 = arith.constant 0.327591091 : f32
    %50 = vector.broadcast %cst_20 : f32 to vector<16x128xf32>
    %51 = arith.mulf %50, %49 : vector<16x128xf32>
    %cst_21 = arith.constant 1.000000e+00 : f32
    %52 = vector.broadcast %cst_21 : f32 to vector<16x128xf32>
    %53 = arith.addf %52, %51 : vector<16x128xf32>
    %cst_22 = arith.constant 1.000000e+00 : f32
    %54 = vector.broadcast %cst_22 : f32 to vector<16x128xf32>
    %55 = arith.divf %54, %53 : vector<16x128xf32>
    %cst_23 = arith.constant 1.06140542 : f32
    %56 = vector.broadcast %cst_23 : f32 to vector<16x128xf32>
    %57 = arith.mulf %56, %55 : vector<16x128xf32>
    %cst_24 = arith.constant -1.45315206 : f32
    %58 = vector.broadcast %cst_24 : f32 to vector<16x128xf32>
    %59 = arith.addf %57, %58 : vector<16x128xf32>
    %60 = arith.mulf %59, %55 : vector<16x128xf32>
    %cst_25 = arith.constant 1.42141378 : f32
    %61 = vector.broadcast %cst_25 : f32 to vector<16x128xf32>
    %62 = arith.addf %60, %61 : vector<16x128xf32>
    %63 = arith.mulf %62, %55 : vector<16x128xf32>
    %cst_26 = arith.constant -0.284496725 : f32
    %64 = vector.broadcast %cst_26 : f32 to vector<16x128xf32>
    %65 = arith.addf %63, %64 : vector<16x128xf32>
    %66 = arith.mulf %65, %55 : vector<16x128xf32>
    %cst_27 = arith.constant 0.254829586 : f32
    %67 = vector.broadcast %cst_27 : f32 to vector<16x128xf32>
    %68 = arith.addf %66, %67 : vector<16x128xf32>
    %69 = arith.mulf %68, %55 : vector<16x128xf32>
    %cst_28 = arith.constant 0.000000e+00 : f32
    %70 = vector.broadcast %cst_28 : f32 to vector<16x128xf32>
    %71 = arith.subf %70, %49 : vector<16x128xf32>
    %72 = arith.mulf %71, %49 : vector<16x128xf32>
    %73 = math.exp %72 : vector<16x128xf32>
    %74 = arith.mulf %69, %73 : vector<16x128xf32>
    %cst_29 = arith.constant 1.000000e+00 : f32
    %75 = vector.broadcast %cst_29 : f32 to vector<16x128xf32>
    %76 = arith.subf %75, %74 : vector<16x128xf32>
    %77 = arith.mulf %48, %76 : vector<16x128xf32>
    %cst_30 = arith.constant 1.000000e+00 : f32
    %78 = vector.broadcast %cst_30 : f32 to vector<16x128xf32>
    %79 = arith.addf %78, %77 : vector<16x128xf32>
    %80 = arith.mulf %41, %79 : vector<16x128xf32>
    %81 = arith.truncf %80 : vector<16x128xf32> to vector<16x128xbf16>
    %c0_31 = arith.constant 0 : index
    %c0_32 = arith.constant 0 : index
    %82 = vector.load %arg4[%c0_31, %c0_32] : memref<128x32xbf16, #tpu.memory_space<vmem>>, vector<128x32xbf16>
    %cst_33 = arith.constant dense<0.000000e+00> : vector<16x32xf32>
    %83 = tpu.matmul %81, %82, %cst_33 {dimension_numbers = #tpu.dot_dimension_numbers<[1], [0], [0], [1], [0, 0, 1, 1], [], []>} : vector<16x128xbf16>, vector<128x32xbf16>, vector<16x32xf32> -> vector<16x32xf32>
    %84 = vector.broadcast %5 : vector<1x32xf32> to vector<16x32xf32>
    %85 = arith.addf %83, %84 : vector<16x32xf32>
    %86 = arith.addf %34, %85 : vector<16x32xf32>
    %c0_34 = arith.constant 0 : index
    %c0_35 = arith.constant 0 : index
    %c0_36 = arith.constant 0 : index
    %87 = vector.load %arg10[%c0_34, %c0_35, %c0_36] : memref<2x8x128xf32, #tpu.memory_space<vmem>>, vector<1x8x128xf32>
    %88 = vector.shape_cast %87 : vector<1x8x128xf32> to vector<8x128xf32>
    %89 = vector.extract_strided_slice %88 {offsets = [0, 0], sizes = [1, 32], strides = [1, 1]} : vector<8x128xf32> to vector<1x32xf32>
    %90 = vector.extract_strided_slice %88 {offsets = [1, 0], sizes = [1, 32], strides = [1, 1]} : vector<8x128xf32> to vector<1x32xf32>
    %cst_37 = arith.constant dense<0.000000e+00> : vector<16xf32>
    %91 = vector.multi_reduction <add>, %86, %cst_37 [1] : vector<16x32xf32> to vector<16xf32>
    %92 = vector.shape_cast %91 : vector<16xf32> to vector<16x1xf32>
    %cst_38 = arith.constant 3.200000e+01 : f32
    %93 = vector.broadcast %cst_38 : f32 to vector<16x1xf32>
    %94 = arith.divf %92, %93 : vector<16x1xf32>
    %95 = vector.broadcast %94 : vector<16x1xf32> to vector<16x32xf32>
    %96 = arith.subf %86, %95 : vector<16x32xf32>
    %97 = arith.mulf %96, %96 : vector<16x32xf32>
    %cst_39 = arith.constant dense<0.000000e+00> : vector<16xf32>
    %98 = vector.multi_reduction <add>, %97, %cst_39 [1] : vector<16x32xf32> to vector<16xf32>
    %99 = vector.shape_cast %98 : vector<16xf32> to vector<16x1xf32>
    %cst_40 = arith.constant 3.200000e+01 : f32
    %100 = vector.broadcast %cst_40 : f32 to vector<16x1xf32>
    %101 = arith.divf %99, %100 : vector<16x1xf32>
    %102 = vector.broadcast %94 : vector<16x1xf32> to vector<16x32xf32>
    %103 = arith.subf %86, %102 : vector<16x32xf32>
    %cst_41 = arith.constant 9.99999974E-6 : f32
    %104 = vector.broadcast %cst_41 : f32 to vector<16x1xf32>
    %105 = arith.addf %101, %104 : vector<16x1xf32>
    %106 = math.rsqrt %105 : vector<16x1xf32>
    %107 = vector.broadcast %106 : vector<16x1xf32> to vector<16x32xf32>
    %108 = arith.mulf %103, %107 : vector<16x32xf32>
    %109 = vector.broadcast %89 : vector<1x32xf32> to vector<16x32xf32>
    %110 = arith.mulf %108, %109 : vector<16x32xf32>
    %111 = vector.broadcast %90 : vector<1x32xf32> to vector<16x32xf32>
    %112 = arith.addf %110, %111 : vector<16x32xf32>
    %113 = arith.truncf %112 : vector<16x32xf32> to vector<16x32xbf16>
    %c0_42 = arith.constant 0 : index
    %c0_43 = arith.constant 0 : index
    %c0_44 = arith.constant 0 : index
    %114 = vector.load %arg6[%c0_42, %c0_43, %c0_44] : memref<2x32x96xbf16, #tpu.memory_space<vmem>>, vector<1x32x96xbf16>
    %115 = vector.shape_cast %114 : vector<1x32x96xbf16> to vector<32x96xbf16>
    %cst_45 = arith.constant dense<0.000000e+00> : vector<16x96xf32>
    %116 = tpu.matmul %113, %115, %cst_45 {dimension_numbers = #tpu.dot_dimension_numbers<[1], [0], [0], [1], [0, 0, 1, 1], [], []>} : vector<16x32xbf16>, vector<32x96xbf16>, vector<16x96xf32> -> vector<16x96xf32>
    %117 = vector.extract_strided_slice %88 {offsets = [2, 0], sizes = [1, 96], strides = [1, 1]} : vector<8x128xf32> to vector<1x96xf32>
    %118 = vector.broadcast %117 : vector<1x96xf32> to vector<16x96xf32>
    %119 = arith.addf %116, %118 : vector<16x96xf32>
    %120 = vector.extract_strided_slice %119 {offsets = [0, 0], sizes = [16, 32], strides = [1, 1]} : vector<16x96xf32> to vector<16x32xf32>
    %121 = vector.shape_cast %120 : vector<16x32xf32> to vector<2x8x32xf32>
    %122 = arith.truncf %121 : vector<2x8x32xf32> to vector<2x8x32xbf16>
    %123 = vector.extract_strided_slice %119 {offsets = [0, 32], sizes = [16, 32], strides = [1, 1]} : vector<16x96xf32> to vector<16x32xf32>
    %124 = vector.shape_cast %123 : vector<16x32xf32> to vector<2x8x32xf32>
    %125 = arith.truncf %124 : vector<2x8x32xf32> to vector<2x8x32xbf16>
    %126 = vector.extract_strided_slice %119 {offsets = [0, 64], sizes = [16, 32], strides = [1, 1]} : vector<16x96xf32> to vector<16x32xf32>
    %127 = vector.shape_cast %126 : vector<16x32xf32> to vector<2x8x32xf32>
    %128 = arith.truncf %127 : vector<2x8x32xf32> to vector<2x8x32xbf16>
    %129 = vector.extract_strided_slice %122 {offsets = [0, 0, 0], sizes = [2, 8, 8], strides = [1, 1, 1]} : vector<2x8x32xbf16> to vector<2x8x8xbf16>
    %130 = vector.extract_strided_slice %125 {offsets = [0, 0, 0], sizes = [2, 8, 8], strides = [1, 1, 1]} : vector<2x8x32xbf16> to vector<2x8x8xbf16>
    "tpu.trace_start"() <{level = 10 : i32, message = "bqd,bkd->bqk"}> : () -> ()
    %cst_46 = arith.constant dense<0.000000e+00> : vector<2x8x8xf32>
    %131 = tpu.matmul %129, %130, %cst_46 {dimension_numbers = #tpu.dot_dimension_numbers<[2], [2], [1], [1], [0, 0, 0, 1, 1, 1], [0], [0]>} : vector<2x8x8xbf16>, vector<2x8x8xbf16>, vector<2x8x8xf32> -> vector<2x8x8xf32>
    "tpu.trace_stop"() : () -> ()
    %cst_47 = arith.constant dense<0xFF800000> : vector<2x8xf32>
    %132 = vector.multi_reduction <maximumf>, %131, %cst_47 [2] : vector<2x8x8xf32> to vector<2x8xf32>
    %133 = vector.shape_cast %132 : vector<2x8xf32> to vector<2x8x1xf32>
    %134 = vector.broadcast %133 : vector<2x8x1xf32> to vector<2x8x8xf32>
    %135 = arith.subf %131, %134 : vector<2x8x8xf32>
    %136 = math.exp %135 : vector<2x8x8xf32>
    %cst_48 = arith.constant dense<0.000000e+00> : vector<2x8xf32>
    %137 = vector.multi_reduction <add>, %136, %cst_48 [2] : vector<2x8x8xf32> to vector<2x8xf32>
    %138 = vector.shape_cast %137 : vector<2x8xf32> to vector<2x8x1xf32>
    %139 = tpu.reciprocal %138 {approx = true} : vector<2x8x1xf32> -> vector<2x8x1xf32>
    %140 = vector.broadcast %139 : vector<2x8x1xf32> to vector<2x8x8xf32>
    %141 = arith.mulf %136, %140 : vector<2x8x8xf32>
    %142 = arith.truncf %141 : vector<2x8x8xf32> to vector<2x8x8xbf16>
    %143 = vector.extract_strided_slice %128 {offsets = [0, 0, 0], sizes = [2, 8, 8], strides = [1, 1, 1]} : vector<2x8x32xbf16> to vector<2x8x8xbf16>
    "tpu.trace_start"() <{level = 10 : i32, message = "bqk,bkd->bqd"}> : () -> ()
    %cst_49 = arith.constant dense<0.000000e+00> : vector<2x8x8xf32>
    %144 = tpu.matmul %142, %143, %cst_49 {dimension_numbers = #tpu.dot_dimension_numbers<[2], [1], [1], [2], [0, 0, 0, 1, 1, 2], [0], [0]>} : vector<2x8x8xbf16>, vector<2x8x8xbf16>, vector<2x8x8xf32> -> vector<2x8x8xf32>
    "tpu.trace_stop"() : () -> ()
    %c0_50 = arith.constant 0 : index
    %c0_51 = arith.constant 0 : index
    %c0_52 = arith.constant 0 : index
    %145 = vector.load %arg12[%c0_50, %c0_51, %c0_52] : memref<2x8x32xf32, #tpu.memory_space<vmem>>, vector<2x8x8xf32>
    tpu.vector_store %arg12[%c0_50, %c0_51, %c0_52], %144 {strides = array<i32>} : memref<2x8x32xf32, #tpu.memory_space<vmem>>, vector<2x8x8xf32>,
    %146 = vector.extract_strided_slice %122 {offsets = [0, 0, 8], sizes = [2, 8, 8], strides = [1, 1, 1]} : vector<2x8x32xbf16> to vector<2x8x8xbf16>
    %147 = vector.extract_strided_slice %125 {offsets = [0, 0, 8], sizes = [2, 8, 8], strides = [1, 1, 1]} : vector<2x8x32xbf16> to vector<2x8x8xbf16>
    "tpu.trace_start"() <{level = 10 : i32, message = "bqd,bkd->bqk"}> : () -> ()
    %cst_53 = arith.constant dense<0.000000e+00> : vector<2x8x8xf32>
    %148 = tpu.matmul %146, %147, %cst_53 {dimension_numbers = #tpu.dot_dimension_numbers<[2], [2], [1], [1], [0, 0, 0, 1, 1, 1], [0], [0]>} : vector<2x8x8xbf16>, vector<2x8x8xbf16>, vector<2x8x8xf32> -> vector<2x8x8xf32>
    "tpu.trace_stop"() : () -> ()
    %cst_54 = arith.constant dense<0xFF800000> : vector<2x8xf32>
    %149 = vector.multi_reduction <maximumf>, %148, %cst_54 [2] : vector<2x8x8xf32> to vector<2x8xf32>
    %150 = vector.shape_cast %149 : vector<2x8xf32> to vector<2x8x1xf32>
    %151 = vector.broadcast %150 : vector<2x8x1xf32> to vector<2x8x8xf32>
    %152 = arith.subf %148, %151 : vector<2x8x8xf32>
    %153 = math.exp %152 : vector<2x8x8xf32>
    %cst_55 = arith.constant dense<0.000000e+00> : vector<2x8xf32>
    %154 = vector.multi_reduction <add>, %153, %cst_55 [2] : vector<2x8x8xf32> to vector<2x8xf32>
    %155 = vector.shape_cast %154 : vector<2x8xf32> to vector<2x8x1xf32>
    %156 = tpu.reciprocal %155 {approx = true} : vector<2x8x1xf32> -> vector<2x8x1xf32>
    %157 = vector.broadcast %156 : vector<2x8x1xf32> to vector<2x8x8xf32>
    %158 = arith.mulf %153, %157 : vector<2x8x8xf32>
    %159 = arith.truncf %158 : vector<2x8x8xf32> to vector<2x8x8xbf16>
    %160 = vector.extract_strided_slice %128 {offsets = [0, 0, 8], sizes = [2, 8, 8], strides = [1, 1, 1]} : vector<2x8x32xbf16> to vector<2x8x8xbf16>
    "tpu.trace_start"() <{level = 10 : i32, message = "bqk,bkd->bqd"}> : () -> ()
    %cst_56 = arith.constant dense<0.000000e+00> : vector<2x8x8xf32>
    %161 = tpu.matmul %159, %160, %cst_56 {dimension_numbers = #tpu.dot_dimension_numbers<[2], [1], [1], [2], [0, 0, 0, 1, 1, 2], [0], [0]>} : vector<2x8x8xbf16>, vector<2x8x8xbf16>, vector<2x8x8xf32> -> vector<2x8x8xf32>
    "tpu.trace_stop"() : () -> ()
    %c0_57 = arith.constant 0 : index
    %c0_58 = arith.constant 0 : index
    %c8 = arith.constant 8 : index
    %162 = vector.load %arg12[%c0_57, %c0_58, %c8] : memref<2x8x32xf32, #tpu.memory_space<vmem>>, vector<2x8x8xf32>
    tpu.vector_store %arg12[%c0_57, %c0_58, %c8], %161 {strides = array<i32>} : memref<2x8x32xf32, #tpu.memory_space<vmem>>, vector<2x8x8xf32>,
    %163 = vector.extract_strided_slice %122 {offsets = [0, 0, 16], sizes = [2, 8, 8], strides = [1, 1, 1]} : vector<2x8x32xbf16> to vector<2x8x8xbf16>
    %164 = vector.extract_strided_slice %125 {offsets = [0, 0, 16], sizes = [2, 8, 8], strides = [1, 1, 1]} : vector<2x8x32xbf16> to vector<2x8x8xbf16>
    "tpu.trace_start"() <{level = 10 : i32, message = "bqd,bkd->bqk"}> : () -> ()
    %cst_59 = arith.constant dense<0.000000e+00> : vector<2x8x8xf32>
    %165 = tpu.matmul %163, %164, %cst_59 {dimension_numbers = #tpu.dot_dimension_numbers<[2], [2], [1], [1], [0, 0, 0, 1, 1, 1], [0], [0]>} : vector<2x8x8xbf16>, vector<2x8x8xbf16>, vector<2x8x8xf32> -> vector<2x8x8xf32>
    "tpu.trace_stop"() : () -> ()
    %cst_60 = arith.constant dense<0xFF800000> : vector<2x8xf32>
    %166 = vector.multi_reduction <maximumf>, %165, %cst_60 [2] : vector<2x8x8xf32> to vector<2x8xf32>
    %167 = vector.shape_cast %166 : vector<2x8xf32> to vector<2x8x1xf32>
    %168 = vector.broadcast %167 : vector<2x8x1xf32> to vector<2x8x8xf32>
    %169 = arith.subf %165, %168 : vector<2x8x8xf32>
    %170 = math.exp %169 : vector<2x8x8xf32>
    %cst_61 = arith.constant dense<0.000000e+00> : vector<2x8xf32>
    %171 = vector.multi_reduction <add>, %170, %cst_61 [2] : vector<2x8x8xf32> to vector<2x8xf32>
    %172 = vector.shape_cast %171 : vector<2x8xf32> to vector<2x8x1xf32>
    %173 = tpu.reciprocal %172 {approx = true} : vector<2x8x1xf32> -> vector<2x8x1xf32>
    %174 = vector.broadcast %173 : vector<2x8x1xf32> to vector<2x8x8xf32>
    %175 = arith.mulf %170, %174 : vector<2x8x8xf32>
    %176 = arith.truncf %175 : vector<2x8x8xf32> to vector<2x8x8xbf16>
    %177 = vector.extract_strided_slice %128 {offsets = [0, 0, 16], sizes = [2, 8, 8], strides = [1, 1, 1]} : vector<2x8x32xbf16> to vector<2x8x8xbf16>
    "tpu.trace_start"() <{level = 10 : i32, message = "bqk,bkd->bqd"}> : () -> ()
    %cst_62 = arith.constant dense<0.000000e+00> : vector<2x8x8xf32>
    %178 = tpu.matmul %176, %177, %cst_62 {dimension_numbers = #tpu.dot_dimension_numbers<[2], [1], [1], [2], [0, 0, 0, 1, 1, 2], [0], [0]>} : vector<2x8x8xbf16>, vector<2x8x8xbf16>, vector<2x8x8xf32> -> vector<2x8x8xf32>
    "tpu.trace_stop"() : () -> ()
    %c0_63 = arith.constant 0 : index
    %c0_64 = arith.constant 0 : index
    %c16 = arith.constant 16 : index
    %179 = vector.load %arg12[%c0_63, %c0_64, %c16] : memref<2x8x32xf32, #tpu.memory_space<vmem>>, vector<2x8x8xf32>
    tpu.vector_store %arg12[%c0_63, %c0_64, %c16], %178 {strides = array<i32>} : memref<2x8x32xf32, #tpu.memory_space<vmem>>, vector<2x8x8xf32>,
    %180 = vector.extract_strided_slice %122 {offsets = [0, 0, 24], sizes = [2, 8, 8], strides = [1, 1, 1]} : vector<2x8x32xbf16> to vector<2x8x8xbf16>
    %181 = vector.extract_strided_slice %125 {offsets = [0, 0, 24], sizes = [2, 8, 8], strides = [1, 1, 1]} : vector<2x8x32xbf16> to vector<2x8x8xbf16>
    "tpu.trace_start"() <{level = 10 : i32, message = "bqd,bkd->bqk"}> : () -> ()
    %cst_65 = arith.constant dense<0.000000e+00> : vector<2x8x8xf32>
    %182 = tpu.matmul %180, %181, %cst_65 {dimension_numbers = #tpu.dot_dimension_numbers<[2], [2], [1], [1], [0, 0, 0, 1, 1, 1], [0], [0]>} : vector<2x8x8xbf16>, vector<2x8x8xbf16>, vector<2x8x8xf32> -> vector<2x8x8xf32>
    "tpu.trace_stop"() : () -> ()
    %cst_66 = arith.constant dense<0xFF800000> : vector<2x8xf32>
    %183 = vector.multi_reduction <maximumf>, %182, %cst_66 [2] : vector<2x8x8xf32> to vector<2x8xf32>
    %184 = vector.shape_cast %183 : vector<2x8xf32> to vector<2x8x1xf32>
    %185 = vector.broadcast %184 : vector<2x8x1xf32> to vector<2x8x8xf32>
    %186 = arith.subf %182, %185 : vector<2x8x8xf32>
    %187 = math.exp %186 : vector<2x8x8xf32>
    %cst_67 = arith.constant dense<0.000000e+00> : vector<2x8xf32>
    %188 = vector.multi_reduction <add>, %187, %cst_67 [2] : vector<2x8x8xf32> to vector<2x8xf32>
    %189 = vector.shape_cast %188 : vector<2x8xf32> to vector<2x8x1xf32>
    %190 = tpu.reciprocal %189 {approx = true} : vector<2x8x1xf32> -> vector<2x8x1xf32>
    %191 = vector.broadcast %190 : vector<2x8x1xf32> to vector<2x8x8xf32>
    %192 = arith.mulf %187, %191 : vector<2x8x8xf32>
    %193 = arith.truncf %192 : vector<2x8x8xf32> to vector<2x8x8xbf16>
    %194 = vector.extract_strided_slice %128 {offsets = [0, 0, 24], sizes = [2, 8, 8], strides = [1, 1, 1]} : vector<2x8x32xbf16> to vector<2x8x8xbf16>
    "tpu.trace_start"() <{level = 10 : i32, message = "bqk,bkd->bqd"}> : () -> ()
    %cst_68 = arith.constant dense<0.000000e+00> : vector<2x8x8xf32>
    %195 = tpu.matmul %193, %194, %cst_68 {dimension_numbers = #tpu.dot_dimension_numbers<[2], [1], [1], [2], [0, 0, 0, 1, 1, 2], [0], [0]>} : vector<2x8x8xbf16>, vector<2x8x8xbf16>, vector<2x8x8xf32> -> vector<2x8x8xf32>
    "tpu.trace_stop"() : () -> ()
    %c0_69 = arith.constant 0 : index
    %c0_70 = arith.constant 0 : index
    %c24 = arith.constant 24 : index
    %196 = vector.load %arg12[%c0_69, %c0_70, %c24] : memref<2x8x32xf32, #tpu.memory_space<vmem>>, vector<2x8x8xf32>
    tpu.vector_store %arg12[%c0_69, %c0_70, %c24], %195 {strides = array<i32>} : memref<2x8x32xf32, #tpu.memory_space<vmem>>, vector<2x8x8xf32>,
    %c0_71 = arith.constant 0 : index
    %c0_72 = arith.constant 0 : index
    %c0_73 = arith.constant 0 : index
    %197 = vector.load %arg12[%c0_71, %c0_72, %c0_73] : memref<2x8x32xf32, #tpu.memory_space<vmem>>, vector<2x8x32xf32>
    %198 = vector.shape_cast %197 : vector<2x8x32xf32> to vector<16x32xf32>
    %199 = arith.truncf %198 : vector<16x32xf32> to vector<16x32xbf16>
    %c0_74 = arith.constant 0 : index
    %c0_75 = arith.constant 0 : index
    %c0_76 = arith.constant 0 : index
    %200 = vector.load %arg7[%c0_74, %c0_75, %c0_76] : memref<2x32x32xbf16, #tpu.memory_space<vmem>>, vector<1x32x32xbf16>
    %201 = vector.shape_cast %200 : vector<1x32x32xbf16> to vector<32x32xbf16>
    %cst_77 = arith.constant dense<0.000000e+00> : vector<16x32xf32>
    %202 = tpu.matmul %199, %201, %cst_77 {dimension_numbers = #tpu.dot_dimension_numbers<[1], [0], [0], [1], [0, 0, 1, 1], [], []>} : vector<16x32xbf16>, vector<32x32xbf16>, vector<16x32xf32> -> vector<16x32xf32>
    %203 = vector.extract_strided_slice %88 {offsets = [3, 0], sizes = [1, 32], strides = [1, 1]} : vector<8x128xf32> to vector<1x32xf32>
    %204 = vector.broadcast %203 : vector<1x32xf32> to vector<16x32xf32>
    %205 = arith.addf %202, %204 : vector<16x32xf32>
    %206 = arith.addf %86, %205 : vector<16x32xf32>
    %207 = vector.extract_strided_slice %88 {offsets = [4, 0], sizes = [1, 32], strides = [1, 1]} : vector<8x128xf32> to vector<1x32xf32>
    %208 = vector.extract_strided_slice %88 {offsets = [5, 0], sizes = [1, 32], strides = [1, 1]} : vector<8x128xf32> to vector<1x32xf32>
    %cst_78 = arith.constant dense<0.000000e+00> : vector<16xf32>
    %209 = vector.multi_reduction <add>, %206, %cst_78 [1] : vector<16x32xf32> to vector<16xf32>
    %210 = vector.shape_cast %209 : vector<16xf32> to vector<16x1xf32>
    %cst_79 = arith.constant 3.200000e+01 : f32
    %211 = vector.broadcast %cst_79 : f32 to vector<16x1xf32>
    %212 = arith.divf %210, %211 : vector<16x1xf32>
    %213 = vector.broadcast %212 : vector<16x1xf32> to vector<16x32xf32>
    %214 = arith.subf %206, %213 : vector<16x32xf32>
    %215 = arith.mulf %214, %214 : vector<16x32xf32>
    %cst_80 = arith.constant dense<0.000000e+00> : vector<16xf32>
    %216 = vector.multi_reduction <add>, %215, %cst_80 [1] : vector<16x32xf32> to vector<16xf32>
    %217 = vector.shape_cast %216 : vector<16xf32> to vector<16x1xf32>
    %cst_81 = arith.constant 3.200000e+01 : f32
    %218 = vector.broadcast %cst_81 : f32 to vector<16x1xf32>
    %219 = arith.divf %217, %218 : vector<16x1xf32>
    %220 = vector.broadcast %212 : vector<16x1xf32> to vector<16x32xf32>
    %221 = arith.subf %206, %220 : vector<16x32xf32>
    %cst_82 = arith.constant 9.99999974E-6 : f32
    %222 = vector.broadcast %cst_82 : f32 to vector<16x1xf32>
    %223 = arith.addf %219, %222 : vector<16x1xf32>
    %224 = math.rsqrt %223 : vector<16x1xf32>
    %225 = vector.broadcast %224 : vector<16x1xf32> to vector<16x32xf32>
    %226 = arith.mulf %221, %225 : vector<16x32xf32>
    %227 = vector.broadcast %207 : vector<1x32xf32> to vector<16x32xf32>
    %228 = arith.mulf %226, %227 : vector<16x32xf32>
    %229 = vector.broadcast %208 : vector<1x32xf32> to vector<16x32xf32>
    %230 = arith.addf %228, %229 : vector<16x32xf32>
    %231 = arith.truncf %230 : vector<16x32xf32> to vector<16x32xbf16>
    %c0_83 = arith.constant 0 : index
    %c0_84 = arith.constant 0 : index
    %c0_85 = arith.constant 0 : index
    %232 = vector.load %arg8[%c0_83, %c0_84, %c0_85] : memref<2x32x128xbf16, #tpu.memory_space<vmem>>, vector<1x32x128xbf16>
    %233 = vector.shape_cast %232 : vector<1x32x128xbf16> to vector<32x128xbf16>
    %cst_86 = arith.constant dense<0.000000e+00> : vector<16x128xf32>
    %234 = tpu.matmul %231, %233, %cst_86 {dimension_numbers = #tpu.dot_dimension_numbers<[1], [0], [0], [1], [0, 0, 1, 1], [], []>} : vector<16x32xbf16>, vector<32x128xbf16>, vector<16x128xf32> -> vector<16x128xf32>
    %235 = vector.extract_strided_slice %88 {offsets = [6, 0], sizes = [1, 128], strides = [1, 1]} : vector<8x128xf32> to vector<1x128xf32>
    %236 = vector.broadcast %235 : vector<1x128xf32> to vector<16x128xf32>
    %237 = arith.addf %234, %236 : vector<16x128xf32>
    %cst_87 = arith.constant 5.000000e-01 : f32
    %238 = vector.broadcast %cst_87 : f32 to vector<16x128xf32>
    %239 = arith.mulf %238, %237 : vector<16x128xf32>
    %cst_88 = arith.constant 0.707106769 : f32
    %240 = vector.broadcast %cst_88 : f32 to vector<16x128xf32>
    %241 = arith.mulf %237, %240 : vector<16x128xf32>
    %cst_89 = arith.constant 0.000000e+00 : f32
    %242 = vector.broadcast %cst_89 : f32 to vector<16x128xf32>
    %243 = arith.cmpf oge, %241, %242 : vector<16x128xf32>
    %cst_90 = arith.constant 1.000000e+00 : f32
    %cst_91 = arith.constant -1.000000e+00 : f32
    %244 = vector.broadcast %cst_90 : f32 to vector<16x128xf32>
    %245 = vector.broadcast %cst_91 : f32 to vector<16x128xf32>
    %246 = arith.select %243, %244, %245 : vector<16x128xi1>, vector<16x128xf32>
    %247 = math.absf %241 : vector<16x128xf32>
    %cst_92 = arith.constant 0.327591091 : f32
    %248 = vector.broadcast %cst_92 : f32 to vector<16x128xf32>
    %249 = arith.mulf %248, %247 : vector<16x128xf32>
    %cst_93 = arith.constant 1.000000e+00 : f32
    %250 = vector.broadcast %cst_93 : f32 to vector<16x128xf32>
    %251 = arith.addf %250, %249 : vector<16x128xf32>
    %cst_94 = arith.constant 1.000000e+00 : f32
    %252 = vector.broadcast %cst_94 : f32 to vector<16x128xf32>
    %253 = arith.divf %252, %251 : vector<16x128xf32>
    %cst_95 = arith.constant 1.06140542 : f32
    %254 = vector.broadcast %cst_95 : f32 to vector<16x128xf32>
    %255 = arith.mulf %254, %253 : vector<16x128xf32>
    %cst_96 = arith.constant -1.45315206 : f32
    %256 = vector.broadcast %cst_96 : f32 to vector<16x128xf32>
    %257 = arith.addf %255, %256 : vector<16x128xf32>
    %258 = arith.mulf %257, %253 : vector<16x128xf32>
    %cst_97 = arith.constant 1.42141378 : f32
    %259 = vector.broadcast %cst_97 : f32 to vector<16x128xf32>
    %260 = arith.addf %258, %259 : vector<16x128xf32>
    %261 = arith.mulf %260, %253 : vector<16x128xf32>
    %cst_98 = arith.constant -0.284496725 : f32
    %262 = vector.broadcast %cst_98 : f32 to vector<16x128xf32>
    %263 = arith.addf %261, %262 : vector<16x128xf32>
    %264 = arith.mulf %263, %253 : vector<16x128xf32>
    %cst_99 = arith.constant 0.254829586 : f32
    %265 = vector.broadcast %cst_99 : f32 to vector<16x128xf32>
    %266 = arith.addf %264, %265 : vector<16x128xf32>
    %267 = arith.mulf %266, %253 : vector<16x128xf32>
    %cst_100 = arith.constant 0.000000e+00 : f32
    %268 = vector.broadcast %cst_100 : f32 to vector<16x128xf32>
    %269 = arith.subf %268, %247 : vector<16x128xf32>
    %270 = arith.mulf %269, %247 : vector<16x128xf32>
    %271 = math.exp %270 : vector<16x128xf32>
    %272 = arith.mulf %267, %271 : vector<16x128xf32>
    %cst_101 = arith.constant 1.000000e+00 : f32
    %273 = vector.broadcast %cst_101 : f32 to vector<16x128xf32>
    %274 = arith.subf %273, %272 : vector<16x128xf32>
    %275 = arith.mulf %246, %274 : vector<16x128xf32>
    %cst_102 = arith.constant 1.000000e+00 : f32
    %276 = vector.broadcast %cst_102 : f32 to vector<16x128xf32>
    %277 = arith.addf %276, %275 : vector<16x128xf32>
    %278 = arith.mulf %239, %277 : vector<16x128xf32>
    %279 = arith.truncf %278 : vector<16x128xf32> to vector<16x128xbf16>
    %c0_103 = arith.constant 0 : index
    %c0_104 = arith.constant 0 : index
    %c0_105 = arith.constant 0 : index
    %280 = vector.load %arg9[%c0_103, %c0_104, %c0_105] : memref<2x128x32xbf16, #tpu.memory_space<vmem>>, vector<1x128x32xbf16>
    %281 = vector.shape_cast %280 : vector<1x128x32xbf16> to vector<128x32xbf16>
    %cst_106 = arith.constant dense<0.000000e+00> : vector<16x32xf32>
    %282 = tpu.matmul %279, %281, %cst_106 {dimension_numbers = #tpu.dot_dimension_numbers<[1], [0], [0], [1], [0, 0, 1, 1], [], []>} : vector<16x128xbf16>, vector<128x32xbf16>, vector<16x32xf32> -> vector<16x32xf32>
    %283 = vector.extract_strided_slice %88 {offsets = [7, 0], sizes = [1, 32], strides = [1, 1]} : vector<8x128xf32> to vector<1x32xf32>
    %284 = vector.broadcast %283 : vector<1x32xf32> to vector<16x32xf32>
    %285 = arith.addf %282, %284 : vector<16x32xf32>
    %286 = arith.addf %206, %285 : vector<16x32xf32>
    %c1 = arith.constant 1 : index
    %c0_107 = arith.constant 0 : index
    %c0_108 = arith.constant 0 : index
    %287 = vector.load %arg10[%c1, %c0_107, %c0_108] : memref<2x8x128xf32, #tpu.memory_space<vmem>>, vector<1x8x128xf32>
    %288 = vector.shape_cast %287 : vector<1x8x128xf32> to vector<8x128xf32>
    %289 = vector.extract_strided_slice %288 {offsets = [0, 0], sizes = [1, 32], strides = [1, 1]} : vector<8x128xf32> to vector<1x32xf32>
    %290 = vector.extract_strided_slice %288 {offsets = [1, 0], sizes = [1, 32], strides = [1, 1]} : vector<8x128xf32> to vector<1x32xf32>
    %cst_109 = arith.constant dense<0.000000e+00> : vector<16xf32>
    %291 = vector.multi_reduction <add>, %286, %cst_109 [1] : vector<16x32xf32> to vector<16xf32>
    %292 = vector.shape_cast %291 : vector<16xf32> to vector<16x1xf32>
    %cst_110 = arith.constant 3.200000e+01 : f32
    %293 = vector.broadcast %cst_110 : f32 to vector<16x1xf32>
    %294 = arith.divf %292, %293 : vector<16x1xf32>
    %295 = vector.broadcast %294 : vector<16x1xf32> to vector<16x32xf32>
    %296 = arith.subf %286, %295 : vector<16x32xf32>
    %297 = arith.mulf %296, %296 : vector<16x32xf32>
    %cst_111 = arith.constant dense<0.000000e+00> : vector<16xf32>
    %298 = vector.multi_reduction <add>, %297, %cst_111 [1] : vector<16x32xf32> to vector<16xf32>
    %299 = vector.shape_cast %298 : vector<16xf32> to vector<16x1xf32>
    %cst_112 = arith.constant 3.200000e+01 : f32
    %300 = vector.broadcast %cst_112 : f32 to vector<16x1xf32>
    %301 = arith.divf %299, %300 : vector<16x1xf32>
    %302 = vector.broadcast %294 : vector<16x1xf32> to vector<16x32xf32>
    %303 = arith.subf %286, %302 : vector<16x32xf32>
    %cst_113 = arith.constant 9.99999974E-6 : f32
    %304 = vector.broadcast %cst_113 : f32 to vector<16x1xf32>
    %305 = arith.addf %301, %304 : vector<16x1xf32>
    %306 = math.rsqrt %305 : vector<16x1xf32>
    %307 = vector.broadcast %306 : vector<16x1xf32> to vector<16x32xf32>
    %308 = arith.mulf %303, %307 : vector<16x32xf32>
    %309 = vector.broadcast %289 : vector<1x32xf32> to vector<16x32xf32>
    %310 = arith.mulf %308, %309 : vector<16x32xf32>
    %311 = vector.broadcast %290 : vector<1x32xf32> to vector<16x32xf32>
    %312 = arith.addf %310, %311 : vector<16x32xf32>
    %313 = arith.truncf %312 : vector<16x32xf32> to vector<16x32xbf16>
    %c1_114 = arith.constant 1 : index
    %c0_115 = arith.constant 0 : index
    %c0_116 = arith.constant 0 : index
    %314 = vector.load %arg6[%c1_114, %c0_115, %c0_116] : memref<2x32x96xbf16, #tpu.memory_space<vmem>>, vector<1x32x96xbf16>
    %315 = vector.shape_cast %314 : vector<1x32x96xbf16> to vector<32x96xbf16>
    %cst_117 = arith.constant dense<0.000000e+00> : vector<16x96xf32>
    %316 = tpu.matmul %313, %315, %cst_117 {dimension_numbers = #tpu.dot_dimension_numbers<[1], [0], [0], [1], [0, 0, 1, 1], [], []>} : vector<16x32xbf16>, vector<32x96xbf16>, vector<16x96xf32> -> vector<16x96xf32>
    %317 = vector.extract_strided_slice %288 {offsets = [2, 0], sizes = [1, 96], strides = [1, 1]} : vector<8x128xf32> to vector<1x96xf32>
    %318 = vector.broadcast %317 : vector<1x96xf32> to vector<16x96xf32>
    %319 = arith.addf %316, %318 : vector<16x96xf32>
    %320 = vector.extract_strided_slice %319 {offsets = [0, 0], sizes = [16, 32], strides = [1, 1]} : vector<16x96xf32> to vector<16x32xf32>
    %321 = vector.shape_cast %320 : vector<16x32xf32> to vector<2x8x32xf32>
    %322 = arith.truncf %321 : vector<2x8x32xf32> to vector<2x8x32xbf16>
    %323 = vector.extract_strided_slice %319 {offsets = [0, 32], sizes = [16, 32], strides = [1, 1]} : vector<16x96xf32> to vector<16x32xf32>
    %324 = vector.shape_cast %323 : vector<16x32xf32> to vector<2x8x32xf32>
    %325 = arith.truncf %324 : vector<2x8x32xf32> to vector<2x8x32xbf16>
    %326 = vector.extract_strided_slice %319 {offsets = [0, 64], sizes = [16, 32], strides = [1, 1]} : vector<16x96xf32> to vector<16x32xf32>
    %327 = vector.shape_cast %326 : vector<16x32xf32> to vector<2x8x32xf32>
    %328 = arith.truncf %327 : vector<2x8x32xf32> to vector<2x8x32xbf16>
    %329 = vector.extract_strided_slice %322 {offsets = [0, 0, 0], sizes = [2, 8, 8], strides = [1, 1, 1]} : vector<2x8x32xbf16> to vector<2x8x8xbf16>
    %330 = vector.extract_strided_slice %325 {offsets = [0, 0, 0], sizes = [2, 8, 8], strides = [1, 1, 1]} : vector<2x8x32xbf16> to vector<2x8x8xbf16>
    "tpu.trace_start"() <{level = 10 : i32, message = "bqd,bkd->bqk"}> : () -> ()
    %cst_118 = arith.constant dense<0.000000e+00> : vector<2x8x8xf32>
    %331 = tpu.matmul %329, %330, %cst_118 {dimension_numbers = #tpu.dot_dimension_numbers<[2], [2], [1], [1], [0, 0, 0, 1, 1, 1], [0], [0]>} : vector<2x8x8xbf16>, vector<2x8x8xbf16>, vector<2x8x8xf32> -> vector<2x8x8xf32>
    "tpu.trace_stop"() : () -> ()
    %cst_119 = arith.constant dense<0xFF800000> : vector<2x8xf32>
    %332 = vector.multi_reduction <maximumf>, %331, %cst_119 [2] : vector<2x8x8xf32> to vector<2x8xf32>
    %333 = vector.shape_cast %332 : vector<2x8xf32> to vector<2x8x1xf32>
    %334 = vector.broadcast %333 : vector<2x8x1xf32> to vector<2x8x8xf32>
    %335 = arith.subf %331, %334 : vector<2x8x8xf32>
    %336 = math.exp %335 : vector<2x8x8xf32>
    %cst_120 = arith.constant dense<0.000000e+00> : vector<2x8xf32>
    %337 = vector.multi_reduction <add>, %336, %cst_120 [2] : vector<2x8x8xf32> to vector<2x8xf32>
    %338 = vector.shape_cast %337 : vector<2x8xf32> to vector<2x8x1xf32>
    %339 = tpu.reciprocal %338 {approx = true} : vector<2x8x1xf32> -> vector<2x8x1xf32>
    %340 = vector.broadcast %339 : vector<2x8x1xf32> to vector<2x8x8xf32>
    %341 = arith.mulf %336, %340 : vector<2x8x8xf32>
    %342 = arith.truncf %341 : vector<2x8x8xf32> to vector<2x8x8xbf16>
    %343 = vector.extract_strided_slice %328 {offsets = [0, 0, 0], sizes = [2, 8, 8], strides = [1, 1, 1]} : vector<2x8x32xbf16> to vector<2x8x8xbf16>
    "tpu.trace_start"() <{level = 10 : i32, message = "bqk,bkd->bqd"}> : () -> ()
    %cst_121 = arith.constant dense<0.000000e+00> : vector<2x8x8xf32>
    %344 = tpu.matmul %342, %343, %cst_121 {dimension_numbers = #tpu.dot_dimension_numbers<[2], [1], [1], [2], [0, 0, 0, 1, 1, 2], [0], [0]>} : vector<2x8x8xbf16>, vector<2x8x8xbf16>, vector<2x8x8xf32> -> vector<2x8x8xf32>
    "tpu.trace_stop"() : () -> ()
    %c0_122 = arith.constant 0 : index
    %c0_123 = arith.constant 0 : index
    %c0_124 = arith.constant 0 : index
    %345 = vector.load %arg12[%c0_122, %c0_123, %c0_124] : memref<2x8x32xf32, #tpu.memory_space<vmem>>, vector<2x8x8xf32>
    tpu.vector_store %arg12[%c0_122, %c0_123, %c0_124], %344 {strides = array<i32>} : memref<2x8x32xf32, #tpu.memory_space<vmem>>, vector<2x8x8xf32>,
    %346 = vector.extract_strided_slice %322 {offsets = [0, 0, 8], sizes = [2, 8, 8], strides = [1, 1, 1]} : vector<2x8x32xbf16> to vector<2x8x8xbf16>
    %347 = vector.extract_strided_slice %325 {offsets = [0, 0, 8], sizes = [2, 8, 8], strides = [1, 1, 1]} : vector<2x8x32xbf16> to vector<2x8x8xbf16>
    "tpu.trace_start"() <{level = 10 : i32, message = "bqd,bkd->bqk"}> : () -> ()
    %cst_125 = arith.constant dense<0.000000e+00> : vector<2x8x8xf32>
    %348 = tpu.matmul %346, %347, %cst_125 {dimension_numbers = #tpu.dot_dimension_numbers<[2], [2], [1], [1], [0, 0, 0, 1, 1, 1], [0], [0]>} : vector<2x8x8xbf16>, vector<2x8x8xbf16>, vector<2x8x8xf32> -> vector<2x8x8xf32>
    "tpu.trace_stop"() : () -> ()
    %cst_126 = arith.constant dense<0xFF800000> : vector<2x8xf32>
    %349 = vector.multi_reduction <maximumf>, %348, %cst_126 [2] : vector<2x8x8xf32> to vector<2x8xf32>
    %350 = vector.shape_cast %349 : vector<2x8xf32> to vector<2x8x1xf32>
    %351 = vector.broadcast %350 : vector<2x8x1xf32> to vector<2x8x8xf32>
    %352 = arith.subf %348, %351 : vector<2x8x8xf32>
    %353 = math.exp %352 : vector<2x8x8xf32>
    %cst_127 = arith.constant dense<0.000000e+00> : vector<2x8xf32>
    %354 = vector.multi_reduction <add>, %353, %cst_127 [2] : vector<2x8x8xf32> to vector<2x8xf32>
    %355 = vector.shape_cast %354 : vector<2x8xf32> to vector<2x8x1xf32>
    %356 = tpu.reciprocal %355 {approx = true} : vector<2x8x1xf32> -> vector<2x8x1xf32>
    %357 = vector.broadcast %356 : vector<2x8x1xf32> to vector<2x8x8xf32>
    %358 = arith.mulf %353, %357 : vector<2x8x8xf32>
    %359 = arith.truncf %358 : vector<2x8x8xf32> to vector<2x8x8xbf16>
    %360 = vector.extract_strided_slice %328 {offsets = [0, 0, 8], sizes = [2, 8, 8], strides = [1, 1, 1]} : vector<2x8x32xbf16> to vector<2x8x8xbf16>
    "tpu.trace_start"() <{level = 10 : i32, message = "bqk,bkd->bqd"}> : () -> ()
    %cst_128 = arith.constant dense<0.000000e+00> : vector<2x8x8xf32>
    %361 = tpu.matmul %359, %360, %cst_128 {dimension_numbers = #tpu.dot_dimension_numbers<[2], [1], [1], [2], [0, 0, 0, 1, 1, 2], [0], [0]>} : vector<2x8x8xbf16>, vector<2x8x8xbf16>, vector<2x8x8xf32> -> vector<2x8x8xf32>
    "tpu.trace_stop"() : () -> ()
    %c0_129 = arith.constant 0 : index
    %c0_130 = arith.constant 0 : index
    %c8_131 = arith.constant 8 : index
    %362 = vector.load %arg12[%c0_129, %c0_130, %c8_131] : memref<2x8x32xf32, #tpu.memory_space<vmem>>, vector<2x8x8xf32>
    tpu.vector_store %arg12[%c0_129, %c0_130, %c8_131], %361 {strides = array<i32>} : memref<2x8x32xf32, #tpu.memory_space<vmem>>, vector<2x8x8xf32>,
    %363 = vector.extract_strided_slice %322 {offsets = [0, 0, 16], sizes = [2, 8, 8], strides = [1, 1, 1]} : vector<2x8x32xbf16> to vector<2x8x8xbf16>
    %364 = vector.extract_strided_slice %325 {offsets = [0, 0, 16], sizes = [2, 8, 8], strides = [1, 1, 1]} : vector<2x8x32xbf16> to vector<2x8x8xbf16>
    "tpu.trace_start"() <{level = 10 : i32, message = "bqd,bkd->bqk"}> : () -> ()
    %cst_132 = arith.constant dense<0.000000e+00> : vector<2x8x8xf32>
    %365 = tpu.matmul %363, %364, %cst_132 {dimension_numbers = #tpu.dot_dimension_numbers<[2], [2], [1], [1], [0, 0, 0, 1, 1, 1], [0], [0]>} : vector<2x8x8xbf16>, vector<2x8x8xbf16>, vector<2x8x8xf32> -> vector<2x8x8xf32>
    "tpu.trace_stop"() : () -> ()
    %cst_133 = arith.constant dense<0xFF800000> : vector<2x8xf32>
    %366 = vector.multi_reduction <maximumf>, %365, %cst_133 [2] : vector<2x8x8xf32> to vector<2x8xf32>
    %367 = vector.shape_cast %366 : vector<2x8xf32> to vector<2x8x1xf32>
    %368 = vector.broadcast %367 : vector<2x8x1xf32> to vector<2x8x8xf32>
    %369 = arith.subf %365, %368 : vector<2x8x8xf32>
    %370 = math.exp %369 : vector<2x8x8xf32>
    %cst_134 = arith.constant dense<0.000000e+00> : vector<2x8xf32>
    %371 = vector.multi_reduction <add>, %370, %cst_134 [2] : vector<2x8x8xf32> to vector<2x8xf32>
    %372 = vector.shape_cast %371 : vector<2x8xf32> to vector<2x8x1xf32>
    %373 = tpu.reciprocal %372 {approx = true} : vector<2x8x1xf32> -> vector<2x8x1xf32>
    %374 = vector.broadcast %373 : vector<2x8x1xf32> to vector<2x8x8xf32>
    %375 = arith.mulf %370, %374 : vector<2x8x8xf32>
    %376 = arith.truncf %375 : vector<2x8x8xf32> to vector<2x8x8xbf16>
    %377 = vector.extract_strided_slice %328 {offsets = [0, 0, 16], sizes = [2, 8, 8], strides = [1, 1, 1]} : vector<2x8x32xbf16> to vector<2x8x8xbf16>
    "tpu.trace_start"() <{level = 10 : i32, message = "bqk,bkd->bqd"}> : () -> ()
    %cst_135 = arith.constant dense<0.000000e+00> : vector<2x8x8xf32>
    %378 = tpu.matmul %376, %377, %cst_135 {dimension_numbers = #tpu.dot_dimension_numbers<[2], [1], [1], [2], [0, 0, 0, 1, 1, 2], [0], [0]>} : vector<2x8x8xbf16>, vector<2x8x8xbf16>, vector<2x8x8xf32> -> vector<2x8x8xf32>
    "tpu.trace_stop"() : () -> ()
    %c0_136 = arith.constant 0 : index
    %c0_137 = arith.constant 0 : index
    %c16_138 = arith.constant 16 : index
    %379 = vector.load %arg12[%c0_136, %c0_137, %c16_138] : memref<2x8x32xf32, #tpu.memory_space<vmem>>, vector<2x8x8xf32>
    tpu.vector_store %arg12[%c0_136, %c0_137, %c16_138], %378 {strides = array<i32>} : memref<2x8x32xf32, #tpu.memory_space<vmem>>, vector<2x8x8xf32>,
    %380 = vector.extract_strided_slice %322 {offsets = [0, 0, 24], sizes = [2, 8, 8], strides = [1, 1, 1]} : vector<2x8x32xbf16> to vector<2x8x8xbf16>
    %381 = vector.extract_strided_slice %325 {offsets = [0, 0, 24], sizes = [2, 8, 8], strides = [1, 1, 1]} : vector<2x8x32xbf16> to vector<2x8x8xbf16>
    "tpu.trace_start"() <{level = 10 : i32, message = "bqd,bkd->bqk"}> : () -> ()
    %cst_139 = arith.constant dense<0.000000e+00> : vector<2x8x8xf32>
    %382 = tpu.matmul %380, %381, %cst_139 {dimension_numbers = #tpu.dot_dimension_numbers<[2], [2], [1], [1], [0, 0, 0, 1, 1, 1], [0], [0]>} : vector<2x8x8xbf16>, vector<2x8x8xbf16>, vector<2x8x8xf32> -> vector<2x8x8xf32>
    "tpu.trace_stop"() : () -> ()
    %cst_140 = arith.constant dense<0xFF800000> : vector<2x8xf32>
    %383 = vector.multi_reduction <maximumf>, %382, %cst_140 [2] : vector<2x8x8xf32> to vector<2x8xf32>
    %384 = vector.shape_cast %383 : vector<2x8xf32> to vector<2x8x1xf32>
    %385 = vector.broadcast %384 : vector<2x8x1xf32> to vector<2x8x8xf32>
    %386 = arith.subf %382, %385 : vector<2x8x8xf32>
    %387 = math.exp %386 : vector<2x8x8xf32>
    %cst_141 = arith.constant dense<0.000000e+00> : vector<2x8xf32>
    %388 = vector.multi_reduction <add>, %387, %cst_141 [2] : vector<2x8x8xf32> to vector<2x8xf32>
    %389 = vector.shape_cast %388 : vector<2x8xf32> to vector<2x8x1xf32>
    %390 = tpu.reciprocal %389 {approx = true} : vector<2x8x1xf32> -> vector<2x8x1xf32>
    %391 = vector.broadcast %390 : vector<2x8x1xf32> to vector<2x8x8xf32>
    %392 = arith.mulf %387, %391 : vector<2x8x8xf32>
    %393 = arith.truncf %392 : vector<2x8x8xf32> to vector<2x8x8xbf16>
    %394 = vector.extract_strided_slice %328 {offsets = [0, 0, 24], sizes = [2, 8, 8], strides = [1, 1, 1]} : vector<2x8x32xbf16> to vector<2x8x8xbf16>
    "tpu.trace_start"() <{level = 10 : i32, message = "bqk,bkd->bqd"}> : () -> ()
    %cst_142 = arith.constant dense<0.000000e+00> : vector<2x8x8xf32>
    %395 = tpu.matmul %393, %394, %cst_142 {dimension_numbers = #tpu.dot_dimension_numbers<[2], [1], [1], [2], [0, 0, 0, 1, 1, 2], [0], [0]>} : vector<2x8x8xbf16>, vector<2x8x8xbf16>, vector<2x8x8xf32> -> vector<2x8x8xf32>
    "tpu.trace_stop"() : () -> ()
    %c0_143 = arith.constant 0 : index
    %c0_144 = arith.constant 0 : index
    %c24_145 = arith.constant 24 : index
    %396 = vector.load %arg12[%c0_143, %c0_144, %c24_145] : memref<2x8x32xf32, #tpu.memory_space<vmem>>, vector<2x8x8xf32>
    tpu.vector_store %arg12[%c0_143, %c0_144, %c24_145], %395 {strides = array<i32>} : memref<2x8x32xf32, #tpu.memory_space<vmem>>, vector<2x8x8xf32>,
    %c0_146 = arith.constant 0 : index
    %c0_147 = arith.constant 0 : index
    %c0_148 = arith.constant 0 : index
    %397 = vector.load %arg12[%c0_146, %c0_147, %c0_148] : memref<2x8x32xf32, #tpu.memory_space<vmem>>, vector<2x8x32xf32>
    %398 = vector.shape_cast %397 : vector<2x8x32xf32> to vector<16x32xf32>
    %399 = arith.truncf %398 : vector<16x32xf32> to vector<16x32xbf16>
    %c1_149 = arith.constant 1 : index
    %c0_150 = arith.constant 0 : index
    %c0_151 = arith.constant 0 : index
    %400 = vector.load %arg7[%c1_149, %c0_150, %c0_151] : memref<2x32x32xbf16, #tpu.memory_space<vmem>>, vector<1x32x32xbf16>
    %401 = vector.shape_cast %400 : vector<1x32x32xbf16> to vector<32x32xbf16>
    %cst_152 = arith.constant dense<0.000000e+00> : vector<16x32xf32>
    %402 = tpu.matmul %399, %401, %cst_152 {dimension_numbers = #tpu.dot_dimension_numbers<[1], [0], [0], [1], [0, 0, 1, 1], [], []>} : vector<16x32xbf16>, vector<32x32xbf16>, vector<16x32xf32> -> vector<16x32xf32>
    %403 = vector.extract_strided_slice %288 {offsets = [3, 0], sizes = [1, 32], strides = [1, 1]} : vector<8x128xf32> to vector<1x32xf32>
    %404 = vector.broadcast %403 : vector<1x32xf32> to vector<16x32xf32>
    %405 = arith.addf %402, %404 : vector<16x32xf32>
    %406 = arith.addf %286, %405 : vector<16x32xf32>
    %407 = vector.extract_strided_slice %288 {offsets = [4, 0], sizes = [1, 32], strides = [1, 1]} : vector<8x128xf32> to vector<1x32xf32>
    %408 = vector.extract_strided_slice %288 {offsets = [5, 0], sizes = [1, 32], strides = [1, 1]} : vector<8x128xf32> to vector<1x32xf32>
    %cst_153 = arith.constant dense<0.000000e+00> : vector<16xf32>
    %409 = vector.multi_reduction <add>, %406, %cst_153 [1] : vector<16x32xf32> to vector<16xf32>
    %410 = vector.shape_cast %409 : vector<16xf32> to vector<16x1xf32>
    %cst_154 = arith.constant 3.200000e+01 : f32
    %411 = vector.broadcast %cst_154 : f32 to vector<16x1xf32>
    %412 = arith.divf %410, %411 : vector<16x1xf32>
    %413 = vector.broadcast %412 : vector<16x1xf32> to vector<16x32xf32>
    %414 = arith.subf %406, %413 : vector<16x32xf32>
    %415 = arith.mulf %414, %414 : vector<16x32xf32>
    %cst_155 = arith.constant dense<0.000000e+00> : vector<16xf32>
    %416 = vector.multi_reduction <add>, %415, %cst_155 [1] : vector<16x32xf32> to vector<16xf32>
    %417 = vector.shape_cast %416 : vector<16xf32> to vector<16x1xf32>
    %cst_156 = arith.constant 3.200000e+01 : f32
    %418 = vector.broadcast %cst_156 : f32 to vector<16x1xf32>
    %419 = arith.divf %417, %418 : vector<16x1xf32>
    %420 = vector.broadcast %412 : vector<16x1xf32> to vector<16x32xf32>
    %421 = arith.subf %406, %420 : vector<16x32xf32>
    %cst_157 = arith.constant 9.99999974E-6 : f32
    %422 = vector.broadcast %cst_157 : f32 to vector<16x1xf32>
    %423 = arith.addf %419, %422 : vector<16x1xf32>
    %424 = math.rsqrt %423 : vector<16x1xf32>
    %425 = vector.broadcast %424 : vector<16x1xf32> to vector<16x32xf32>
    %426 = arith.mulf %421, %425 : vector<16x32xf32>
    %427 = vector.broadcast %407 : vector<1x32xf32> to vector<16x32xf32>
    %428 = arith.mulf %426, %427 : vector<16x32xf32>
    %429 = vector.broadcast %408 : vector<1x32xf32> to vector<16x32xf32>
    %430 = arith.addf %428, %429 : vector<16x32xf32>
    %431 = arith.truncf %430 : vector<16x32xf32> to vector<16x32xbf16>
    %c1_158 = arith.constant 1 : index
    %c0_159 = arith.constant 0 : index
    %c0_160 = arith.constant 0 : index
    %432 = vector.load %arg8[%c1_158, %c0_159, %c0_160] : memref<2x32x128xbf16, #tpu.memory_space<vmem>>, vector<1x32x128xbf16>
    %433 = vector.shape_cast %432 : vector<1x32x128xbf16> to vector<32x128xbf16>
    %cst_161 = arith.constant dense<0.000000e+00> : vector<16x128xf32>
    %434 = tpu.matmul %431, %433, %cst_161 {dimension_numbers = #tpu.dot_dimension_numbers<[1], [0], [0], [1], [0, 0, 1, 1], [], []>} : vector<16x32xbf16>, vector<32x128xbf16>, vector<16x128xf32> -> vector<16x128xf32>
    %435 = vector.extract_strided_slice %288 {offsets = [6, 0], sizes = [1, 128], strides = [1, 1]} : vector<8x128xf32> to vector<1x128xf32>
    %436 = vector.broadcast %435 : vector<1x128xf32> to vector<16x128xf32>
    %437 = arith.addf %434, %436 : vector<16x128xf32>
    %cst_162 = arith.constant 5.000000e-01 : f32
    %438 = vector.broadcast %cst_162 : f32 to vector<16x128xf32>
    %439 = arith.mulf %438, %437 : vector<16x128xf32>
    %cst_163 = arith.constant 0.707106769 : f32
    %440 = vector.broadcast %cst_163 : f32 to vector<16x128xf32>
    %441 = arith.mulf %437, %440 : vector<16x128xf32>
    %cst_164 = arith.constant 0.000000e+00 : f32
    %442 = vector.broadcast %cst_164 : f32 to vector<16x128xf32>
    %443 = arith.cmpf oge, %441, %442 : vector<16x128xf32>
    %cst_165 = arith.constant 1.000000e+00 : f32
    %cst_166 = arith.constant -1.000000e+00 : f32
    %444 = vector.broadcast %cst_165 : f32 to vector<16x128xf32>
    %445 = vector.broadcast %cst_166 : f32 to vector<16x128xf32>
    %446 = arith.select %443, %444, %445 : vector<16x128xi1>, vector<16x128xf32>
    %447 = math.absf %441 : vector<16x128xf32>
    %cst_167 = arith.constant 0.327591091 : f32
    %448 = vector.broadcast %cst_167 : f32 to vector<16x128xf32>
    %449 = arith.mulf %448, %447 : vector<16x128xf32>
    %cst_168 = arith.constant 1.000000e+00 : f32
    %450 = vector.broadcast %cst_168 : f32 to vector<16x128xf32>
    %451 = arith.addf %450, %449 : vector<16x128xf32>
    %cst_169 = arith.constant 1.000000e+00 : f32
    %452 = vector.broadcast %cst_169 : f32 to vector<16x128xf32>
    %453 = arith.divf %452, %451 : vector<16x128xf32>
    %cst_170 = arith.constant 1.06140542 : f32
    %454 = vector.broadcast %cst_170 : f32 to vector<16x128xf32>
    %455 = arith.mulf %454, %453 : vector<16x128xf32>
    %cst_171 = arith.constant -1.45315206 : f32
    %456 = vector.broadcast %cst_171 : f32 to vector<16x128xf32>
    %457 = arith.addf %455, %456 : vector<16x128xf32>
    %458 = arith.mulf %457, %453 : vector<16x128xf32>
    %cst_172 = arith.constant 1.42141378 : f32
    %459 = vector.broadcast %cst_172 : f32 to vector<16x128xf32>
    %460 = arith.addf %458, %459 : vector<16x128xf32>
    %461 = arith.mulf %460, %453 : vector<16x128xf32>
    %cst_173 = arith.constant -0.284496725 : f32
    %462 = vector.broadcast %cst_173 : f32 to vector<16x128xf32>
    %463 = arith.addf %461, %462 : vector<16x128xf32>
    %464 = arith.mulf %463, %453 : vector<16x128xf32>
    %cst_174 = arith.constant 0.254829586 : f32
    %465 = vector.broadcast %cst_174 : f32 to vector<16x128xf32>
    %466 = arith.addf %464, %465 : vector<16x128xf32>
    %467 = arith.mulf %466, %453 : vector<16x128xf32>
    %cst_175 = arith.constant 0.000000e+00 : f32
    %468 = vector.broadcast %cst_175 : f32 to vector<16x128xf32>
    %469 = arith.subf %468, %447 : vector<16x128xf32>
    %470 = arith.mulf %469, %447 : vector<16x128xf32>
    %471 = math.exp %470 : vector<16x128xf32>
    %472 = arith.mulf %467, %471 : vector<16x128xf32>
    %cst_176 = arith.constant 1.000000e+00 : f32
    %473 = vector.broadcast %cst_176 : f32 to vector<16x128xf32>
    %474 = arith.subf %473, %472 : vector<16x128xf32>
    %475 = arith.mulf %446, %474 : vector<16x128xf32>
    %cst_177 = arith.constant 1.000000e+00 : f32
    %476 = vector.broadcast %cst_177 : f32 to vector<16x128xf32>
    %477 = arith.addf %476, %475 : vector<16x128xf32>
    %478 = arith.mulf %439, %477 : vector<16x128xf32>
    %479 = arith.truncf %478 : vector<16x128xf32> to vector<16x128xbf16>
    %c1_178 = arith.constant 1 : index
    %c0_179 = arith.constant 0 : index
    %c0_180 = arith.constant 0 : index
    %480 = vector.load %arg9[%c1_178, %c0_179, %c0_180] : memref<2x128x32xbf16, #tpu.memory_space<vmem>>, vector<1x128x32xbf16>
    %481 = vector.shape_cast %480 : vector<1x128x32xbf16> to vector<128x32xbf16>
    %cst_181 = arith.constant dense<0.000000e+00> : vector<16x32xf32>
    %482 = tpu.matmul %479, %481, %cst_181 {dimension_numbers = #tpu.dot_dimension_numbers<[1], [0], [0], [1], [0, 0, 1, 1], [], []>} : vector<16x128xbf16>, vector<128x32xbf16>, vector<16x32xf32> -> vector<16x32xf32>
    %483 = vector.extract_strided_slice %288 {offsets = [7, 0], sizes = [1, 32], strides = [1, 1]} : vector<8x128xf32> to vector<1x32xf32>
    %484 = vector.broadcast %483 : vector<1x32xf32> to vector<16x32xf32>
    %485 = arith.addf %482, %484 : vector<16x32xf32>
    %486 = arith.addf %406, %485 : vector<16x32xf32>
    %cst_182 = arith.constant dense<0.000000e+00> : vector<16xf32>
    %487 = vector.multi_reduction <add>, %486, %cst_182 [1] : vector<16x32xf32> to vector<16xf32>
    %488 = vector.shape_cast %487 : vector<16xf32> to vector<16x1xf32>
    %cst_183 = arith.constant 3.200000e+01 : f32
    %489 = vector.broadcast %cst_183 : f32 to vector<16x1xf32>
    %490 = arith.divf %488, %489 : vector<16x1xf32>
    %491 = vector.broadcast %490 : vector<16x1xf32> to vector<16x32xf32>
    %492 = arith.subf %486, %491 : vector<16x32xf32>
    %493 = arith.mulf %492, %492 : vector<16x32xf32>
    %cst_184 = arith.constant dense<0.000000e+00> : vector<16xf32>
    %494 = vector.multi_reduction <add>, %493, %cst_184 [1] : vector<16x32xf32> to vector<16xf32>
    %495 = vector.shape_cast %494 : vector<16xf32> to vector<16x1xf32>
    %cst_185 = arith.constant 3.200000e+01 : f32
    %496 = vector.broadcast %cst_185 : f32 to vector<16x1xf32>
    %497 = arith.divf %495, %496 : vector<16x1xf32>
    %498 = vector.broadcast %490 : vector<16x1xf32> to vector<16x32xf32>
    %499 = arith.subf %486, %498 : vector<16x32xf32>
    %cst_186 = arith.constant 9.99999974E-6 : f32
    %500 = vector.broadcast %cst_186 : f32 to vector<16x1xf32>
    %501 = arith.addf %497, %500 : vector<16x1xf32>
    %502 = math.rsqrt %501 : vector<16x1xf32>
    %503 = vector.broadcast %502 : vector<16x1xf32> to vector<16x32xf32>
    %504 = arith.mulf %499, %503 : vector<16x32xf32>
    %505 = vector.broadcast %6 : vector<1x32xf32> to vector<16x32xf32>
    %506 = arith.mulf %504, %505 : vector<16x32xf32>
    %507 = vector.broadcast %7 : vector<1x32xf32> to vector<16x32xf32>
    %508 = arith.addf %506, %507 : vector<16x32xf32>
    %509 = vector.shape_cast %508 : vector<16x32xf32> to vector<2x8x32xf32>
    %cst_187 = arith.constant dense<0xFF800000> : vector<2x32xf32>
    %510 = vector.multi_reduction <maximumf>, %509, %cst_187 [1] : vector<2x8x32xf32> to vector<2x32xf32>
    %cst_188 = arith.constant 0.000000e+00 : f32
    %511 = vector.broadcast %cst_188 : f32 to vector<2x32xf32>
    %512 = arith.maximumf %510, %511 : vector<2x32xf32>
    %c0_189 = arith.constant 0 : index
    %c0_190 = arith.constant 0 : index
    %513 = vector.load %arg11[%c0_189, %c0_190] : memref<2x32xf32, #tpu.memory_space<vmem>>, vector<2x32xf32>
    tpu.vector_store %arg11[%c0_189, %c0_190], %512 {strides = array<i32>} : memref<2x32xf32, #tpu.memory_space<vmem>>, vector<2x32xf32>,
    return
  }
}

</mosaic_0001>

<llo_original>
// kernel: tpu_custom_call.1
$region0: #{tpu_custom_call.1}
  #allocation0 [shape = 'u32[]', space=smem, size = 0x4, offset = 0x4, fixed_abs, tag = 'smem constant byte address 0x4 - core index']
  #allocation1 [shape = 'u32[144,128]{1,0:T(1,128)}', space=vmem, size = 0x12000, scoped, tag = 'internal scratch']
  #allocation2 [shape = 'f32[2,8,32]{2,1,0:T(8,128)}', space=vmem, size = 0x2000, scoped, tag = 'scratch operand']
  %s0 = inlined_call_operand.vmem [shape: bf16[16,640], index: 0, kind: input, shape index: {}]
  %s1 = inlined_call_operand.vmem [shape: bf16[16,8], index: 1, kind: input, shape index: {}]
  %s2 = inlined_call_operand.vmem [shape: bf16[640,32], index: 2, kind: input, shape index: {}]
  %s3 = inlined_call_operand.vmem [shape: bf16[8,128], index: 3, kind: input, shape index: {}]
  %s4 = inlined_call_operand.vmem [shape: bf16[128,32], index: 4, kind: input, shape index: {}]
  %s5 = inlined_call_operand.vmem [shape: f32[8,128], index: 5, kind: input, shape index: {}]
  %s6 = inlined_call_operand.vmem [shape: bf16[2,32,96], index: 6, kind: input, shape index: {}]
  %s7 = inlined_call_operand.vmem [shape: bf16[2,32,32], index: 7, kind: input, shape index: {}]
  %s8 = inlined_call_operand.vmem [shape: bf16[2,32,128], index: 8, kind: input, shape index: {}]
  %s9 = inlined_call_operand.vmem [shape: bf16[2,128,32], index: 9, kind: input, shape index: {}]
  %s10 = inlined_call_operand.vmem [shape: f32[2,8,128], index: 10, kind: input, shape index: {}]
  %s11 = inlined_call_operand.hbm [shape: f32[2,32], index: 11, kind: output, shape index: {}]
  %s12 = sld [smem:[#allocation0]]
  $region54: #{tpu_custom_call.1} parent=0
    _
  %s14 = ssub.s32 1, %s12
  %s15 = scalar_select 0, %s14, %s12
  $region1: #{tpu_custom_call.1} parent=0
    #allocation3 [shape = 'u8[1024]{0}', space=vmem, size = 0x400, scoped, tag = 'output window, operand 0, single buffered']
    #allocation4 [shape = 's32[1]{0}', space=sflag, size = 0x4, scoped, tag = 'scoped memory for tpu_custom_call.1']
    %16 = vsyncpa [#allocation4], 0
    // Predicated region
    $region2: #{tpu_custom_call.1} parent=1 // pred_check
      _
    $region3: #{tpu_custom_call.1} parent=1 // pred_check_branch
      %18 = sbr.rel (0) target = $region5
    $region4: #{tpu_custom_call.1} parent=1 // pred_region
      _
    $region5: #{tpu_custom_call.1} parent=1 // pred_fallthru
      _
    // Predicated region
    $region6: #{tpu_custom_call.1} parent=1 // pred_check
      _
    $region7: #{tpu_custom_call.1} parent=1 // pred_check_branch
      %20 = sbr.rel (0) target = $region9
    $region8: #{tpu_custom_call.1} parent=1 // pred_region
      _
    $region9: #{tpu_custom_call.1} parent=1 // pred_fallthru
      _
    // Predicated region
    $region10: #{tpu_custom_call.1} parent=1 // pred_check
      _
    $region11: #{tpu_custom_call.1} parent=1 // pred_check_branch
      %22 = sbr.rel (0) target = $region13
    $region12: #{tpu_custom_call.1} parent=1 // pred_region
      _
    $region13: #{tpu_custom_call.1} parent=1 // pred_fallthru
      _
    // Predicated region
    $region14: #{tpu_custom_call.1} parent=1 // pred_check
      _
    $region15: #{tpu_custom_call.1} parent=1 // pred_check_branch
      %24 = sbr.rel (0) target = $region17
    $region16: #{tpu_custom_call.1} parent=1 // pred_region
      _
    $region17: #{tpu_custom_call.1} parent=1 // pred_fallthru
      _
    // Predicated region
    $region18: #{tpu_custom_call.1} parent=1 // pred_check
      _
    $region19: #{tpu_custom_call.1} parent=1 // pred_check_branch
      %26 = sbr.rel (0) target = $region21
    $region20: #{tpu_custom_call.1} parent=1 // pred_region
      _
    $region21: #{tpu_custom_call.1} parent=1 // pred_fallthru
      _
    // Predicated region
    $region22: #{tpu_custom_call.1} parent=1 // pred_check
      _
    $region23: #{tpu_custom_call.1} parent=1 // pred_check_branch
      %28 = sbr.rel (0) target = $region25
    $region24: #{tpu_custom_call.1} parent=1 // pred_region
      _
    $region25: #{tpu_custom_call.1} parent=1 // pred_fallthru
      _
    // Predicated region
    $region26: #{tpu_custom_call.1} parent=1 // pred_check
      _
    $region27: #{tpu_custom_call.1} parent=1 // pred_check_branch
      %30 = sbr.rel (0) target = $region29
    $region28: #{tpu_custom_call.1} parent=1 // pred_region
      _
    $region29: #{tpu_custom_call.1} parent=1 // pred_fallthru
      _
    // Predicated region
    $region30: #{tpu_custom_call.1} parent=1 // pred_check
      _
    $region31: #{tpu_custom_call.1} parent=1 // pred_check_branch
      %32 = sbr.rel (0) target = $region33
    $region32: #{tpu_custom_call.1} parent=1 // pred_region
      _
    $region33: #{tpu_custom_call.1} parent=1 // pred_fallthru
      _
    // Predicated region
    $region34: #{tpu_custom_call.1} parent=1 // pred_check
      _
    $region35: #{tpu_custom_call.1} parent=1 // pred_check_branch
      %34 = sbr.rel (0) target = $region37
    $region36: #{tpu_custom_call.1} parent=1 // pred_region
      _
    $region37: #{tpu_custom_call.1} parent=1 // pred_fallthru
      _
    // Predicated region
    $region38: #{tpu_custom_call.1} parent=1 // pred_check
      _
    $region39: #{tpu_custom_call.1} parent=1 // pred_check_branch
      %36 = sbr.rel (0) target = $region41
    $region40: #{tpu_custom_call.1} parent=1 // pred_region
      _
    $region41: #{tpu_custom_call.1} parent=1 // pred_fallthru
      _
    // Predicated region
    $region42: #{tpu_custom_call.1} parent=1 // pred_check
      _
    $region43: #{tpu_custom_call.1} parent=1 // pred_check_branch
      %38 = sbr.rel (0) target = $region45
    $region44: #{tpu_custom_call.1} parent=1 // pred_region
      _
    $region45: #{tpu_custom_call.1} parent=1 // pred_fallthru
      _
    %v40 = vld [vmem:[%s5] sm:$0xff]
    %v41 = vld [vmem:[%s0] sm:$0xff]
    %v42 = vld [vmem:[%s0 + $0x8] sm:$0xff]
    %v43 = vld [vmem:[%s0 + $0x10] sm:$0xf]
    %v44 = vld [vmem:[%s0 + $0x14] sm:$0xff]
    %v45 = vld [vmem:[%s0 + $0x1c] sm:$0xff]
    %v46 = vld [vmem:[%s0 + $0x24] sm:$0xf]
    %v47 = vld [vmem:[%s2] sm:$0xf]
    %v48 = vld [vmem:[%s2 + $0x4] sm:$0xf]
    %v49 = vld [vmem:[%s2 + $0x8] sm:$0xf]
    %v50 = vld [vmem:[%s2 + $0xc] sm:$0xf]
    %v51 = vld [vmem:[%s2 + $0x10] sm:$0xf]
    %v52 = vld [vmem:[%s2 + $0x14] sm:$0xf]
    %v53 = vld [vmem:[%s2 + $0x18] sm:$0xf]
    %v54 = vld [vmem:[%s2 + $0x1c] sm:$0xf]
    %v55 = vld [vmem:[%s2 + $0x20] sm:$0xf]
    %v56 = vld [vmem:[%s2 + $0x24] sm:$0xf]
    %v57 = vld [vmem:[%s2 + $0x28] sm:$0xf]
    %v58 = vld [vmem:[%s2 + $0x2c] sm:$0xf]
    %v59 = vld [vmem:[%s2 + $0x30] sm:$0xf]
    %v60 = vld [vmem:[%s2 + $0x34] sm:$0xf]
    %v61 = vld [vmem:[%s2 + $0x38] sm:$0xf]
    %v62 = vld [vmem:[%s2 + $0x3c] sm:$0xf]
    %v63 = vld [vmem:[%s2 + $0x40] sm:$0xf]
    %v64 = vld [vmem:[%s2 + $0x44] sm:$0xf]
    %v65 = vld [vmem:[%s2 + $0x48] sm:$0xf]
    %v66 = vld [vmem:[%s2 + $0x4c] sm:$0xf]
    %v67 = vld [vmem:[%s2 + $0x50] sm:$0xf]
    %v68 = vld [vmem:[%s2 + $0x54] sm:$0xf]
    %v69 = vld [vmem:[%s2 + $0x58] sm:$0xf]
    %v70 = vld [vmem:[%s2 + $0x5c] sm:$0xf]
    %v71 = vld [vmem:[%s2 + $0x60] sm:$0xf]
    %v72 = vld [vmem:[%s2 + $0x64] sm:$0xf]
    %v73 = vld [vmem:[%s2 + $0x68] sm:$0xf]
    %v74 = vld [vmem:[%s2 + $0x6c] sm:$0xf]
    %v75 = vld [vmem:[%s2 + $0x70] sm:$0xf]
    %v76 = vld [vmem:[%s2 + $0x74] sm:$0xf]
    %v77 = vld [vmem:[%s2 + $0x78] sm:$0xf]
    %v78 = vld [vmem:[%s2 + $0x7c] sm:$0xf]
    %v79 = vld [vmem:[%s2 + $0x80] sm:$0xf]
    %v80 = vld [vmem:[%s2 + $0x84] sm:$0xf]
    %v81 = vld [vmem:[%s2 + $0x88] sm:$0xf]
    %v82 = vld [vmem:[%s2 + $0x8c] sm:$0xf]
    %v83 = vld [vmem:[%s2 + $0x90] sm:$0xf]
    %v84 = vld [vmem:[%s2 + $0x94] sm:$0xf]
    %v85 = vld [vmem:[%s2 + $0x98] sm:$0xf]
    %v86 = vld [vmem:[%s2 + $0x9c] sm:$0xf]
    %v87 = vld [vmem:[%s2 + $0xa0] sm:$0xf]
    %v88 = vld [vmem:[%s2 + $0xa4] sm:$0xf]
    %v89 = vld [vmem:[%s2 + $0xa8] sm:$0xf]
    %v90 = vld [vmem:[%s2 + $0xac] sm:$0xf]
    %v91 = vld [vmem:[%s2 + $0xb0] sm:$0xf]
    %v92 = vld [vmem:[%s2 + $0xb4] sm:$0xf]
    %v93 = vld [vmem:[%s2 + $0xb8] sm:$0xf]
    %v94 = vld [vmem:[%s2 + $0xbc] sm:$0xf]
    %v95 = vld [vmem:[%s2 + $0xc0] sm:$0xf]
    %v96 = vld [vmem:[%s2 + $0xc4] sm:$0xf]
    %v97 = vld [vmem:[%s2 + $0xc8] sm:$0xf]
    %v98 = vld [vmem:[%s2 + $0xcc] sm:$0xf]
    %v99 = vld [vmem:[%s2 + $0xd0] sm:$0xf]
    %v100 = vld [vmem:[%s2 + $0xd4] sm:$0xf]
    %v101 = vld [vmem:[%s2 + $0xd8] sm:$0xf]
    %v102 = vld [vmem:[%s2 + $0xdc] sm:$0xf]
    %v103 = vld [vmem:[%s2 + $0xe0] sm:$0xf]
    %v104 = vld [vmem:[%s2 + $0xe4] sm:$0xf]
    %v105 = vld [vmem:[%s2 + $0xe8] sm:$0xf]
    %v106 = vld [vmem:[%s2 + $0xec] sm:$0xf]
    %v107 = vld [vmem:[%s2 + $0xf0] sm:$0xf]
    %v108 = vld [vmem:[%s2 + $0xf4] sm:$0xf]
    %v109 = vld [vmem:[%s2 + $0xf8] sm:$0xf]
    %v110 = vld [vmem:[%s2 + $0xfc] sm:$0xf]
    %v111 = vld [vmem:[%s2 + $0x100] sm:$0xf]
    %v112 = vld [vmem:[%s2 + $0x104] sm:$0xf]
    %v113 = vld [vmem:[%s2 + $0x108] sm:$0xf]
    %v114 = vld [vmem:[%s2 + $0x10c] sm:$0xf]
    %v115 = vld [vmem:[%s2 + $0x110] sm:$0xf]
    %v116 = vld [vmem:[%s2 + $0x114] sm:$0xf]
    %v117 = vld [vmem:[%s2 + $0x118] sm:$0xf]
    %v118 = vld [vmem:[%s2 + $0x11c] sm:$0xf]
    %v119 = vld [vmem:[%s2 + $0x120] sm:$0xf]
    %v120 = vld [vmem:[%s2 + $0x124] sm:$0xf]
    %v121 = vld [vmem:[%s2 + $0x128] sm:$0xf]
    %v122 = vld [vmem:[%s2 + $0x12c] sm:$0xf]
    %v123 = vld [vmem:[%s2 + $0x130] sm:$0xf]
    %v124 = vld [vmem:[%s2 + $0x134] sm:$0xf]
    %v125 = vld [vmem:[%s2 + $0x138] sm:$0xf]
    %v126 = vld [vmem:[%s2 + $0x13c] sm:$0xf]
    %v127 = vlaneseq
    %v128 = vshrl.u32 %v127, 7
    %v129 = vsub.s32 0, %v128
    %v130 = vrot.slane %v40, %v129
    %v137 = vunpack.c.l.b16 %v41
    %v138 = vunpack.c.h.b16 %v41
    %v139 = vunpack.c.l.b16 %v42
    %v140 = vunpack.c.h.b16 %v42
    %v141 = vunpack.c.l.b16 %v43
    %v142 = vunpack.c.l.b16 %v44
    %v143 = vunpack.c.h.b16 %v44
    %v144 = vunpack.c.l.b16 %v45
    %v145 = vunpack.c.h.b16 %v45
    %v146 = vunpack.c.l.b16 %v46
    %v147 = vpack.c.b16 %v142, %v137
    %v148 = vpack.c.b16 %v143, %v138
    %v149 = vpack.c.b16 %v144, %v139
    %v150 = vpack.c.b16 %v145, %v140
    %v151 = vpack.c.b16 %v146, %v141
    %v237 = vunpack.c.l.b16 %v47
    %v238 = vunpack.c.l.b16 %v48
    %v239 = vunpack.c.l.b16 %v49
    %v240 = vunpack.c.l.b16 %v50
    %v241 = vunpack.c.l.b16 %v51
    %v242 = vunpack.c.l.b16 %v52
    %v243 = vunpack.c.l.b16 %v53
    %v244 = vunpack.c.l.b16 %v54
    %v245 = vunpack.c.l.b16 %v55
    %v246 = vunpack.c.l.b16 %v56
    %v247 = vunpack.c.l.b16 %v57
    %v248 = vunpack.c.l.b16 %v58
    %v249 = vunpack.c.l.b16 %v59
    %v250 = vunpack.c.l.b16 %v60
    %v251 = vunpack.c.l.b16 %v61
    %v252 = vunpack.c.l.b16 %v62
    %v253 = vunpack.c.l.b16 %v63
    %v254 = vunpack.c.l.b16 %v64
    %v255 = vunpack.c.l.b16 %v65
    %v256 = vunpack.c.l.b16 %v66
    %v257 = vunpack.c.l.b16 %v67
    %v258 = vunpack.c.l.b16 %v68
    %v259 = vunpack.c.l.b16 %v69
    %v260 = vunpack.c.l.b16 %v70
    %v261 = vunpack.c.l.b16 %v71
    %v262 = vunpack.c.l.b16 %v72
    %v263 = vunpack.c.l.b16 %v73
    %v264 = vunpack.c.l.b16 %v74
    %v265 = vunpack.c.l.b16 %v75
    %v266 = vunpack.c.l.b16 %v76
    %v267 = vunpack.c.l.b16 %v77
    %v268 = vunpack.c.l.b16 %v78
    %v269 = vunpack.c.l.b16 %v79
    %v270 = vunpack.c.l.b16 %v80
    %v271 = vunpack.c.l.b16 %v81
    %v272 = vunpack.c.l.b16 %v82
    %v273 = vunpack.c.l.b16 %v83
    %v274 = vunpack.c.l.b16 %v84
    %v275 = vunpack.c.l.b16 %v85
    %v276 = vunpack.c.l.b16 %v86
    %v277 = vunpack.c.l.b16 %v87
    %v278 = vunpack.c.l.b16 %v88
    %v279 = vunpack.c.l.b16 %v89
    %v280 = vunpack.c.l.b16 %v90
    %v281 = vunpack.c.l.b16 %v91
    %v282 = vunpack.c.l.b16 %v92
    %v283 = vunpack.c.l.b16 %v93
    %v284 = vunpack.c.l.b16 %v94
    %v285 = vunpack.c.l.b16 %v95
    %v286 = vunpack.c.l.b16 %v96
    %v287 = vunpack.c.l.b16 %v97
    %v288 = vunpack.c.l.b16 %v98
    %v289 = vunpack.c.l.b16 %v99
    %v290 = vunpack.c.l.b16 %v100
    %v291 = vunpack.c.l.b16 %v101
    %v292 = vunpack.c.l.b16 %v102
    %v293 = vunpack.c.l.b16 %v103
    %v294 = vunpack.c.l.b16 %v104
    %v295 = vunpack.c.l.b16 %v105
    %v296 = vunpack.c.l.b16 %v106
    %v297 = vunpack.c.l.b16 %v107
    %v298 = vunpack.c.l.b16 %v108
    %v299 = vunpack.c.l.b16 %v109
    %v300 = vunpack.c.l.b16 %v110
    %v301 = vunpack.c.l.b16 %v111
    %v302 = vunpack.c.l.b16 %v112
    %v303 = vunpack.c.l.b16 %v113
    %v304 = vunpack.c.l.b16 %v114
    %v305 = vunpack.c.l.b16 %v115
    %v306 = vunpack.c.l.b16 %v116
    %v307 = vunpack.c.l.b16 %v117
    %v308 = vunpack.c.l.b16 %v118
    %v309 = vunpack.c.l.b16 %v119
    %v310 = vunpack.c.l.b16 %v120
    %v311 = vunpack.c.l.b16 %v121
    %v312 = vunpack.c.l.b16 %v122
    %v313 = vunpack.c.l.b16 %v123
    %v314 = vunpack.c.l.b16 %v124
    %v315 = vunpack.c.l.b16 %v125
    %v316 = vunpack.c.l.b16 %v126
    %v317 = vpack.c.b16 %v238, %v237
    %v318 = vpack.c.b16 %v240, %v239
    %v319 = vpack.c.b16 %v242, %v241
    %v320 = vpack.c.b16 %v244, %v243
    %v321 = vpack.c.b16 %v246, %v245
    %v322 = vpack.c.b16 %v248, %v247
    %v323 = vpack.c.b16 %v250, %v249
    %v324 = vpack.c.b16 %v252, %v251
    %v325 = vpack.c.b16 %v254, %v253
    %v326 = vpack.c.b16 %v256, %v255
    %v327 = vpack.c.b16 %v258, %v257
    %v328 = vpack.c.b16 %v260, %v259
    %v329 = vpack.c.b16 %v262, %v261
    %v330 = vpack.c.b16 %v264, %v263
    %v331 = vpack.c.b16 %v266, %v265
    %v332 = vpack.c.b16 %v268, %v267
    %v333 = vpack.c.b16 %v270, %v269
    %v334 = vpack.c.b16 %v272, %v271
    %v335 = vpack.c.b16 %v274, %v273
    %v336 = vpack.c.b16 %v276, %v275
    %v337 = vpack.c.b16 %v278, %v277
    %v338 = vpack.c.b16 %v280, %v279
    %v339 = vpack.c.b16 %v282, %v281
    %v340 = vpack.c.b16 %v284, %v283
    %v341 = vpack.c.b16 %v286, %v285
    %v342 = vpack.c.b16 %v288, %v287
    %v343 = vpack.c.b16 %v290, %v289
    %v344 = vpack.c.b16 %v292, %v291
    %v345 = vpack.c.b16 %v294, %v293
    %v346 = vpack.c.b16 %v296, %v295
    %v347 = vpack.c.b16 %v298, %v297
    %v348 = vpack.c.b16 %v300, %v299
    %v349 = vpack.c.b16 %v302, %v301
    %v350 = vpack.c.b16 %v304, %v303
    %v351 = vpack.c.b16 %v306, %v305
    %v352 = vpack.c.b16 %v308, %v307
    %v353 = vpack.c.b16 %v310, %v309
    %v354 = vpack.c.b16 %v312, %v311
    %v355 = vpack.c.b16 %v314, %v313
    %v356 = vpack.c.b16 %v316, %v315
    %397 = vmatprep.subr.bf16.mxu0 0
    %398 = vmatpush1.bf16.msra.mxu0 %v324
    %399 = vmatprep.subr.bf16.mxu0 0
    %400 = vmatpush1.bf16.msra.mxu0 %v323
    %401 = vmatprep.subr.bf16.mxu0 0
    %402 = vmatpush1.bf16.msra.mxu0 %v322
    %403 = vmatprep.subr.bf16.mxu0 0
    %404 = vmatpush1.bf16.msra.mxu0 %v321
    %405 = vmatprep.subr.bf16.mxu0 0
    %406 = vmatpush1.bf16.msra.mxu0 %v320
    %407 = vmatprep.subr.bf16.mxu0 0
    %408 = vmatpush1.bf16.msra.mxu0 %v319
    %409 = vmatprep.subr.bf16.mxu0 0
    %410 = vmatpush1.bf16.msra.mxu0 %v318
    %411 = vmatprep.subr.bf16.mxu0 0
    %412 = vmatpush1.bf16.msra.mxu0 %v317
    %413 = vmatprep.subr.bf16.mxu0 0
    %414 = vmatpush2.bf16.msra.mxu0 %v332
    %415 = vmatprep.subr.bf16.mxu0 0
    %416 = vmatpush2.bf16.msra.mxu0 %v331
    %417 = vmatprep.subr.bf16.mxu0 0
    %418 = vmatpush2.bf16.msra.mxu0 %v330
    %419 = vmatprep.subr.bf16.mxu0 0
    %420 = vmatpush2.bf16.msra.mxu0 %v329
    %421 = vmatprep.subr.bf16.mxu0 0
    %422 = vmatpush2.bf16.msra.mxu0 %v328
    %423 = vmatprep.subr.bf16.mxu0 0
    %424 = vmatpush2.bf16.msra.mxu0 %v327
    %425 = vmatprep.subr.bf16.mxu0 0
    %426 = vmatpush2.bf16.msra.mxu0 %v326
    %427 = vmatprep.subr.bf16.mxu0 0
    %428 = vmatpush2.bf16.msra.mxu0 %v325
    %429 = vmatprep.mubr.bf16.mxu0 %v148
    %430 = vmatmul.mubr.bf16.gmra.mxu0 %v147
    %v431 = vpop.f32.mrf.mxu0
    %v432 = vadd.f32 %v130, %v431
    %v433 = vpop.f32.mrf.mxu0
    %v434 = vpop.f32.mrf.mxu0
    %v435 = vadd.f32 %v130, %v434
    %v436 = vpop.f32.mrf.mxu0
    %437 = vdwg.mxu0
    %438 = vmatprep.subr.bf16.mxu0 0
    %439 = vmatpush1.bf16.msra.mxu0 %v340
    %440 = vmatprep.subr.bf16.mxu0 0
    %441 = vmatpush1.bf16.msra.mxu0 %v339
    %442 = vmatprep.subr.bf16.mxu0 0
    %443 = vmatpush1.bf16.msra.mxu0 %v338
    %444 = vmatprep.subr.bf16.mxu0 0
    %445 = vmatpush1.bf16.msra.mxu0 %v337
    %446 = vmatprep.subr.bf16.mxu0 0
    %447 = vmatpush1.bf16.msra.mxu0 %v336
    %448 = vmatprep.subr.bf16.mxu0 0
    %449 = vmatpush1.bf16.msra.mxu0 %v335
    %450 = vmatprep.subr.bf16.mxu0 0
    %451 = vmatpush1.bf16.msra.mxu0 %v334
    %452 = vmatprep.subr.bf16.mxu0 0
    %453 = vmatpush1.bf16.msra.mxu0 %v333
    %454 = vmatprep.subr.bf16.mxu0 0
    %455 = vmatpush2.bf16.msra.mxu0 %v348
    %456 = vmatprep.subr.bf16.mxu0 0
    %457 = vmatpush2.bf16.msra.mxu0 %v347
    %458 = vmatprep.subr.bf16.mxu0 0
    %459 = vmatpush2.bf16.msra.mxu0 %v346
    %460 = vmatprep.subr.bf16.mxu0 0
    %461 = vmatpush2.bf16.msra.mxu0 %v345
    %462 = vmatprep.subr.bf16.mxu0 0
    %463 = vmatpush2.bf16.msra.mxu0 %v344
    %464 = vmatprep.subr.bf16.mxu0 0
    %465 = vmatpush2.bf16.msra.mxu0 %v343
    %466 = vmatprep.subr.bf16.mxu0 0
    %467 = vmatpush2.bf16.msra.mxu0 %v342
    %468 = vmatprep.subr.bf16.mxu0 0
    %469 = vmatpush2.bf16.msra.mxu0 %v341
    %470 = vmatprep.mubr.bf16.mxu0 %v150
    %471 = vmatmul.mubr.bf16.gmra.mxu0 %v149
    %v472 = vpop.f32.mrf.mxu0
    %v473 = vadd.f32 %v432, %v472
    %v474 = vpop.f32.mrf.mxu0
    %v475 = vpop.f32.mrf.mxu0
    %v476 = vadd.f32 %v435, %v475
    %v477 = vpop.f32.mrf.mxu0
    %478 = vdwg.mxu0
    %479 = vmatprep.subr.bf16.mxu0 0
    %480 = vmatpush1.bf16.msra.mxu0 %v356
    %481 = vmatprep.subr.bf16.mxu0 0
    %482 = vmatpush1.bf16.msra.mxu0 %v355
    %483 = vmatprep.subr.bf16.mxu0 0
    %484 = vmatpush1.bf16.msra.mxu0 %v354
    %485 = vmatprep.subr.bf16.mxu0 0
    %486 = vmatpush1.bf16.msra.mxu0 %v353
    %487 = vmatprep.subr.bf16.mxu0 0
    %488 = vmatpush1.bf16.msra.mxu0 %v352
    %489 = vmatprep.subr.bf16.mxu0 0
    %490 = vmatpush1.bf16.msra.mxu0 %v351
    %491 = vmatprep.subr.bf16.mxu0 0
    %492 = vmatpush1.bf16.msra.mxu0 %v350
    %493 = vmatprep.subr.bf16.mxu0 0
    %494 = vmatpush1.bf16.msra.mxu0 %v349
    %495 = vmatprep.subr.bf16.mxu0 0
    %496 = vmatpush2.bf16.msra.mxu0 0
    %497 = vmatprep.subr.bf16.mxu0 0
    %498 = vmatpush2.bf16.msra.mxu0 0
    %499 = vmatprep.subr.bf16.mxu0 0
    %500 = vmatpush2.bf16.msra.mxu0 0
    %501 = vmatprep.subr.bf16.mxu0 0
    %502 = vmatpush2.bf16.msra.mxu0 0
    %503 = vmatprep.subr.bf16.mxu0 0
    %504 = vmatpush2.bf16.msra.mxu0 0
    %505 = vmatprep.subr.bf16.mxu0 0
    %506 = vmatpush2.bf16.msra.mxu0 0
    %507 = vmatprep.subr.bf16.mxu0 0
    %508 = vmatpush2.bf16.msra.mxu0 0
    %509 = vmatprep.subr.bf16.mxu0 0
    %510 = vmatpush2.bf16.msra.mxu0 0
    %511 = vmatprep.mubr.bf16.mxu0 0
    %512 = vmatmul.mubr.bf16.gmra.mxu0 %v151
    %v513 = vpop.f32.mrf.mxu0
    %v514 = vadd.f32 %v473, %v513
    %v515 = vpop.f32.mrf.mxu0
    %v516 = vpop.f32.mrf.mxu0
    %v517 = vadd.f32 %v476, %v516
    %v518 = vpop.f32.mrf.mxu0
    %519 = vdwg.mxu0
    %vm520 = vcmask 261120
    %v521 = vsel %vm520, %v514, 0.0
    %522 = vadd.xlane.f32.xlu0 %v521
    %v523 = vpop.xlane.xlu0 %522
    %v524 = vsel %vm520, %v517, 0.0
    %525 = vadd.xlane.f32.xlu0 %v524
    %v526 = vpop.xlane.xlu0 %525
    %v527 = vrcp.pop 32.0
    %v528 = vmul.f32 %v523, %v527
    %v529 = vmul.f32 %v526, %v527
    %v530 = vsub.f32 %v514, %v528
    %v531 = vsub.f32 %v517, %v529
    %v532 = vmul.f32 %v530, %v530
    %v533 = vmul.f32 %v531, %v531
    %v534 = vsel %vm520, %v532, 0.0
    %535 = vadd.xlane.f32.xlu0 %v534
    %v536 = vpop.xlane.xlu0 %535
    %v537 = vsel %vm520, %v533, 0.0
    %538 = vadd.xlane.f32.xlu0 %v537
    %v539 = vpop.xlane.xlu0 %538
    %v540 = vmul.f32 %v536, %v527
    %v541 = vmul.f32 %v539, %v527
    %v542 = vadd.f32 %v540, 1e-05
    %v543 = vadd.f32 %v541, 1e-05
    %v544 = vrsqrt.pop %v542
    %v545 = vrsqrt.pop %v543
    %v546 = vmul.f32 %v530, %v544
    %v547 = vmul.f32 %v531, %v545
    %v548 = vlaneseq
    %v549 = vshrl.u32 %v548, 7
    %v550 = vsub.s32 1, %v549
    %v551 = vrot.slane %v40, %v550
    %v552 = vmul.f32 %v546, %v551
    %v553 = vmul.f32 %v547, %v551
    %v554 = vlaneseq
    %v555 = vshrl.u32 %v554, 7
    %v556 = vsub.s32 2, %v555
    %v557 = vrot.slane %v40, %v556
    %v558 = vadd.f32 %v552, %v557
    %v559 = vadd.f32 %v553, %v557
    %v560 = vld [vmem:[%s1] sm:$0xf]
    %v561 = vld [vmem:[%s1 + $0x4] sm:$0xf]
    %v562 = vld [vmem:[%s3] sm:$0xf]
    %v563 = vlaneseq
    %v564 = vshrl.u32 %v563, 7
    %v565 = vsub.s32 3, %v564
    %v566 = vrot.slane %v40, %v565
    %v569 = vunpack.c.l.b16 %v560
    %v570 = vunpack.c.l.b16 %v561
    %v571 = vpack.c.b16 %v570, %v569
    %vm572 = vcmask 64512
    %v574 = vsel %vm572, %v571, 0
    %vm576 = vcmask 1043456
    %v578 = vsel %vm576, %v562, 0
    %580 = vmatprep.subr.bf16.mxu0 0
    %581 = vmatpush1.bf16.msra.mxu0 0
    %582 = vmatprep.subr.bf16.mxu0 0
    %583 = vmatpush1.bf16.msra.mxu0 0
    %584 = vmatprep.subr.bf16.mxu0 0
    %585 = vmatpush1.bf16.msra.mxu0 0
    %586 = vmatprep.subr.bf16.mxu0 0
    %587 = vmatpush1.bf16.msra.mxu0 0
    %588 = vmatprep.subr.bf16.mxu0 0
    %589 = vmatpush1.bf16.msra.mxu0 0
    %590 = vmatprep.subr.bf16.mxu0 0
    %591 = vmatpush1.bf16.msra.mxu0 0
    %592 = vmatprep.subr.bf16.mxu0 0
    %593 = vmatpush1.bf16.msra.mxu0 0
    %594 = vmatprep.subr.bf16.mxu0 0
    %595 = vmatpush1.bf16.msra.mxu0 %v578
    %596 = vmatprep.subr.bf16.mxu0 0
    %597 = vmatpush2.bf16.msra.mxu0 0
    %598 = vmatprep.subr.bf16.mxu0 0
    %599 = vmatpush2.bf16.msra.mxu0 0
    %600 = vmatprep.subr.bf16.mxu0 0
    %601 = vmatpush2.bf16.msra.mxu0 0
    %602 = vmatprep.subr.bf16.mxu0 0
    %603 = vmatpush2.bf16.msra.mxu0 0
    %604 = vmatprep.subr.bf16.mxu0 0
    %605 = vmatpush2.bf16.msra.mxu0 0
    %606 = vmatprep.subr.bf16.mxu0 0
    %607 = vmatpush2.bf16.msra.mxu0 0
    %608 = vmatprep.subr.bf16.mxu0 0
    %609 = vmatpush2.bf16.msra.mxu0 0
    %610 = vmatprep.subr.bf16.mxu0 0
    %611 = vmatpush2.bf16.msra.mxu0 0
    %612 = vmatprep.mubr.bf16.mxu0 0
    %613 = vmatmul.mubr.bf16.gmra.mxu0 %v574
    %v614 = vpop.f32.mrf.mxu0
    %v615 = vadd.f32 %v566, %v614
    %v616 = vpop.f32.mrf.mxu0
    %v617 = vpop.f32.mrf.mxu0
    %v618 = vadd.f32 %v566, %v617
    %v619 = vpop.f32.mrf.mxu0
    %620 = vdwg.mxu0
    %v621 = vmul.f32 %v615, 0.5
    %v622 = vmul.f32 %v618, 0.5
    %v623 = vmul.f32 %v615, 0.70710677
    %v624 = vmul.f32 %v618, 0.70710677
    %vm625 = vcmp.ge.f32.partialorder %v623, 0.0
    %vm626 = vcmp.ge.f32.partialorder %v624, 0.0
    %v627 = vsel %vm625, 1.0, -1.0
    %v628 = vsel %vm626, 1.0, -1.0
    %v629 = vand.u32 2147483647, %v623
    %v630 = vand.u32 2147483647, %v624
    %v631 = vmul.f32 %v629, 0.3275911
    %v632 = vmul.f32 %v630, 0.3275911
    %v633 = vadd.f32 %v631, 1.0
    %v634 = vadd.f32 %v632, 1.0
    %v635 = vrcp.pop %v633
    %v636 = vmul.f32 1.0, %v635
    %v637 = vrcp.pop %v634
    %v638 = vmul.f32 1.0, %v637
    %v639 = vmul.f32 %v636, 1.0614054
    %v640 = vmul.f32 %v638, 1.0614054
    %v641 = vadd.f32 %v639, -1.4531521
    %v642 = vadd.f32 %v640, -1.4531521
    %v643 = vmul.f32 %v641, %v636
    %v644 = vmul.f32 %v642, %v638
    %v645 = vadd.f32 %v643, 1.4214138
    %v646 = vadd.f32 %v644, 1.4214138
    %v647 = vmul.f32 %v645, %v636
    %v648 = vmul.f32 %v646, %v638
    %v649 = vadd.f32 %v647, -0.28449672
    %v650 = vadd.f32 %v648, -0.28449672
    %v651 = vmul.f32 %v649, %v636
    %v652 = vmul.f32 %v650, %v638
    %v653 = vadd.f32 %v651, 0.2548296
    %v654 = vadd.f32 %v652, 0.2548296
    %v655 = vmul.f32 %v653, %v636
    %v656 = vmul.f32 %v654, %v638
    %v657 = vsub.f32 0.0, %v629
    %v658 = vsub.f32 0.0, %v630
    %v659 = vmul.f32 %v657, %v629
    %v660 = vmul.f32 %v658, %v630
    %v661 = vmul.f32 %v659, 1.442695
    %v662 = vpow.pop %v661
    %v663 = vmul.f32 %v660, 1.442695
    %v664 = vpow.pop %v663
    %v665 = vmul.f32 %v655, %v662
    %v666 = vmul.f32 %v656, %v664
    %v667 = vsub.f32 1.0, %v665
    %v668 = vsub.f32 1.0, %v666
    %v669 = vmul.f32 %v627, %v667
    %v670 = vmul.f32 %v628, %v668
    %v671 = vadd.f32 %v669, 1.0
    %v672 = vadd.f32 %v670, 1.0
    %v673 = vmul.f32 %v621, %v671
    %v674 = vmul.f32 %v622, %v672
    %v675 = vpack.c.bf16 %v674, %v673
    %v676 = vld [vmem:[%s4] sm:$0xf]
    %v677 = vld [vmem:[%s4 + $0x4] sm:$0xf]
    %v678 = vld [vmem:[%s4 + $0x8] sm:$0xf]
    %v679 = vld [vmem:[%s4 + $0xc] sm:$0xf]
    %v680 = vld [vmem:[%s4 + $0x10] sm:$0xf]
    %v681 = vld [vmem:[%s4 + $0x14] sm:$0xf]
    %v682 = vld [vmem:[%s4 + $0x18] sm:$0xf]
    %v683 = vld [vmem:[%s4 + $0x1c] sm:$0xf]
    %v684 = vld [vmem:[%s4 + $0x20] sm:$0xf]
    %v685 = vld [vmem:[%s4 + $0x24] sm:$0xf]
    %v686 = vld [vmem:[%s4 + $0x28] sm:$0xf]
    %v687 = vld [vmem:[%s4 + $0x2c] sm:$0xf]
    %v688 = vld [vmem:[%s4 + $0x30] sm:$0xf]
    %v689 = vld [vmem:[%s4 + $0x34] sm:$0xf]
    %v690 = vld [vmem:[%s4 + $0x38] sm:$0xf]
    %v691 = vld [vmem:[%s4 + $0x3c] sm:$0xf]
    %v692 = vlaneseq
    %v693 = vshrl.u32 %v692, 7
    %v694 = vsub.s32 4, %v693
    %v695 = vrot.slane %v40, %v694
    %v712 = vunpack.c.l.b16 %v676
    %v713 = vunpack.c.l.b16 %v677
    %v714 = vunpack.c.l.b16 %v678
    %v715 = vunpack.c.l.b16 %v679
    %v716 = vunpack.c.l.b16 %v680
    %v717 = vunpack.c.l.b16 %v681
    %v718 = vunpack.c.l.b16 %v682
    %v719 = vunpack.c.l.b16 %v683
    %v720 = vunpack.c.l.b16 %v684
    %v721 = vunpack.c.l.b16 %v685
    %v722 = vunpack.c.l.b16 %v686
    %v723 = vunpack.c.l.b16 %v687
    %v724 = vunpack.c.l.b16 %v688
    %v725 = vunpack.c.l.b16 %v689
    %v726 = vunpack.c.l.b16 %v690
    %v727 = vunpack.c.l.b16 %v691
    %v728 = vpack.c.b16 %v713, %v712
    %v729 = vpack.c.b16 %v715, %v714
    %v730 = vpack.c.b16 %v717, %v716
    %v731 = vpack.c.b16 %v719, %v718
    %v732 = vpack.c.b16 %v721, %v720
    %v733 = vpack.c.b16 %v723, %v722
    %v734 = vpack.c.b16 %v725, %v724
    %v735 = vpack.c.b16 %v727, %v726
    %744 = vmatprep.subr.bf16.mxu0 0
    %745 = vmatpush1.bf16.msra.mxu0 %v735
    %746 = vmatprep.subr.bf16.mxu0 0
    %747 = vmatpush1.bf16.msra.mxu0 %v734
    %748 = vmatprep.subr.bf16.mxu0 0
    %749 = vmatpush1.bf16.msra.mxu0 %v733
    %750 = vmatprep.subr.bf16.mxu0 0
    %751 = vmatpush1.bf16.msra.mxu0 %v732
    %752 = vmatprep.subr.bf16.mxu0 0
    %753 = vmatpush1.bf16.msra.mxu0 %v731
    %754 = vmatprep.subr.bf16.mxu0 0
    %755 = vmatpush1.bf16.msra.mxu0 %v730
    %756 = vmatprep.subr.bf16.mxu0 0
    %757 = vmatpush1.bf16.msra.mxu0 %v729
    %758 = vmatprep.subr.bf16.mxu0 0
    %759 = vmatpush1.bf16.msra.mxu0 %v728
    %760 = vmatprep.subr.bf16.mxu0 0
    %761 = vmatpush2.bf16.msra.mxu0 0
    %762 = vmatprep.subr.bf16.mxu0 0
    %763 = vmatpush2.bf16.msra.mxu0 0
    %764 = vmatprep.subr.bf16.mxu0 0
    %765 = vmatpush2.bf16.msra.mxu0 0
    %766 = vmatprep.subr.bf16.mxu0 0
    %767 = vmatpush2.bf16.msra.mxu0 0
    %768 = vmatprep.subr.bf16.mxu0 0
    %769 = vmatpush2.bf16.msra.mxu0 0
    %770 = vmatprep.subr.bf16.mxu0 0
    %771 = vmatpush2.bf16.msra.mxu0 0
    %772 = vmatprep.subr.bf16.mxu0 0
    %773 = vmatpush2.bf16.msra.mxu0 0
    %774 = vmatprep.subr.bf16.mxu0 0
    %775 = vmatpush2.bf16.msra.mxu0 0
    %776 = vmatprep.mubr.bf16.mxu0 0
    %777 = vmatmul.mubr.bf16.gmra.mxu0 %v675
    %v778 = vpop.f32.mrf.mxu0
    %v779 = vadd.f32 %v695, %v778
    %v780 = vpop.f32.mrf.mxu0
    %v781 = vpop.f32.mrf.mxu0
    %v782 = vadd.f32 %v695, %v781
    %v783 = vpop.f32.mrf.mxu0
    %784 = vdwg.mxu0
    %v785 = vadd.f32 %v558, %v779
    %v786 = vadd.f32 %v559, %v782
    %v787 = vld [vmem:[%s10] sm:$0xff]
    %v788 = vsel %vm520, %v785, 0.0
    %789 = vadd.xlane.f32.xlu0 %v788
    %v790 = vpop.xlane.xlu0 %789
    %v791 = vsel %vm520, %v786, 0.0
    %792 = vadd.xlane.f32.xlu0 %v791
    %v793 = vpop.xlane.xlu0 %792
    %v794 = vmul.f32 %v790, %v527
    %v795 = vmul.f32 %v793, %v527
    %v796 = vsub.f32 %v785, %v794
    %v797 = vsub.f32 %v786, %v795
    %v798 = vmul.f32 %v796, %v796
    %v799 = vmul.f32 %v797, %v797
    %v800 = vsel %vm520, %v798, 0.0
    %801 = vadd.xlane.f32.xlu0 %v800
    %v802 = vpop.xlane.xlu0 %801
    %v803 = vsel %vm520, %v799, 0.0
    %804 = vadd.xlane.f32.xlu0 %v803
    %v805 = vpop.xlane.xlu0 %804
    %v806 = vmul.f32 %v802, %v527
    %v807 = vmul.f32 %v805, %v527
    %v808 = vadd.f32 %v806, 1e-05
    %v809 = vadd.f32 %v807, 1e-05
    %v810 = vrsqrt.pop %v808
    %v811 = vrsqrt.pop %v809
    %v812 = vmul.f32 %v796, %v810
    %v813 = vmul.f32 %v797, %v811
    %v814 = vlaneseq
    %v815 = vshrl.u32 %v814, 7
    %v816 = vsub.s32 0, %v815
    %v817 = vrot.slane %v787, %v816
    %v818 = vmul.f32 %v812, %v817
    %v819 = vmul.f32 %v813, %v817
    %v820 = vlaneseq
    %v821 = vshrl.u32 %v820, 7
    %v822 = vsub.s32 1, %v821
    %v823 = vrot.slane %v787, %v822
    %v824 = vadd.f32 %v818, %v823
    %v825 = vadd.f32 %v819, %v823
    %v826 = vpack.c.bf16 %v825, %v824
    %v827 = vld [vmem:[%s6] sm:$0xf]
    %v828 = vld [vmem:[%s6 + $0x4] sm:$0xf]
    %v829 = vld [vmem:[%s6 + $0x8] sm:$0xf]
    %v830 = vld [vmem:[%s6 + $0xc] sm:$0xf]
    %v831 = vlaneseq
    %v832 = vshrl.u32 %v831, 7
    %v833 = vsub.s32 2, %v832
    %v834 = vrot.slane %v787, %v833
    %v839 = vunpack.c.l.b16 %v827
    %v840 = vunpack.c.l.b16 %v828
    %v841 = vunpack.c.l.b16 %v829
    %v842 = vunpack.c.l.b16 %v830
    %v843 = vpack.c.b16 %v840, %v839
    %v844 = vpack.c.b16 %v842, %v841
    %v848 = vsel %vm520, %v826, 0
    %850 = vmatprep.subr.bf16.mxu0 0
    %851 = vmatpush1.bf16.msra.mxu0 0
    %852 = vmatprep.subr.bf16.mxu0 0
    %853 = vmatpush1.bf16.msra.mxu0 0
    %854 = vmatprep.subr.bf16.mxu0 0
    %855 = vmatpush1.bf16.msra.mxu0 0
    %856 = vmatprep.subr.bf16.mxu0 0
    %857 = vmatpush1.bf16.msra.mxu0 0
    %858 = vmatprep.subr.bf16.mxu0 0
    %859 = vmatpush1.bf16.msra.mxu0 0
    %860 = vmatprep.subr.bf16.mxu0 0
    %861 = vmatpush1.bf16.msra.mxu0 0
    %862 = vmatprep.subr.bf16.mxu0 0
    %863 = vmatpush1.bf16.msra.mxu0 %v844
    %864 = vmatprep.subr.bf16.mxu0 0
    %865 = vmatpush1.bf16.msra.mxu0 %v843
    %866 = vmatprep.subr.bf16.mxu0 0
    %867 = vmatpush2.bf16.msra.mxu0 0
    %868 = vmatprep.subr.bf16.mxu0 0
    %869 = vmatpush2.bf16.msra.mxu0 0
    %870 = vmatprep.subr.bf16.mxu0 0
    %871 = vmatpush2.bf16.msra.mxu0 0
    %872 = vmatprep.subr.bf16.mxu0 0
    %873 = vmatpush2.bf16.msra.mxu0 0
    %874 = vmatprep.subr.bf16.mxu0 0
    %875 = vmatpush2.bf16.msra.mxu0 0
    %876 = vmatprep.subr.bf16.mxu0 0
    %877 = vmatpush2.bf16.msra.mxu0 0
    %878 = vmatprep.subr.bf16.mxu0 0
    %879 = vmatpush2.bf16.msra.mxu0 0
    %880 = vmatprep.subr.bf16.mxu0 0
    %881 = vmatpush2.bf16.msra.mxu0 0
    %882 = vmatprep.mubr.bf16.mxu0 0
    %883 = vmatmul.mubr.bf16.gmra.mxu0 %v848
    %v884 = vpop.f32.mrf.mxu0
    %v885 = vadd.f32 %v834, %v884
    %v886 = vpop.f32.mrf.mxu0
    %v887 = vpop.f32.mrf.mxu0
    %v888 = vadd.f32 %v834, %v887
    %v889 = vpop.f32.mrf.mxu0
    %890 = vdwg.mxu0
    %v891 = vpack.c.bf16 %v885, %v885
    %v892 = vpack.c.bf16 %v888, %v888
    %894 = vrot.lane.b32.xlu0 %v891, 96
    %v895 = vpop.permute.xlu0 %894
    %v897 = vsel %vm572, %v891, 0
    %v900 = vsel %vm572, %v895, 0
    %902 = vmatprep.subr.bf16.mxu0 0
    %903 = vmatpush1.bf16.xpose.msra.mxu0 0
    %904 = vmatprep.subr.bf16.mxu0 0
    %905 = vmatpush1.bf16.xpose.msra.mxu0 0
    %906 = vmatprep.subr.bf16.mxu0 0
    %907 = vmatpush1.bf16.xpose.msra.mxu0 0
    %908 = vmatprep.subr.bf16.mxu0 0
    %909 = vmatpush1.bf16.xpose.msra.mxu0 0
    %910 = vmatprep.subr.bf16.mxu0 0
    %911 = vmatpush1.bf16.xpose.msra.mxu0 0
    %912 = vmatprep.subr.bf16.mxu0 0
    %913 = vmatpush1.bf16.xpose.msra.mxu0 0
    %914 = vmatprep.subr.bf16.mxu0 0
    %915 = vmatpush1.bf16.xpose.msra.mxu0 0
    %916 = vmatprep.subr.bf16.mxu0 0
    %917 = vmatpush1.bf16.xpose.msra.mxu0 %v900
    %918 = vmatprep.subr.bf16.mxu0 0
    %919 = vmatpush2.bf16.xpose.msra.mxu0 0
    %920 = vmatprep.subr.bf16.mxu0 0
    %921 = vmatpush2.bf16.xpose.msra.mxu0 0
    %922 = vmatprep.subr.bf16.mxu0 0
    %923 = vmatpush2.bf16.xpose.msra.mxu0 0
    %924 = vmatprep.subr.bf16.mxu0 0
    %925 = vmatpush2.bf16.xpose.msra.mxu0 0
    %926 = vmatprep.subr.bf16.mxu0 0
    %927 = vmatpush2.bf16.xpose.msra.mxu0 0
    %928 = vmatprep.subr.bf16.mxu0 0
    %929 = vmatpush2.bf16.xpose.msra.mxu0 0
    %930 = vmatprep.subr.bf16.mxu0 0
    %931 = vmatpush2.bf16.xpose.msra.mxu0 0
    %932 = vmatprep.subr.bf16.mxu0 0
    %933 = vmatpush2.bf16.xpose.msra.mxu0 0
    %934 = vmatprep.mubr.bf16.mxu0 0
    %935 = vmatmul.mubr.bf16.gmra.mxu0 %v897
    %v936 = vpop.f32.mrf.mxu0
    %v937 = vadd.f32 0.0, %v936
    %v938 = vpop.f32.mrf.mxu0
    %v939 = vpop.f32.mrf.mxu0
    %v940 = vpop.f32.mrf.mxu0
    %941 = vdwg.mxu0
    %943 = vrot.lane.b32.xlu0 %v892, 96
    %v944 = vpop.permute.xlu0 %943
    %v946 = vsel %vm572, %v892, 0
    %v949 = vsel %vm572, %v944, 0
    %951 = vmatprep.subr.bf16.mxu0 0
    %952 = vmatpush1.bf16.xpose.msra.mxu0 0
    %953 = vmatprep.subr.bf16.mxu0 0
    %954 = vmatpush1.bf16.xpose.msra.mxu0 0
    %955 = vmatprep.subr.bf16.mxu0 0
    %956 = vmatpush1.bf16.xpose.msra.mxu0 0
    %957 = vmatprep.subr.bf16.mxu0 0
    %958 = vmatpush1.bf16.xpose.msra.mxu0 0
    %959 = vmatprep.subr.bf16.mxu0 0
    %960 = vmatpush1.bf16.xpose.msra.mxu0 0
    %961 = vmatprep.subr.bf16.mxu0 0
    %962 = vmatpush1.bf16.xpose.msra.mxu0 0
    %963 = vmatprep.subr.bf16.mxu0 0
    %964 = vmatpush1.bf16.xpose.msra.mxu0 0
    %965 = vmatprep.subr.bf16.mxu0 0
    %966 = vmatpush1.bf16.xpose.msra.mxu0 %v949
    %967 = vmatprep.subr.bf16.mxu0 0
    %968 = vmatpush2.bf16.xpose.msra.mxu0 0
    %969 = vmatprep.subr.bf16.mxu0 0
    %970 = vmatpush2.bf16.xpose.msra.mxu0 0
    %971 = vmatprep.subr.bf16.mxu0 0
    %972 = vmatpush2.bf16.xpose.msra.mxu0 0
    %973 = vmatprep.subr.bf16.mxu0 0
    %974 = vmatpush2.bf16.xpose.msra.mxu0 0
    %975 = vmatprep.subr.bf16.mxu0 0
    %976 = vmatpush2.bf16.xpose.msra.mxu0 0
    %977 = vmatprep.subr.bf16.mxu0 0
    %978 = vmatpush2.bf16.xpose.msra.mxu0 0
    %979 = vmatprep.subr.bf16.mxu0 0
    %980 = vmatpush2.bf16.xpose.msra.mxu0 0
    %981 = vmatprep.subr.bf16.mxu0 0
    %982 = vmatpush2.bf16.xpose.msra.mxu0 0
    %983 = vmatprep.mubr.bf16.mxu0 0
    %984 = vmatmul.mubr.bf16.gmra.mxu0 %v946
    %v985 = vpop.f32.mrf.mxu0
    %v986 = vadd.f32 0.0, %v985
    %v987 = vpop.f32.mrf.mxu0
    %v988 = vpop.f32.mrf.mxu0
    %v989 = vpop.f32.mrf.mxu0
    %990 = vdwg.mxu0
    %v991 = vsel %vm572, %v937, -inf
    %992 = vmax.xlane.f32.xlu0 %v991
    %v993 = vpop.xlane.xlu0 %992
    %v994 = vsel %vm572, %v986, -inf
    %995 = vmax.xlane.f32.xlu0 %v994
    %v996 = vpop.xlane.xlu0 %995
    %v997 = vsub.f32 %v937, %v993
    %v998 = vsub.f32 %v986, %v996
    %v999 = vmul.f32 %v997, 1.442695
    %v1000 = vpow.pop %v999
    %v1001 = vmul.f32 %v998, 1.442695
    %v1002 = vpow.pop %v1001
    %v1003 = vsel %vm572, %v1000, 0.0
    %1004 = vadd.xlane.f32.xlu0 %v1003
    %v1005 = vpop.xlane.xlu0 %1004
    %v1006 = vsel %vm572, %v1002, 0.0
    %1007 = vadd.xlane.f32.xlu0 %v1006
    %v1008 = vpop.xlane.xlu0 %1007
    %v1009 = vrcp.pop %v1005
    %v1010 = vrcp.pop %v1008
    %v1011 = vmul.f32 %v1000, %v1009
    %v1012 = vmul.f32 %v1002, %v1010
    %v1013 = vpack.c.bf16 %v1011, %v1011
    %v1014 = vpack.c.bf16 %v1012, %v1012
    %1015 = vrot.lane.b32.xlu0 %v891, 64
    %v1016 = vpop.permute.xlu0 %1015
    %v1018 = vsel %vm572, %v1013, 0
    %v1021 = vsel %vm576, %v1016, 0
    %1023 = vmatprep.subr.bf16.mxu0 0
    %1024 = vmatpush1.bf16.msra.mxu0 0
    %1025 = vmatprep.subr.bf16.mxu0 0
    %1026 = vmatpush1.bf16.msra.mxu0 0
    %1027 = vmatprep.subr.bf16.mxu0 0
    %1028 = vmatpush1.bf16.msra.mxu0 0
    %1029 = vmatprep.subr.bf16.mxu0 0
    %1030 = vmatpush1.bf16.msra.mxu0 0
    %1031 = vmatprep.subr.bf16.mxu0 0
    %1032 = vmatpush1.bf16.msra.mxu0 0
    %1033 = vmatprep.subr.bf16.mxu0 0
    %1034 = vmatpush1.bf16.msra.mxu0 0
    %1035 = vmatprep.subr.bf16.mxu0 0
    %1036 = vmatpush1.bf16.msra.mxu0 0
    %1037 = vmatprep.subr.bf16.mxu0 0
    %1038 = vmatpush1.bf16.msra.mxu0 %v1021
    %1039 = vmatprep.subr.bf16.mxu0 0
    %1040 = vmatpush2.bf16.msra.mxu0 0
    %1041 = vmatprep.subr.bf16.mxu0 0
    %1042 = vmatpush2.bf16.msra.mxu0 0
    %1043 = vmatprep.subr.bf16.mxu0 0
    %1044 = vmatpush2.bf16.msra.mxu0 0
    %1045 = vmatprep.subr.bf16.mxu0 0
    %1046 = vmatpush2.bf16.msra.mxu0 0
    %1047 = vmatprep.subr.bf16.mxu0 0
    %1048 = vmatpush2.bf16.msra.mxu0 0
    %1049 = vmatprep.subr.bf16.mxu0 0
    %1050 = vmatpush2.bf16.msra.mxu0 0
    %1051 = vmatprep.subr.bf16.mxu0 0
    %1052 = vmatpush2.bf16.msra.mxu0 0
    %1053 = vmatprep.subr.bf16.mxu0 0
    %1054 = vmatpush2.bf16.msra.mxu0 0
    %1055 = vmatprep.mubr.bf16.mxu0 0
    %1056 = vmatmul.mubr.bf16.gmra.mxu0 %v1018
    %v1057 = vpop.f32.mrf.mxu0
    %v1058 = vadd.f32 0.0, %v1057
    %v1059 = vpop.f32.mrf.mxu0
    %v1060 = vpop.f32.mrf.mxu0
    %v1061 = vpop.f32.mrf.mxu0
    %1062 = vdwg.mxu0
    %1063 = vrot.lane.b32.xlu0 %v892, 64
    %v1064 = vpop.permute.xlu0 %1063
    %v1066 = vsel %vm572, %v1014, 0
    %v1069 = vsel %vm576, %v1064, 0
    %1071 = vmatprep.subr.bf16.mxu0 0
    %1072 = vmatpush1.bf16.msra.mxu0 0
    %1073 = vmatprep.subr.bf16.mxu0 0
    %1074 = vmatpush1.bf16.msra.mxu0 0
    %1075 = vmatprep.subr.bf16.mxu0 0
    %1076 = vmatpush1.bf16.msra.mxu0 0
    %1077 = vmatprep.subr.bf16.mxu0 0
    %1078 = vmatpush1.bf16.msra.mxu0 0
    %1079 = vmatprep.subr.bf16.mxu0 0
    %1080 = vmatpush1.bf16.msra.mxu0 0
    %1081 = vmatprep.subr.bf16.mxu0 0
    %1082 = vmatpush1.bf16.msra.mxu0 0
    %1083 = vmatprep.subr.bf16.mxu0 0
    %1084 = vmatpush1.bf16.msra.mxu0 0
    %1085 = vmatprep.subr.bf16.mxu0 0
    %1086 = vmatpush1.bf16.msra.mxu0 %v1069
    %1087 = vmatprep.subr.bf16.mxu0 0
    %1088 = vmatpush2.bf16.msra.mxu0 0
    %1089 = vmatprep.subr.bf16.mxu0 0
    %1090 = vmatpush2.bf16.msra.mxu0 0
    %1091 = vmatprep.subr.bf16.mxu0 0
    %1092 = vmatpush2.bf16.msra.mxu0 0
    %1093 = vmatprep.subr.bf16.mxu0 0
    %1094 = vmatpush2.bf16.msra.mxu0 0
    %1095 = vmatprep.subr.bf16.mxu0 0
    %1096 = vmatpush2.bf16.msra.mxu0 0
    %1097 = vmatprep.subr.bf16.mxu0 0
    %1098 = vmatpush2.bf16.msra.mxu0 0
    %1099 = vmatprep.subr.bf16.mxu0 0
    %1100 = vmatpush2.bf16.msra.mxu0 0
    %1101 = vmatprep.subr.bf16.mxu0 0
    %1102 = vmatpush2.bf16.msra.mxu0 0
    %1103 = vmatprep.mubr.bf16.mxu0 0
    %1104 = vmatmul.mubr.bf16.gmra.mxu0 %v1066
    %v1105 = vpop.f32.mrf.mxu0
    %v1106 = vadd.f32 0.0, %v1105
    %v1107 = vpop.f32.mrf.mxu0
    %v1108 = vpop.f32.mrf.mxu0
    %v1109 = vpop.f32.mrf.mxu0
    %1110 = vdwg.mxu0
    %1111 = vst.msk [vmem:[#allocation2] sm:$0xff] %vm572, %v1058
    %1112 = vst.msk [vmem:[#allocation2 + $0x8] sm:$0xff] %vm572, %v1106
    %1113 = vrot.lane.b32.xlu0 %v891, 120
    %v1114 = vpop.permute.xlu0 %1113
    %1115 = vrot.lane.b32.xlu0 %v891, 88
    %v1116 = vpop.permute.xlu0 %1115
    %v1118 = vsel %vm572, %v1114, 0
    %v1121 = vsel %vm572, %v1116, 0
    %1123 = vmatprep.subr.bf16.mxu0 0
    %1124 = vmatpush1.bf16.xpose.msra.mxu0 0
    %1125 = vmatprep.subr.bf16.mxu0 0
    %1126 = vmatpush1.bf16.xpose.msra.mxu0 0
    %1127 = vmatprep.subr.bf16.mxu0 0
    %1128 = vmatpush1.bf16.xpose.msra.mxu0 0
    %1129 = vmatprep.subr.bf16.mxu0 0
    %1130 = vmatpush1.bf16.xpose.msra.mxu0 0
    %1131 = vmatprep.subr.bf16.mxu0 0
    %1132 = vmatpush1.bf16.xpose.msra.mxu0 0
    %1133 = vmatprep.subr.bf16.mxu0 0
    %1134 = vmatpush1.bf16.xpose.msra.mxu0 0
    %1135 = vmatprep.subr.bf16.mxu0 0
    %1136 = vmatpush1.bf16.xpose.msra.mxu0 0
    %1137 = vmatprep.subr.bf16.mxu0 0
    %1138 = vmatpush1.bf16.xpose.msra.mxu0 %v1121
    %1139 = vmatprep.subr.bf16.mxu0 0
    %1140 = vmatpush2.bf16.xpose.msra.mxu0 0
    %1141 = vmatprep.subr.bf16.mxu0 0
    %1142 = vmatpush2.bf16.xpose.msra.mxu0 0
    %1143 = vmatprep.subr.bf16.mxu0 0
    %1144 = vmatpush2.bf16.xpose.msra.mxu0 0
    %1145 = vmatprep.subr.bf16.mxu0 0
    %1146 = vmatpush2.bf16.xpose.msra.mxu0 0
    %1147 = vmatprep.subr.bf16.mxu0 0
    %1148 = vmatpush2.bf16.xpose.msra.mxu0 0
    %1149 = vmatprep.subr.bf16.mxu0 0
    %1150 = vmatpush2.bf16.xpose.msra.mxu0 0
    %1151 = vmatprep.subr.bf16.mxu0 0
    %1152 = vmatpush2.bf16.xpose.msra.mxu0 0
    %1153 = vmatprep.subr.bf16.mxu0 0
    %1154 = vmatpush2.bf16.xpose.msra.mxu0 0
    %1155 = vmatprep.mubr.bf16.mxu0 0
    %1156 = vmatmul.mubr.bf16.gmra.mxu0 %v1118
    %v1157 = vpop.f32.mrf.mxu0
    %v1158 = vadd.f32 0.0, %v1157
    %v1159 = vpop.f32.mrf.mxu0
    %v1160 = vpop.f32.mrf.mxu0
    %v1161 = vpop.f32.mrf.mxu0
    %1162 = vdwg.mxu0
    %1163 = vrot.lane.b32.xlu0 %v892, 120
    %v1164 = vpop.permute.xlu0 %1163
    %1165 = vrot.lane.b32.xlu0 %v892, 88
    %v1166 = vpop.permute.xlu0 %1165
    %v1168 = vsel %vm572, %v1164, 0
    %v1171 = vsel %vm572, %v1166, 0
    %1173 = vmatprep.subr.bf16.mxu0 0
    %1174 = vmatpush1.bf16.xpose.msra.mxu0 0
    %1175 = vmatprep.subr.bf16.mxu0 0
    %1176 = vmatpush1.bf16.xpose.msra.mxu0 0
    %1177 = vmatprep.subr.bf16.mxu0 0
    %1178 = vmatpush1.bf16.xpose.msra.mxu0 0
    %1179 = vmatprep.subr.bf16.mxu0 0
    %1180 = vmatpush1.bf16.xpose.msra.mxu0 0
    %1181 = vmatprep.subr.bf16.mxu0 0
    %1182 = vmatpush1.bf16.xpose.msra.mxu0 0
    %1183 = vmatprep.subr.bf16.mxu0 0
    %1184 = vmatpush1.bf16.xpose.msra.mxu0 0
    %1185 = vmatprep.subr.bf16.mxu0 0
    %1186 = vmatpush1.bf16.xpose.msra.mxu0 0
    %1187 = vmatprep.subr.bf16.mxu0 0
    %1188 = vmatpush1.bf16.xpose.msra.mxu0 %v1171
    %1189 = vmatprep.subr.bf16.mxu0 0
    %1190 = vmatpush2.bf16.xpose.msra.mxu0 0
    %1191 = vmatprep.subr.bf16.mxu0 0
    %1192 = vmatpush2.bf16.xpose.msra.mxu0 0
    %1193 = vmatprep.subr.bf16.mxu0 0
    %1194 = vmatpush2.bf16.xpose.msra.mxu0 0
    %1195 = vmatprep.subr.bf16.mxu0 0
    %1196 = vmatpush2.bf16.xpose.msra.mxu0 0
    %1197 = vmatprep.subr.bf16.mxu0 0
    %1198 = vmatpush2.bf16.xpose.msra.mxu0 0
    %1199 = vmatprep.subr.bf16.mxu0 0
    %1200 = vmatpush2.bf16.xpose.msra.mxu0 0
    %1201 = vmatprep.subr.bf16.mxu0 0
    %1202 = vmatpush2.bf16.xpose.msra.mxu0 0
    %1203 = vmatprep.subr.bf16.mxu0 0
    %1204 = vmatpush2.bf16.xpose.msra.mxu0 0
    %1205 = vmatprep.mubr.bf16.mxu0 0
    %1206 = vmatmul.mubr.bf16.gmra.mxu0 %v1168
    %v1207 = vpop.f32.mrf.mxu0
    %v1208 = vadd.f32 0.0, %v1207
    %v1209 = vpop.f32.mrf.mxu0
    %v1210 = vpop.f32.mrf.mxu0
    %v1211 = vpop.f32.mrf.mxu0
    %1212 = vdwg.mxu0
    %v1213 = vsel %vm572, %v1158, -inf
    %1214 = vmax.xlane.f32.xlu0 %v1213
    %v1215 = vpop.xlane.xlu0 %1214
    %v1216 = vsel %vm572, %v1208, -inf
    %1217 = vmax.xlane.f32.xlu0 %v1216
    %v1218 = vpop.xlane.xlu0 %1217
    %v1219 = vsub.f32 %v1158, %v1215
    %v1220 = vsub.f32 %v1208, %v1218
    %v1221 = vmul.f32 %v1219, 1.442695
    %v1222 = vpow.pop %v1221
    %v1223 = vmul.f32 %v1220, 1.442695
    %v1224 = vpow.pop %v1223
    %v1225 = vsel %vm572, %v1222, 0.0
    %1226 = vadd.xlane.f32.xlu0 %v1225
    %v1227 = vpop.xlane.xlu0 %1226
    %v1228 = vsel %vm572, %v1224, 0.0
    %1229 = vadd.xlane.f32.xlu0 %v1228
    %v1230 = vpop.xlane.xlu0 %1229
    %v1231 = vrcp.pop %v1227
    %v1232 = vrcp.pop %v1230
    %v1233 = vmul.f32 %v1222, %v1231
    %v1234 = vmul.f32 %v1224, %v1232
    %v1235 = vpack.c.bf16 %v1233, %v1233
    %v1236 = vpack.c.bf16 %v1234, %v1234
    %1237 = vrot.lane.b32.xlu0 %v891, 56
    %v1238 = vpop.permute.xlu0 %1237
    %v1240 = vsel %vm572, %v1235, 0
    %v1243 = vsel %vm576, %v1238, 0
    %1245 = vmatprep.subr.bf16.mxu0 0
    %1246 = vmatpush1.bf16.msra.mxu0 0
    %1247 = vmatprep.subr.bf16.mxu0 0
    %1248 = vmatpush1.bf16.msra.mxu0 0
    %1249 = vmatprep.subr.bf16.mxu0 0
    %1250 = vmatpush1.bf16.msra.mxu0 0
    %1251 = vmatprep.subr.bf16.mxu0 0
    %1252 = vmatpush1.bf16.msra.mxu0 0
    %1253 = vmatprep.subr.bf16.mxu0 0
    %1254 = vmatpush1.bf16.msra.mxu0 0
    %1255 = vmatprep.subr.bf16.mxu0 0
    %1256 = vmatpush1.bf16.msra.mxu0 0
    %1257 = vmatprep.subr.bf16.mxu0 0
    %1258 = vmatpush1.bf16.msra.mxu0 0
    %1259 = vmatprep.subr.bf16.mxu0 0
    %1260 = vmatpush1.bf16.msra.mxu0 %v1243
    %1261 = vmatprep.subr.bf16.mxu0 0
    %1262 = vmatpush2.bf16.msra.mxu0 0
    %1263 = vmatprep.subr.bf16.mxu0 0
    %1264 = vmatpush2.bf16.msra.mxu0 0
    %1265 = vmatprep.subr.bf16.mxu0 0
    %1266 = vmatpush2.bf16.msra.mxu0 0
    %1267 = vmatprep.subr.bf16.mxu0 0
    %1268 = vmatpush2.bf16.msra.mxu0 0
    %1269 = vmatprep.subr.bf16.mxu0 0
    %1270 = vmatpush2.bf16.msra.mxu0 0
    %1271 = vmatprep.subr.bf16.mxu0 0
    %1272 = vmatpush2.bf16.msra.mxu0 0
    %1273 = vmatprep.subr.bf16.mxu0 0
    %1274 = vmatpush2.bf16.msra.mxu0 0
    %1275 = vmatprep.subr.bf16.mxu0 0
    %1276 = vmatpush2.bf16.msra.mxu0 0
    %1277 = vmatprep.mubr.bf16.mxu0 0
    %1278 = vmatmul.mubr.bf16.gmra.mxu0 %v1240
    %v1279 = vpop.f32.mrf.mxu0
    %v1280 = vadd.f32 0.0, %v1279
    %v1281 = vpop.f32.mrf.mxu0
    %v1282 = vpop.f32.mrf.mxu0
    %v1283 = vpop.f32.mrf.mxu0
    %1284 = vdwg.mxu0
    %1285 = vrot.lane.b32.xlu0 %v892, 56
    %v1286 = vpop.permute.xlu0 %1285
    %v1288 = vsel %vm572, %v1236, 0
    %v1291 = vsel %vm576, %v1286, 0
    %1293 = vmatprep.subr.bf16.mxu0 0
    %1294 = vmatpush1.bf16.msra.mxu0 0
    %1295 = vmatprep.subr.bf16.mxu0 0
    %1296 = vmatpush1.bf16.msra.mxu0 0
    %1297 = vmatprep.subr.bf16.mxu0 0
    %1298 = vmatpush1.bf16.msra.mxu0 0
    %1299 = vmatprep.subr.bf16.mxu0 0
    %1300 = vmatpush1.bf16.msra.mxu0 0
    %1301 = vmatprep.subr.bf16.mxu0 0
    %1302 = vmatpush1.bf16.msra.mxu0 0
    %1303 = vmatprep.subr.bf16.mxu0 0
    %1304 = vmatpush1.bf16.msra.mxu0 0
    %1305 = vmatprep.subr.bf16.mxu0 0
    %1306 = vmatpush1.bf16.msra.mxu0 0
    %1307 = vmatprep.subr.bf16.mxu0 0
    %1308 = vmatpush1.bf16.msra.mxu0 %v1291
    %1309 = vmatprep.subr.bf16.mxu0 0
    %1310 = vmatpush2.bf16.msra.mxu0 0
    %1311 = vmatprep.subr.bf16.mxu0 0
    %1312 = vmatpush2.bf16.msra.mxu0 0
    %1313 = vmatprep.subr.bf16.mxu0 0
    %1314 = vmatpush2.bf16.msra.mxu0 0
    %1315 = vmatprep.subr.bf16.mxu0 0
    %1316 = vmatpush2.bf16.msra.mxu0 0
    %1317 = vmatprep.subr.bf16.mxu0 0
    %1318 = vmatpush2.bf16.msra.mxu0 0
    %1319 = vmatprep.subr.bf16.mxu0 0
    %1320 = vmatpush2.bf16.msra.mxu0 0
    %1321 = vmatprep.subr.bf16.mxu0 0
    %1322 = vmatpush2.bf16.msra.mxu0 0
    %1323 = vmatprep.subr.bf16.mxu0 0
    %1324 = vmatpush2.bf16.msra.mxu0 0
    %1325 = vmatprep.mubr.bf16.mxu0 0
    %1326 = vmatmul.mubr.bf16.gmra.mxu0 %v1288
    %v1327 = vpop.f32.mrf.mxu0
    %v1328 = vadd.f32 0.0, %v1327
    %v1329 = vpop.f32.mrf.mxu0
    %v1330 = vpop.f32.mrf.mxu0
    %v1331 = vpop.f32.mrf.mxu0
    %1332 = vdwg.mxu0
    %1335 = vrot.lane.b32.xlu0 %v1280, 8
    %v1336 = vpop.permute.xlu0 %1335
    %1337 = vrot.lane.b32.xlu0 %v1328, 8
    %v1338 = vpop.permute.xlu0 %1337
    %vm1341 = vcmask 130112
    %1342 = vst.msk [vmem:[#allocation2] sm:$0xff] %vm1341, %v1336
    %1343 = vst.msk [vmem:[#allocation2 + $0x8] sm:$0xff] %vm1341, %v1338
    %1344 = vrot.lane.b32.xlu0 %v891, 112
    %v1345 = vpop.permute.xlu0 %1344
    %1346 = vrot.lane.b32.xlu0 %v891, 80
    %v1347 = vpop.permute.xlu0 %1346
    %v1349 = vsel %vm572, %v1345, 0
    %v1352 = vsel %vm572, %v1347, 0
    %1354 = vmatprep.subr.bf16.mxu0 0
    %1355 = vmatpush1.bf16.xpose.msra.mxu0 0
    %1356 = vmatprep.subr.bf16.mxu0 0
    %1357 = vmatpush1.bf16.xpose.msra.mxu0 0
    %1358 = vmatprep.subr.bf16.mxu0 0
    %1359 = vmatpush1.bf16.xpose.msra.mxu0 0
    %1360 = vmatprep.subr.bf16.mxu0 0
    %1361 = vmatpush1.bf16.xpose.msra.mxu0 0
    %1362 = vmatprep.subr.bf16.mxu0 0
    %1363 = vmatpush1.bf16.xpose.msra.mxu0 0
    %1364 = vmatprep.subr.bf16.mxu0 0
    %1365 = vmatpush1.bf16.xpose.msra.mxu0 0
    %1366 = vmatprep.subr.bf16.mxu0 0
    %1367 = vmatpush1.bf16.xpose.msra.mxu0 0
    %1368 = vmatprep.subr.bf16.mxu0 0
    %1369 = vmatpush1.bf16.xpose.msra.mxu0 %v1352
    %1370 = vmatprep.subr.bf16.mxu0 0
    %1371 = vmatpush2.bf16.xpose.msra.mxu0 0
    %1372 = vmatprep.subr.bf16.mxu0 0
    %1373 = vmatpush2.bf16.xpose.msra.mxu0 0
    %1374 = vmatprep.subr.bf16.mxu0 0
    %1375 = vmatpush2.bf16.xpose.msra.mxu0 0
    %1376 = vmatprep.subr.bf16.mxu0 0
    %1377 = vmatpush2.bf16.xpose.msra.mxu0 0
    %1378 = vmatprep.subr.bf16.mxu0 0
    %1379 = vmatpush2.bf16.xpose.msra.mxu0 0
    %1380 = vmatprep.subr.bf16.mxu0 0
    %1381 = vmatpush2.bf16.xpose.msra.mxu0 0
    %1382 = vmatprep.subr.bf16.mxu0 0
    %1383 = vmatpush2.bf16.xpose.msra.mxu0 0
    %1384 = vmatprep.subr.bf16.mxu0 0
    %1385 = vmatpush2.bf16.xpose.msra.mxu0 0
    %1386 = vmatprep.mubr.bf16.mxu0 0
    %1387 = vmatmul.mubr.bf16.gmra.mxu0 %v1349
    %v1388 = vpop.f32.mrf.mxu0
    %v1389 = vadd.f32 0.0, %v1388
    %v1390 = vpop.f32.mrf.mxu0
    %v1391 = vpop.f32.mrf.mxu0
    %v1392 = vpop.f32.mrf.mxu0
    %1393 = vdwg.mxu0
    %1394 = vrot.lane.b32.xlu0 %v892, 112
    %v1395 = vpop.permute.xlu0 %1394
    %1396 = vrot.lane.b32.xlu0 %v892, 80
    %v1397 = vpop.permute.xlu0 %1396
    %v1399 = vsel %vm572, %v1395, 0
    %v1402 = vsel %vm572, %v1397, 0
    %1404 = vmatprep.subr.bf16.mxu0 0
    %1405 = vmatpush1.bf16.xpose.msra.mxu0 0
    %1406 = vmatprep.subr.bf16.mxu0 0
    %1407 = vmatpush1.bf16.xpose.msra.mxu0 0
    %1408 = vmatprep.subr.bf16.mxu0 0
    %1409 = vmatpush1.bf16.xpose.msra.mxu0 0
    %1410 = vmatprep.subr.bf16.mxu0 0
    %1411 = vmatpush1.bf16.xpose.msra.mxu0 0
    %1412 = vmatprep.subr.bf16.mxu0 0
    %1413 = vmatpush1.bf16.xpose.msra.mxu0 0
    %1414 = vmatprep.subr.bf16.mxu0 0
    %1415 = vmatpush1.bf16.xpose.msra.mxu0 0
    %1416 = vmatprep.subr.bf16.mxu0 0
    %1417 = vmatpush1.bf16.xpose.msra.mxu0 0
    %1418 = vmatprep.subr.bf16.mxu0 0
    %1419 = vmatpush1.bf16.xpose.msra.mxu0 %v1402
    %1420 = vmatprep.subr.bf16.mxu0 0
    %1421 = vmatpush2.bf16.xpose.msra.mxu0 0
    %1422 = vmatprep.subr.bf16.mxu0 0
    %1423 = vmatpush2.bf16.xpose.msra.mxu0 0
    %1424 = vmatprep.subr.bf16.mxu0 0
    %1425 = vmatpush2.bf16.xpose.msra.mxu0 0
    %1426 = vmatprep.subr.bf16.mxu0 0
    %1427 = vmatpush2.bf16.xpose.msra.mxu0 0
    %1428 = vmatprep.subr.bf16.mxu0 0
    %1429 = vmatpush2.bf16.xpose.msra.mxu0 0
    %1430 = vmatprep.subr.bf16.mxu0 0
    %1431 = vmatpush2.bf16.xpose.msra.mxu0 0
    %1432 = vmatprep.subr.bf16.mxu0 0
    %1433 = vmatpush2.bf16.xpose.msra.mxu0 0
    %1434 = vmatprep.subr.bf16.mxu0 0
    %1435 = vmatpush2.bf16.xpose.msra.mxu0 0
    %1436 = vmatprep.mubr.bf16.mxu0 0
    %1437 = vmatmul.mubr.bf16.gmra.mxu0 %v1399
    %v1438 = vpop.f32.mrf.mxu0
    %v1439 = vadd.f32 0.0, %v1438
    %v1440 = vpop.f32.mrf.mxu0
    %v1441 = vpop.f32.mrf.mxu0
    %v1442 = vpop.f32.mrf.mxu0
    %1443 = vdwg.mxu0
    %v1444 = vsel %vm572, %v1389, -inf
    %1445 = vmax.xlane.f32.xlu0 %v1444
    %v1446 = vpop.xlane.xlu0 %1445
    %v1447 = vsel %vm572, %v1439, -inf
    %1448 = vmax.xlane.f32.xlu0 %v1447
    %v1449 = vpop.xlane.xlu0 %1448
    %v1450 = vsub.f32 %v1389, %v1446
    %v1451 = vsub.f32 %v1439, %v1449
    %v1452 = vmul.f32 %v1450, 1.442695
    %v1453 = vpow.pop %v1452
    %v1454 = vmul.f32 %v1451, 1.442695
    %v1455 = vpow.pop %v1454
    %v1456 = vsel %vm572, %v1453, 0.0
    %1457 = vadd.xlane.f32.xlu0 %v1456
    %v1458 = vpop.xlane.xlu0 %1457
    %v1459 = vsel %vm572, %v1455, 0.0
    %1460 = vadd.xlane.f32.xlu0 %v1459
    %v1461 = vpop.xlane.xlu0 %1460
    %v1462 = vrcp.pop %v1458
    %v1463 = vrcp.pop %v1461
    %v1464 = vmul.f32 %v1453, %v1462
    %v1465 = vmul.f32 %v1455, %v1463
    %v1466 = vpack.c.bf16 %v1464, %v1464
    %v1467 = vpack.c.bf16 %v1465, %v1465
    %1468 = vrot.lane.b32.xlu0 %v891, 48
    %v1469 = vpop.permute.xlu0 %1468
    %v1471 = vsel %vm572, %v1466, 0
    %v1474 = vsel %vm576, %v1469, 0
    %1476 = vmatprep.subr.bf16.mxu0 0
    %1477 = vmatpush1.bf16.msra.mxu0 0
    %1478 = vmatprep.subr.bf16.mxu0 0
    %1479 = vmatpush1.bf16.msra.mxu0 0
    %1480 = vmatprep.subr.bf16.mxu0 0
    %1481 = vmatpush1.bf16.msra.mxu0 0
    %1482 = vmatprep.subr.bf16.mxu0 0
    %1483 = vmatpush1.bf16.msra.mxu0 0
    %1484 = vmatprep.subr.bf16.mxu0 0
    %1485 = vmatpush1.bf16.msra.mxu0 0
    %1486 = vmatprep.subr.bf16.mxu0 0
    %1487 = vmatpush1.bf16.msra.mxu0 0
    %1488 = vmatprep.subr.bf16.mxu0 0
    %1489 = vmatpush1.bf16.msra.mxu0 0
    %1490 = vmatprep.subr.bf16.mxu0 0
    %1491 = vmatpush1.bf16.msra.mxu0 %v1474
    %1492 = vmatprep.subr.bf16.mxu0 0
    %1493 = vmatpush2.bf16.msra.mxu0 0
    %1494 = vmatprep.subr.bf16.mxu0 0
    %1495 = vmatpush2.bf16.msra.mxu0 0
    %1496 = vmatprep.subr.bf16.mxu0 0
    %1497 = vmatpush2.bf16.msra.mxu0 0
    %1498 = vmatprep.subr.bf16.mxu0 0
    %1499 = vmatpush2.bf16.msra.mxu0 0
    %1500 = vmatprep.subr.bf16.mxu0 0
    %1501 = vmatpush2.bf16.msra.mxu0 0
    %1502 = vmatprep.subr.bf16.mxu0 0
    %1503 = vmatpush2.bf16.msra.mxu0 0
    %1504 = vmatprep.subr.bf16.mxu0 0
    %1505 = vmatpush2.bf16.msra.mxu0 0
    %1506 = vmatprep.subr.bf16.mxu0 0
    %1507 = vmatpush2.bf16.msra.mxu0 0
    %1508 = vmatprep.mubr.bf16.mxu0 0
    %1509 = vmatmul.mubr.bf16.gmra.mxu0 %v1471
    %v1510 = vpop.f32.mrf.mxu0
    %v1511 = vadd.f32 0.0, %v1510
    %v1512 = vpop.f32.mrf.mxu0
    %v1513 = vpop.f32.mrf.mxu0
    %v1514 = vpop.f32.mrf.mxu0
    %1515 = vdwg.mxu0
    %1516 = vrot.lane.b32.xlu0 %v892, 48
    %v1517 = vpop.permute.xlu0 %1516
    %v1519 = vsel %vm572, %v1467, 0
    %v1522 = vsel %vm576, %v1517, 0
    %1524 = vmatprep.subr.bf16.mxu0 0
    %1525 = vmatpush1.bf16.msra.mxu0 0
    %1526 = vmatprep.subr.bf16.mxu0 0
    %1527 = vmatpush1.bf16.msra.mxu0 0
    %1528 = vmatprep.subr.bf16.mxu0 0
    %1529 = vmatpush1.bf16.msra.mxu0 0
    %1530 = vmatprep.subr.bf16.mxu0 0
    %1531 = vmatpush1.bf16.msra.mxu0 0
    %1532 = vmatprep.subr.bf16.mxu0 0
    %1533 = vmatpush1.bf16.msra.mxu0 0
    %1534 = vmatprep.subr.bf16.mxu0 0
    %1535 = vmatpush1.bf16.msra.mxu0 0
    %1536 = vmatprep.subr.bf16.mxu0 0
    %1537 = vmatpush1.bf16.msra.mxu0 0
    %1538 = vmatprep.subr.bf16.mxu0 0
    %1539 = vmatpush1.bf16.msra.mxu0 %v1522
    %1540 = vmatprep.subr.bf16.mxu0 0
    %1541 = vmatpush2.bf16.msra.mxu0 0
    %1542 = vmatprep.subr.bf16.mxu0 0
    %1543 = vmatpush2.bf16.msra.mxu0 0
    %1544 = vmatprep.subr.bf16.mxu0 0
    %1545 = vmatpush2.bf16.msra.mxu0 0
    %1546 = vmatprep.subr.bf16.mxu0 0
    %1547 = vmatpush2.bf16.msra.mxu0 0
    %1548 = vmatprep.subr.bf16.mxu0 0
    %1549 = vmatpush2.bf16.msra.mxu0 0
    %1550 = vmatprep.subr.bf16.mxu0 0
    %1551 = vmatpush2.bf16.msra.mxu0 0
    %1552 = vmatprep.subr.bf16.mxu0 0
    %1553 = vmatpush2.bf16.msra.mxu0 0
    %1554 = vmatprep.subr.bf16.mxu0 0
    %1555 = vmatpush2.bf16.msra.mxu0 0
    %1556 = vmatprep.mubr.bf16.mxu0 0
    %1557 = vmatmul.mubr.bf16.gmra.mxu0 %v1519
    %v1558 = vpop.f32.mrf.mxu0
    %v1559 = vadd.f32 0.0, %v1558
    %v1560 = vpop.f32.mrf.mxu0
    %v1561 = vpop.f32.mrf.mxu0
    %v1562 = vpop.f32.mrf.mxu0
    %1563 = vdwg.mxu0
    %1566 = vrot.lane.b32.xlu0 %v1511, 16
    %v1567 = vpop.permute.xlu0 %1566
    %1568 = vrot.lane.b32.xlu0 %v1559, 16
    %v1569 = vpop.permute.xlu0 %1568
    %vm1572 = vcmask 195712
    %1573 = vst.msk [vmem:[#allocation2] sm:$0xff] %vm1572, %v1567
    %1574 = vst.msk [vmem:[#allocation2 + $0x8] sm:$0xff] %vm1572, %v1569
    %1575 = vrot.lane.b32.xlu0 %v891, 104
    %v1576 = vpop.permute.xlu0 %1575
    %1577 = vrot.lane.b32.xlu0 %v891, 72
    %v1578 = vpop.permute.xlu0 %1577
    %v1580 = vsel %vm572, %v1576, 0
    %v1583 = vsel %vm572, %v1578, 0
    %1585 = vmatprep.subr.bf16.mxu0 0
    %1586 = vmatpush1.bf16.xpose.msra.mxu0 0
    %1587 = vmatprep.subr.bf16.mxu0 0
    %1588 = vmatpush1.bf16.xpose.msra.mxu0 0
    %1589 = vmatprep.subr.bf16.mxu0 0
    %1590 = vmatpush1.bf16.xpose.msra.mxu0 0
    %1591 = vmatprep.subr.bf16.mxu0 0
    %1592 = vmatpush1.bf16.xpose.msra.mxu0 0
    %1593 = vmatprep.subr.bf16.mxu0 0
    %1594 = vmatpush1.bf16.xpose.msra.mxu0 0
    %1595 = vmatprep.subr.bf16.mxu0 0
    %1596 = vmatpush1.bf16.xpose.msra.mxu0 0
    %1597 = vmatprep.subr.bf16.mxu0 0
    %1598 = vmatpush1.bf16.xpose.msra.mxu0 0
    %1599 = vmatprep.subr.bf16.mxu0 0
    %1600 = vmatpush1.bf16.xpose.msra.mxu0 %v1583
    %1601 = vmatprep.subr.bf16.mxu0 0
    %1602 = vmatpush2.bf16.xpose.msra.mxu0 0
    %1603 = vmatprep.subr.bf16.mxu0 0
    %1604 = vmatpush2.bf16.xpose.msra.mxu0 0
    %1605 = vmatprep.subr.bf16.mxu0 0
    %1606 = vmatpush2.bf16.xpose.msra.mxu0 0
    %1607 = vmatprep.subr.bf16.mxu0 0
    %1608 = vmatpush2.bf16.xpose.msra.mxu0 0
    %1609 = vmatprep.subr.bf16.mxu0 0
    %1610 = vmatpush2.bf16.xpose.msra.mxu0 0
    %1611 = vmatprep.subr.bf16.mxu0 0
    %1612 = vmatpush2.bf16.xpose.msra.mxu0 0
    %1613 = vmatprep.subr.bf16.mxu0 0
    %1614 = vmatpush2.bf16.xpose.msra.mxu0 0
    %1615 = vmatprep.subr.bf16.mxu0 0
    %1616 = vmatpush2.bf16.xpose.msra.mxu0 0
    %1617 = vmatprep.mubr.bf16.mxu0 0
    %1618 = vmatmul.mubr.bf16.gmra.mxu0 %v1580
    %v1619 = vpop.f32.mrf.mxu0
    %v1620 = vadd.f32 0.0, %v1619
    %v1621 = vpop.f32.mrf.mxu0
    %v1622 = vpop.f32.mrf.mxu0
    %v1623 = vpop.f32.mrf.mxu0
    %1624 = vdwg.mxu0
    %1625 = vrot.lane.b32.xlu0 %v892, 104
    %v1626 = vpop.permute.xlu0 %1625
    %1627 = vrot.lane.b32.xlu0 %v892, 72
    %v1628 = vpop.permute.xlu0 %1627
    %v1630 = vsel %vm572, %v1626, 0
    %v1633 = vsel %vm572, %v1628, 0
    %1635 = vmatprep.subr.bf16.mxu0 0
    %1636 = vmatpush1.bf16.xpose.msra.mxu0 0
    %1637 = vmatprep.subr.bf16.mxu0 0
    %1638 = vmatpush1.bf16.xpose.msra.mxu0 0
    %1639 = vmatprep.subr.bf16.mxu0 0
    %1640 = vmatpush1.bf16.xpose.msra.mxu0 0
    %1641 = vmatprep.subr.bf16.mxu0 0
    %1642 = vmatpush1.bf16.xpose.msra.mxu0 0
    %1643 = vmatprep.subr.bf16.mxu0 0
    %1644 = vmatpush1.bf16.xpose.msra.mxu0 0
    %1645 = vmatprep.subr.bf16.mxu0 0
    %1646 = vmatpush1.bf16.xpose.msra.mxu0 0
    %1647 = vmatprep.subr.bf16.mxu0 0
    %1648 = vmatpush1.bf16.xpose.msra.mxu0 0
    %1649 = vmatprep.subr.bf16.mxu0 0
    %1650 = vmatpush1.bf16.xpose.msra.mxu0 %v1633
    %1651 = vmatprep.subr.bf16.mxu0 0
    %1652 = vmatpush2.bf16.xpose.msra.mxu0 0
    %1653 = vmatprep.subr.bf16.mxu0 0
    %1654 = vmatpush2.bf16.xpose.msra.mxu0 0
    %1655 = vmatprep.subr.bf16.mxu0 0
    %1656 = vmatpush2.bf16.xpose.msra.mxu0 0
    %1657 = vmatprep.subr.bf16.mxu0 0
    %1658 = vmatpush2.bf16.xpose.msra.mxu0 0
    %1659 = vmatprep.subr.bf16.mxu0 0
    %1660 = vmatpush2.bf16.xpose.msra.mxu0 0
    %1661 = vmatprep.subr.bf16.mxu0 0
    %1662 = vmatpush2.bf16.xpose.msra.mxu0 0
    %1663 = vmatprep.subr.bf16.mxu0 0
    %1664 = vmatpush2.bf16.xpose.msra.mxu0 0
    %1665 = vmatprep.subr.bf16.mxu0 0
    %1666 = vmatpush2.bf16.xpose.msra.mxu0 0
    %1667 = vmatprep.mubr.bf16.mxu0 0
    %1668 = vmatmul.mubr.bf16.gmra.mxu0 %v1630
    %v1669 = vpop.f32.mrf.mxu0
    %v1670 = vadd.f32 0.0, %v1669
    %v1671 = vpop.f32.mrf.mxu0
    %v1672 = vpop.f32.mrf.mxu0
    %v1673 = vpop.f32.mrf.mxu0
    %1674 = vdwg.mxu0
    %v1675 = vsel %vm572, %v1620, -inf
    %1676 = vmax.xlane.f32.xlu0 %v1675
    %v1677 = vpop.xlane.xlu0 %1676
    %v1678 = vsel %vm572, %v1670, -inf
    %1679 = vmax.xlane.f32.xlu0 %v1678
    %v1680 = vpop.xlane.xlu0 %1679
    %v1681 = vsub.f32 %v1620, %v1677
    %v1682 = vsub.f32 %v1670, %v1680
    %v1683 = vmul.f32 %v1681, 1.442695
    %v1684 = vpow.pop %v1683
    %v1685 = vmul.f32 %v1682, 1.442695
    %v1686 = vpow.pop %v1685
    %v1687 = vsel %vm572, %v1684, 0.0
    %1688 = vadd.xlane.f32.xlu0 %v1687
    %v1689 = vpop.xlane.xlu0 %1688
    %v1690 = vsel %vm572, %v1686, 0.0
    %1691 = vadd.xlane.f32.xlu0 %v1690
    %v1692 = vpop.xlane.xlu0 %1691
    %v1693 = vrcp.pop %v1689
    %v1694 = vrcp.pop %v1692
    %v1695 = vmul.f32 %v1684, %v1693
    %v1696 = vmul.f32 %v1686, %v1694
    %v1697 = vpack.c.bf16 %v1695, %v1695
    %v1698 = vpack.c.bf16 %v1696, %v1696
    %1699 = vrot.lane.b32.xlu0 %v891, 40
    %v1700 = vpop.permute.xlu0 %1699
    %v1702 = vsel %vm572, %v1697, 0
    %v1705 = vsel %vm576, %v1700, 0
    %1707 = vmatprep.subr.bf16.mxu0 0
    %1708 = vmatpush1.bf16.msra.mxu0 0
    %1709 = vmatprep.subr.bf16.mxu0 0
    %1710 = vmatpush1.bf16.msra.mxu0 0
    %1711 = vmatprep.subr.bf16.mxu0 0
    %1712 = vmatpush1.bf16.msra.mxu0 0
    %1713 = vmatprep.subr.bf16.mxu0 0
    %1714 = vmatpush1.bf16.msra.mxu0 0
    %1715 = vmatprep.subr.bf16.mxu0 0
    %1716 = vmatpush1.bf16.msra.mxu0 0
    %1717 = vmatprep.subr.bf16.mxu0 0
    %1718 = vmatpush1.bf16.msra.mxu0 0
    %1719 = vmatprep.subr.bf16.mxu0 0
    %1720 = vmatpush1.bf16.msra.mxu0 0
    %1721 = vmatprep.subr.bf16.mxu0 0
    %1722 = vmatpush1.bf16.msra.mxu0 %v1705
    %1723 = vmatprep.subr.bf16.mxu0 0
    %1724 = vmatpush2.bf16.msra.mxu0 0
    %1725 = vmatprep.subr.bf16.mxu0 0
    %1726 = vmatpush2.bf16.msra.mxu0 0
    %1727 = vmatprep.subr.bf16.mxu0 0
    %1728 = vmatpush2.bf16.msra.mxu0 0
    %1729 = vmatprep.subr.bf16.mxu0 0
    %1730 = vmatpush2.bf16.msra.mxu0 0
    %1731 = vmatprep.subr.bf16.mxu0 0
    %1732 = vmatpush2.bf16.msra.mxu0 0
    %1733 = vmatprep.subr.bf16.mxu0 0
    %1734 = vmatpush2.bf16.msra.mxu0 0
    %1735 = vmatprep.subr.bf16.mxu0 0
    %1736 = vmatpush2.bf16.msra.mxu0 0
    %1737 = vmatprep.subr.bf16.mxu0 0
    %1738 = vmatpush2.bf16.msra.mxu0 0
    %1739 = vmatprep.mubr.bf16.mxu0 0
    %1740 = vmatmul.mubr.bf16.gmra.mxu0 %v1702
    %v1741 = vpop.f32.mrf.mxu0
    %v1742 = vadd.f32 0.0, %v1741
    %v1743 = vpop.f32.mrf.mxu0
    %v1744 = vpop.f32.mrf.mxu0
    %v1745 = vpop.f32.mrf.mxu0
    %1746 = vdwg.mxu0
    %1747 = vrot.lane.b32.xlu0 %v892, 40
    %v1748 = vpop.permute.xlu0 %1747
    %v1750 = vsel %vm572, %v1698, 0
    %v1753 = vsel %vm576, %v1748, 0
    %1755 = vmatprep.subr.bf16.mxu0 0
    %1756 = vmatpush1.bf16.msra.mxu0 0
    %1757 = vmatprep.subr.bf16.mxu0 0
    %1758 = vmatpush1.bf16.msra.mxu0 0
    %1759 = vmatprep.subr.bf16.mxu0 0
    %1760 = vmatpush1.bf16.msra.mxu0 0
    %1761 = vmatprep.subr.bf16.mxu0 0
    %1762 = vmatpush1.bf16.msra.mxu0 0
    %1763 = vmatprep.subr.bf16.mxu0 0
    %1764 = vmatpush1.bf16.msra.mxu0 0
    %1765 = vmatprep.subr.bf16.mxu0 0
    %1766 = vmatpush1.bf16.msra.mxu0 0
    %1767 = vmatprep.subr.bf16.mxu0 0
    %1768 = vmatpush1.bf16.msra.mxu0 0
    %1769 = vmatprep.subr.bf16.mxu0 0
    %1770 = vmatpush1.bf16.msra.mxu0 %v1753
    %1771 = vmatprep.subr.bf16.mxu0 0
    %1772 = vmatpush2.bf16.msra.mxu0 0
    %1773 = vmatprep.subr.bf16.mxu0 0
    %1774 = vmatpush2.bf16.msra.mxu0 0
    %1775 = vmatprep.subr.bf16.mxu0 0
    %1776 = vmatpush2.bf16.msra.mxu0 0
    %1777 = vmatprep.subr.bf16.mxu0 0
    %1778 = vmatpush2.bf16.msra.mxu0 0
    %1779 = vmatprep.subr.bf16.mxu0 0
    %1780 = vmatpush2.bf16.msra.mxu0 0
    %1781 = vmatprep.subr.bf16.mxu0 0
    %1782 = vmatpush2.bf16.msra.mxu0 0
    %1783 = vmatprep.subr.bf16.mxu0 0
    %1784 = vmatpush2.bf16.msra.mxu0 0
    %1785 = vmatprep.subr.bf16.mxu0 0
    %1786 = vmatpush2.bf16.msra.mxu0 0
    %1787 = vmatprep.mubr.bf16.mxu0 0
    %1788 = vmatmul.mubr.bf16.gmra.mxu0 %v1750
    %v1789 = vpop.f32.mrf.mxu0
    %v1790 = vadd.f32 0.0, %v1789
    %v1791 = vpop.f32.mrf.mxu0
    %v1792 = vpop.f32.mrf.mxu0
    %v1793 = vpop.f32.mrf.mxu0
    %1794 = vdwg.mxu0
    %1797 = vrot.lane.b32.xlu0 %v1742, 24
    %v1798 = vpop.permute.xlu0 %1797
    %1799 = vrot.lane.b32.xlu0 %v1790, 24
    %v1800 = vpop.permute.xlu0 %1799
    %vm1803 = vcmask 261312
    %1804 = vst.msk [vmem:[#allocation2] sm:$0xff] %vm1803, %v1798
    %1805 = vst.msk [vmem:[#allocation2 + $0x8] sm:$0xff] %vm1803, %v1800
    %v1806 = vld [vmem:[#allocation2] sm:$0xff]
    %v1807 = vld [vmem:[#allocation2 + $0x8] sm:$0xff]
    %v1808 = vpack.c.bf16 %v1807, %v1806
    %v1809 = vld [vmem:[%s7] sm:$0xf]
    %v1810 = vld [vmem:[%s7 + $0x4] sm:$0xf]
    %v1811 = vld [vmem:[%s7 + $0x8] sm:$0xf]
    %v1812 = vld [vmem:[%s7 + $0xc] sm:$0xf]
    %v1813 = vlaneseq
    %v1814 = vshrl.u32 %v1813, 7
    %v1815 = vsub.s32 3, %v1814
    %v1816 = vrot.slane %v787, %v1815
    %v1821 = vunpack.c.l.b16 %v1809
    %v1822 = vunpack.c.l.b16 %v1810
    %v1823 = vunpack.c.l.b16 %v1811
    %v1824 = vunpack.c.l.b16 %v1812
    %v1825 = vpack.c.b16 %v1822, %v1821
    %v1826 = vpack.c.b16 %v1824, %v1823
    %v1830 = vsel %vm520, %v1808, 0
    %1832 = vmatprep.subr.bf16.mxu0 0
    %1833 = vmatpush1.bf16.msra.mxu0 0
    %1834 = vmatprep.subr.bf16.mxu0 0
    %1835 = vmatpush1.bf16.msra.mxu0 0
    %1836 = vmatprep.subr.bf16.mxu0 0
    %1837 = vmatpush1.bf16.msra.mxu0 0
    %1838 = vmatprep.subr.bf16.mxu0 0
    %1839 = vmatpush1.bf16.msra.mxu0 0
    %1840 = vmatprep.subr.bf16.mxu0 0
    %1841 = vmatpush1.bf16.msra.mxu0 0
    %1842 = vmatprep.subr.bf16.mxu0 0
    %1843 = vmatpush1.bf16.msra.mxu0 0
    %1844 = vmatprep.subr.bf16.mxu0 0
    %1845 = vmatpush1.bf16.msra.mxu0 %v1826
    %1846 = vmatprep.subr.bf16.mxu0 0
    %1847 = vmatpush1.bf16.msra.mxu0 %v1825
    %1848 = vmatprep.subr.bf16.mxu0 0
    %1849 = vmatpush2.bf16.msra.mxu0 0
    %1850 = vmatprep.subr.bf16.mxu0 0
    %1851 = vmatpush2.bf16.msra.mxu0 0
    %1852 = vmatprep.subr.bf16.mxu0 0
    %1853 = vmatpush2.bf16.msra.mxu0 0
    %1854 = vmatprep.subr.bf16.mxu0 0
    %1855 = vmatpush2.bf16.msra.mxu0 0
    %1856 = vmatprep.subr.bf16.mxu0 0
    %1857 = vmatpush2.bf16.msra.mxu0 0
    %1858 = vmatprep.subr.bf16.mxu0 0
    %1859 = vmatpush2.bf16.msra.mxu0 0
    %1860 = vmatprep.subr.bf16.mxu0 0
    %1861 = vmatpush2.bf16.msra.mxu0 0
    %1862 = vmatprep.subr.bf16.mxu0 0
    %1863 = vmatpush2.bf16.msra.mxu0 0
    %1864 = vmatprep.mubr.bf16.mxu0 0
    %1865 = vmatmul.mubr.bf16.gmra.mxu0 %v1830
    %v1866 = vpop.f32.mrf.mxu0
    %v1867 = vadd.f32 %v1816, %v1866
    %v1868 = vpop.f32.mrf.mxu0
    %v1869 = vpop.f32.mrf.mxu0
    %v1870 = vadd.f32 %v1816, %v1869
    %v1871 = vpop.f32.mrf.mxu0
    %1872 = vdwg.mxu0
    %v1873 = vadd.f32 %v785, %v1867
    %v1874 = vadd.f32 %v786, %v1870
    %v1875 = vsel %vm520, %v1873, 0.0
    %1876 = vadd.xlane.f32.xlu0 %v1875
    %v1877 = vpop.xlane.xlu0 %1876
    %v1878 = vsel %vm520, %v1874, 0.0
    %1879 = vadd.xlane.f32.xlu0 %v1878
    %v1880 = vpop.xlane.xlu0 %1879
    %v1881 = vmul.f32 %v1877, %v527
    %v1882 = vmul.f32 %v1880, %v527
    %v1883 = vsub.f32 %v1873, %v1881
    %v1884 = vsub.f32 %v1874, %v1882
    %v1885 = vmul.f32 %v1883, %v1883
    %v1886 = vmul.f32 %v1884, %v1884
    %v1887 = vsel %vm520, %v1885, 0.0
    %1888 = vadd.xlane.f32.xlu0 %v1887
    %v1889 = vpop.xlane.xlu0 %1888
    %v1890 = vsel %vm520, %v1886, 0.0
    %1891 = vadd.xlane.f32.xlu0 %v1890
    %v1892 = vpop.xlane.xlu0 %1891
    %v1893 = vmul.f32 %v1889, %v527
    %v1894 = vmul.f32 %v1892, %v527
    %v1895 = vadd.f32 %v1893, 1e-05
    %v1896 = vadd.f32 %v1894, 1e-05
    %v1897 = vrsqrt.pop %v1895
    %v1898 = vrsqrt.pop %v1896
    %v1899 = vmul.f32 %v1883, %v1897
    %v1900 = vmul.f32 %v1884, %v1898
    %v1901 = vlaneseq
    %v1902 = vshrl.u32 %v1901, 7
    %v1903 = vsub.s32 4, %v1902
    %v1904 = vrot.slane %v787, %v1903
    %v1905 = vmul.f32 %v1899, %v1904
    %v1906 = vmul.f32 %v1900, %v1904
    %v1907 = vlaneseq
    %v1908 = vshrl.u32 %v1907, 7
    %v1909 = vsub.s32 5, %v1908
    %v1910 = vrot.slane %v787, %v1909
    %v1911 = vadd.f32 %v1905, %v1910
    %v1912 = vadd.f32 %v1906, %v1910
    %v1913 = vpack.c.bf16 %v1912, %v1911
    %v1914 = vld [vmem:[%s8] sm:$0xf]
    %v1915 = vld [vmem:[%s8 + $0x4] sm:$0xf]
    %v1916 = vld [vmem:[%s8 + $0x8] sm:$0xf]
    %v1917 = vld [vmem:[%s8 + $0xc] sm:$0xf]
    %v1918 = vlaneseq
    %v1919 = vshrl.u32 %v1918, 7
    %v1920 = vsub.s32 6, %v1919
    %v1921 = vrot.slane %v787, %v1920
    %v1926 = vunpack.c.l.b16 %v1914
    %v1927 = vunpack.c.l.b16 %v1915
    %v1928 = vunpack.c.l.b16 %v1916
    %v1929 = vunpack.c.l.b16 %v1917
    %v1930 = vpack.c.b16 %v1927, %v1926
    %v1931 = vpack.c.b16 %v1929, %v1928
    %v1935 = vsel %vm520, %v1913, 0
    %1937 = vmatprep.subr.bf16.mxu0 0
    %1938 = vmatpush1.bf16.msra.mxu0 0
    %1939 = vmatprep.subr.bf16.mxu0 0
    %1940 = vmatpush1.bf16.msra.mxu0 0
    %1941 = vmatprep.subr.bf16.mxu0 0
    %1942 = vmatpush1.bf16.msra.mxu0 0
    %1943 = vmatprep.subr.bf16.mxu0 0
    %1944 = vmatpush1.bf16.msra.mxu0 0
    %1945 = vmatprep.subr.bf16.mxu0 0
    %1946 = vmatpush1.bf16.msra.mxu0 0
    %1947 = vmatprep.subr.bf16.mxu0 0
    %1948 = vmatpush1.bf16.msra.mxu0 0
    %1949 = vmatprep.subr.bf16.mxu0 0
    %1950 = vmatpush1.bf16.msra.mxu0 %v1931
    %1951 = vmatprep.subr.bf16.mxu0 0
    %1952 = vmatpush1.bf16.msra.mxu0 %v1930
    %1953 = vmatprep.subr.bf16.mxu0 0
    %1954 = vmatpush2.bf16.msra.mxu0 0
    %1955 = vmatprep.subr.bf16.mxu0 0
    %1956 = vmatpush2.bf16.msra.mxu0 0
    %1957 = vmatprep.subr.bf16.mxu0 0
    %1958 = vmatpush2.bf16.msra.mxu0 0
    %1959 = vmatprep.subr.bf16.mxu0 0
    %1960 = vmatpush2.bf16.msra.mxu0 0
    %1961 = vmatprep.subr.bf16.mxu0 0
    %1962 = vmatpush2.bf16.msra.mxu0 0
    %1963 = vmatprep.subr.bf16.mxu0 0
    %1964 = vmatpush2.bf16.msra.mxu0 0
    %1965 = vmatprep.subr.bf16.mxu0 0
    %1966 = vmatpush2.bf16.msra.mxu0 0
    %1967 = vmatprep.subr.bf16.mxu0 0
    %1968 = vmatpush2.bf16.msra.mxu0 0
    %1969 = vmatprep.mubr.bf16.mxu0 0
    %1970 = vmatmul.mubr.bf16.gmra.mxu0 %v1935
    %v1971 = vpop.f32.mrf.mxu0
    %v1972 = vadd.f32 %v1921, %v1971
    %v1973 = vpop.f32.mrf.mxu0
    %v1974 = vpop.f32.mrf.mxu0
    %v1975 = vadd.f32 %v1921, %v1974
    %v1976 = vpop.f32.mrf.mxu0
    %1977 = vdwg.mxu0
    %v1978 = vmul.f32 %v1972, 0.5
    %v1979 = vmul.f32 %v1975, 0.5
    %v1980 = vmul.f32 %v1972, 0.70710677
    %v1981 = vmul.f32 %v1975, 0.70710677
    %vm1982 = vcmp.ge.f32.partialorder %v1980, 0.0
    %vm1983 = vcmp.ge.f32.partialorder %v1981, 0.0
    %v1984 = vsel %vm1982, 1.0, -1.0
    %v1985 = vsel %vm1983, 1.0, -1.0
    %v1986 = vand.u32 2147483647, %v1980
    %v1987 = vand.u32 2147483647, %v1981
    %v1988 = vmul.f32 %v1986, 0.3275911
    %v1989 = vmul.f32 %v1987, 0.3275911
    %v1990 = vadd.f32 %v1988, 1.0
    %v1991 = vadd.f32 %v1989, 1.0
    %v1992 = vrcp.pop %v1990
    %v1993 = vmul.f32 1.0, %v1992
    %v1994 = vrcp.pop %v1991
    %v1995 = vmul.f32 1.0, %v1994
    %v1996 = vmul.f32 %v1993, 1.0614054
    %v1997 = vmul.f32 %v1995, 1.0614054
    %v1998 = vadd.f32 %v1996, -1.4531521
    %v1999 = vadd.f32 %v1997, -1.4531521
    %v2000 = vmul.f32 %v1998, %v1993
    %v2001 = vmul.f32 %v1999, %v1995
    %v2002 = vadd.f32 %v2000, 1.4214138
    %v2003 = vadd.f32 %v2001, 1.4214138
    %v2004 = vmul.f32 %v2002, %v1993
    %v2005 = vmul.f32 %v2003, %v1995
    %v2006 = vadd.f32 %v2004, -0.28449672
    %v2007 = vadd.f32 %v2005, -0.28449672
    %v2008 = vmul.f32 %v2006, %v1993
    %v2009 = vmul.f32 %v2007, %v1995
    %v2010 = vadd.f32 %v2008, 0.2548296
    %v2011 = vadd.f32 %v2009, 0.2548296
    %v2012 = vmul.f32 %v2010, %v1993
    %v2013 = vmul.f32 %v2011, %v1995
    %v2014 = vsub.f32 0.0, %v1986
    %v2015 = vsub.f32 0.0, %v1987
    %v2016 = vmul.f32 %v2014, %v1986
    %v2017 = vmul.f32 %v2015, %v1987
    %v2018 = vmul.f32 %v2016, 1.442695
    %v2019 = vpow.pop %v2018
    %v2020 = vmul.f32 %v2017, 1.442695
    %v2021 = vpow.pop %v2020
    %v2022 = vmul.f32 %v2012, %v2019
    %v2023 = vmul.f32 %v2013, %v2021
    %v2024 = vsub.f32 1.0, %v2022
    %v2025 = vsub.f32 1.0, %v2023
    %v2026 = vmul.f32 %v1984, %v2024
    %v2027 = vmul.f32 %v1985, %v2025
    %v2028 = vadd.f32 %v2026, 1.0
    %v2029 = vadd.f32 %v2027, 1.0
    %v2030 = vmul.f32 %v1978, %v2028
    %v2031 = vmul.f32 %v1979, %v2029
    %v2032 = vpack.c.bf16 %v2031, %v2030
    %v2033 = vld [vmem:[%s9] sm:$0xf]
    %v2034 = vld [vmem:[%s9 + $0x4] sm:$0xf]
    %v2035 = vld [vmem:[%s9 + $0x8] sm:$0xf]
    %v2036 = vld [vmem:[%s9 + $0xc] sm:$0xf]
    %v2037 = vld [vmem:[%s9 + $0x10] sm:$0xf]
    %v2038 = vld [vmem:[%s9 + $0x14] sm:$0xf]
    %v2039 = vld [vmem:[%s9 + $0x18] sm:$0xf]
    %v2040 = vld [vmem:[%s9 + $0x1c] sm:$0xf]
    %v2041 = vld [vmem:[%s9 + $0x20] sm:$0xf]
    %v2042 = vld [vmem:[%s9 + $0x24] sm:$0xf]
    %v2043 = vld [vmem:[%s9 + $0x28] sm:$0xf]
    %v2044 = vld [vmem:[%s9 + $0x2c] sm:$0xf]
    %v2045 = vld [vmem:[%s9 + $0x30] sm:$0xf]
    %v2046 = vld [vmem:[%s9 + $0x34] sm:$0xf]
    %v2047 = vld [vmem:[%s9 + $0x38] sm:$0xf]
    %v2048 = vld [vmem:[%s9 + $0x3c] sm:$0xf]
    %v2049 = vlaneseq
    %v2050 = vshrl.u32 %v2049, 7
    %v2051 = vsub.s32 7, %v2050
    %v2052 = vrot.slane %v787, %v2051
    %v2069 = vunpack.c.l.b16 %v2033
    %v2070 = vunpack.c.l.b16 %v2034
    %v2071 = vunpack.c.l.b16 %v2035
    %v2072 = vunpack.c.l.b16 %v2036
    %v2073 = vunpack.c.l.b16 %v2037
    %v2074 = vunpack.c.l.b16 %v2038
    %v2075 = vunpack.c.l.b16 %v2039
    %v2076 = vunpack.c.l.b16 %v2040
    %v2077 = vunpack.c.l.b16 %v2041
    %v2078 = vunpack.c.l.b16 %v2042
    %v2079 = vunpack.c.l.b16 %v2043
    %v2080 = vunpack.c.l.b16 %v2044
    %v2081 = vunpack.c.l.b16 %v2045
    %v2082 = vunpack.c.l.b16 %v2046
    %v2083 = vunpack.c.l.b16 %v2047
    %v2084 = vunpack.c.l.b16 %v2048
    %v2085 = vpack.c.b16 %v2070, %v2069
    %v2086 = vpack.c.b16 %v2072, %v2071
    %v2087 = vpack.c.b16 %v2074, %v2073
    %v2088 = vpack.c.b16 %v2076, %v2075
    %v2089 = vpack.c.b16 %v2078, %v2077
    %v2090 = vpack.c.b16 %v2080, %v2079
    %v2091 = vpack.c.b16 %v2082, %v2081
    %v2092 = vpack.c.b16 %v2084, %v2083
    %2101 = vmatprep.subr.bf16.mxu0 0
    %2102 = vmatpush1.bf16.msra.mxu0 %v2092
    %2103 = vmatprep.subr.bf16.mxu0 0
    %2104 = vmatpush1.bf16.msra.mxu0 %v2091
    %2105 = vmatprep.subr.bf16.mxu0 0
    %2106 = vmatpush1.bf16.msra.mxu0 %v2090
    %2107 = vmatprep.subr.bf16.mxu0 0
    %2108 = vmatpush1.bf16.msra.mxu0 %v2089
    %2109 = vmatprep.subr.bf16.mxu0 0
    %2110 = vmatpush1.bf16.msra.mxu0 %v2088
    %2111 = vmatprep.subr.bf16.mxu0 0
    %2112 = vmatpush1.bf16.msra.mxu0 %v2087
    %2113 = vmatprep.subr.bf16.mxu0 0
    %2114 = vmatpush1.bf16.msra.mxu0 %v2086
    %2115 = vmatprep.subr.bf16.mxu0 0
    %2116 = vmatpush1.bf16.msra.mxu0 %v2085
    %2117 = vmatprep.subr.bf16.mxu0 0
    %2118 = vmatpush2.bf16.msra.mxu0 0
    %2119 = vmatprep.subr.bf16.mxu0 0
    %2120 = vmatpush2.bf16.msra.mxu0 0
    %2121 = vmatprep.subr.bf16.mxu0 0
    %2122 = vmatpush2.bf16.msra.mxu0 0
    %2123 = vmatprep.subr.bf16.mxu0 0
    %2124 = vmatpush2.bf16.msra.mxu0 0
    %2125 = vmatprep.subr.bf16.mxu0 0
    %2126 = vmatpush2.bf16.msra.mxu0 0
    %2127 = vmatprep.subr.bf16.mxu0 0
    %2128 = vmatpush2.bf16.msra.mxu0 0
    %2129 = vmatprep.subr.bf16.mxu0 0
    %2130 = vmatpush2.bf16.msra.mxu0 0
    %2131 = vmatprep.subr.bf16.mxu0 0
    %2132 = vmatpush2.bf16.msra.mxu0 0
    %2133 = vmatprep.mubr.bf16.mxu0 0
    %2134 = vmatmul.mubr.bf16.gmra.mxu0 %v2032
    %v2135 = vpop.f32.mrf.mxu0
    %v2136 = vadd.f32 %v2052, %v2135
    %v2137 = vpop.f32.mrf.mxu0
    %v2138 = vpop.f32.mrf.mxu0
    %v2139 = vadd.f32 %v2052, %v2138
    %v2140 = vpop.f32.mrf.mxu0
    %2141 = vdwg.mxu0
    %v2142 = vadd.f32 %v1873, %v2136
    %v2143 = vadd.f32 %v1874, %v2139
    %s2144 = scalar_lea.vmem %s10, 8
    %v2145 = vld [vmem:[%s2144] sm:$0xff]
    %v2146 = vsel %vm520, %v2142, 0.0
    %2147 = vadd.xlane.f32.xlu0 %v2146
    %v2148 = vpop.xlane.xlu0 %2147
    %v2149 = vsel %vm520, %v2143, 0.0
    %2150 = vadd.xlane.f32.xlu0 %v2149
    %v2151 = vpop.xlane.xlu0 %2150
    %v2152 = vmul.f32 %v2148, %v527
    %v2153 = vmul.f32 %v2151, %v527
    %v2154 = vsub.f32 %v2142, %v2152
    %v2155 = vsub.f32 %v2143, %v2153
    %v2156 = vmul.f32 %v2154, %v2154
    %v2157 = vmul.f32 %v2155, %v2155
    %v2158 = vsel %vm520, %v2156, 0.0
    %2159 = vadd.xlane.f32.xlu0 %v2158
    %v2160 = vpop.xlane.xlu0 %2159
    %v2161 = vsel %vm520, %v2157, 0.0
    %2162 = vadd.xlane.f32.xlu0 %v2161
    %v2163 = vpop.xlane.xlu0 %2162
    %v2164 = vmul.f32 %v2160, %v527
    %v2165 = vmul.f32 %v2163, %v527
    %v2166 = vadd.f32 %v2164, 1e-05
    %v2167 = vadd.f32 %v2165, 1e-05
    %v2168 = vrsqrt.pop %v2166
    %v2169 = vrsqrt.pop %v2167
    %v2170 = vmul.f32 %v2154, %v2168
    %v2171 = vmul.f32 %v2155, %v2169
    %v2172 = vlaneseq
    %v2173 = vshrl.u32 %v2172, 7
    %v2174 = vsub.s32 0, %v2173
    %v2175 = vrot.slane %v2145, %v2174
    %v2176 = vmul.f32 %v2170, %v2175
    %v2177 = vmul.f32 %v2171, %v2175
    %v2178 = vlaneseq
    %v2179 = vshrl.u32 %v2178, 7
    %v2180 = vsub.s32 1, %v2179
    %v2181 = vrot.slane %v2145, %v2180
    %v2182 = vadd.f32 %v2176, %v2181
    %v2183 = vadd.f32 %v2177, %v2181
    %v2184 = vpack.c.bf16 %v2183, %v2182
    %s2185 = scalar_lea.vmem %s6, 16
    %v2186 = vld [vmem:[%s2185] sm:$0xf]
    %v2187 = vld [vmem:[%s2185 + $0x4] sm:$0xf]
    %v2188 = vld [vmem:[%s2185 + $0x8] sm:$0xf]
    %v2189 = vld [vmem:[%s2185 + $0xc] sm:$0xf]
    %v2190 = vlaneseq
    %v2191 = vshrl.u32 %v2190, 7
    %v2192 = vsub.s32 2, %v2191
    %v2193 = vrot.slane %v2145, %v2192
    %v2198 = vunpack.c.l.b16 %v2186
    %v2199 = vunpack.c.l.b16 %v2187
    %v2200 = vunpack.c.l.b16 %v2188
    %v2201 = vunpack.c.l.b16 %v2189
    %v2202 = vpack.c.b16 %v2199, %v2198
    %v2203 = vpack.c.b16 %v2201, %v2200
    %v2207 = vsel %vm520, %v2184, 0
    %2209 = vmatprep.subr.bf16.mxu0 0
    %2210 = vmatpush1.bf16.msra.mxu0 0
    %2211 = vmatprep.subr.bf16.mxu0 0
    %2212 = vmatpush1.bf16.msra.mxu0 0
    %2213 = vmatprep.subr.bf16.mxu0 0
    %2214 = vmatpush1.bf16.msra.mxu0 0
    %2215 = vmatprep.subr.bf16.mxu0 0
    %2216 = vmatpush1.bf16.msra.mxu0 0
    %2217 = vmatprep.subr.bf16.mxu0 0
    %2218 = vmatpush1.bf16.msra.mxu0 0
    %2219 = vmatprep.subr.bf16.mxu0 0
    %2220 = vmatpush1.bf16.msra.mxu0 0
    %2221 = vmatprep.subr.bf16.mxu0 0
    %2222 = vmatpush1.bf16.msra.mxu0 %v2203
    %2223 = vmatprep.subr.bf16.mxu0 0
    %2224 = vmatpush1.bf16.msra.mxu0 %v2202
    %2225 = vmatprep.subr.bf16.mxu0 0
    %2226 = vmatpush2.bf16.msra.mxu0 0
    %2227 = vmatprep.subr.bf16.mxu0 0
    %2228 = vmatpush2.bf16.msra.mxu0 0
    %2229 = vmatprep.subr.bf16.mxu0 0
    %2230 = vmatpush2.bf16.msra.mxu0 0
    %2231 = vmatprep.subr.bf16.mxu0 0
    %2232 = vmatpush2.bf16.msra.mxu0 0
    %2233 = vmatprep.subr.bf16.mxu0 0
    %2234 = vmatpush2.bf16.msra.mxu0 0
    %2235 = vmatprep.subr.bf16.mxu0 0
    %2236 = vmatpush2.bf16.msra.mxu0 0
    %2237 = vmatprep.subr.bf16.mxu0 0
    %2238 = vmatpush2.bf16.msra.mxu0 0
    %2239 = vmatprep.subr.bf16.mxu0 0
    %2240 = vmatpush2.bf16.msra.mxu0 0
    %2241 = vmatprep.mubr.bf16.mxu0 0
    %2242 = vmatmul.mubr.bf16.gmra.mxu0 %v2207
    %v2243 = vpop.f32.mrf.mxu0
    %v2244 = vadd.f32 %v2193, %v2243
    %v2245 = vpop.f32.mrf.mxu0
    %v2246 = vpop.f32.mrf.mxu0
    %v2247 = vadd.f32 %v2193, %v2246
    %v2248 = vpop.f32.mrf.mxu0
    %2249 = vdwg.mxu0
    %v2250 = vpack.c.bf16 %v2244, %v2244
    %v2251 = vpack.c.bf16 %v2247, %v2247
    %2253 = vrot.lane.b32.xlu0 %v2250, 96
    %v2254 = vpop.permute.xlu0 %2253
    %v2256 = vsel %vm572, %v2250, 0
    %v2259 = vsel %vm572, %v2254, 0
    %2261 = vmatprep.subr.bf16.mxu0 0
    %2262 = vmatpush1.bf16.xpose.msra.mxu0 0
    %2263 = vmatprep.subr.bf16.mxu0 0
    %2264 = vmatpush1.bf16.xpose.msra.mxu0 0
    %2265 = vmatprep.subr.bf16.mxu0 0
    %2266 = vmatpush1.bf16.xpose.msra.mxu0 0
    %2267 = vmatprep.subr.bf16.mxu0 0
    %2268 = vmatpush1.bf16.xpose.msra.mxu0 0
    %2269 = vmatprep.subr.bf16.mxu0 0
    %2270 = vmatpush1.bf16.xpose.msra.mxu0 0
    %2271 = vmatprep.subr.bf16.mxu0 0
    %2272 = vmatpush1.bf16.xpose.msra.mxu0 0
    %2273 = vmatprep.subr.bf16.mxu0 0
    %2274 = vmatpush1.bf16.xpose.msra.mxu0 0
    %2275 = vmatprep.subr.bf16.mxu0 0
    %2276 = vmatpush1.bf16.xpose.msra.mxu0 %v2259
    %2277 = vmatprep.subr.bf16.mxu0 0
    %2278 = vmatpush2.bf16.xpose.msra.mxu0 0
    %2279 = vmatprep.subr.bf16.mxu0 0
    %2280 = vmatpush2.bf16.xpose.msra.mxu0 0
    %2281 = vmatprep.subr.bf16.mxu0 0
    %2282 = vmatpush2.bf16.xpose.msra.mxu0 0
    %2283 = vmatprep.subr.bf16.mxu0 0
    %2284 = vmatpush2.bf16.xpose.msra.mxu0 0
    %2285 = vmatprep.subr.bf16.mxu0 0
    %2286 = vmatpush2.bf16.xpose.msra.mxu0 0
    %2287 = vmatprep.subr.bf16.mxu0 0
    %2288 = vmatpush2.bf16.xpose.msra.mxu0 0
    %2289 = vmatprep.subr.bf16.mxu0 0
    %2290 = vmatpush2.bf16.xpose.msra.mxu0 0
    %2291 = vmatprep.subr.bf16.mxu0 0
    %2292 = vmatpush2.bf16.xpose.msra.mxu0 0
    %2293 = vmatprep.mubr.bf16.mxu0 0
    %2294 = vmatmul.mubr.bf16.gmra.mxu0 %v2256
    %v2295 = vpop.f32.mrf.mxu0
    %v2296 = vadd.f32 0.0, %v2295
    %v2297 = vpop.f32.mrf.mxu0
    %v2298 = vpop.f32.mrf.mxu0
    %v2299 = vpop.f32.mrf.mxu0
    %2300 = vdwg.mxu0
    %2302 = vrot.lane.b32.xlu0 %v2251, 96
    %v2303 = vpop.permute.xlu0 %2302
    %v2305 = vsel %vm572, %v2251, 0
    %v2308 = vsel %vm572, %v2303, 0
    %2310 = vmatprep.subr.bf16.mxu0 0
    %2311 = vmatpush1.bf16.xpose.msra.mxu0 0
    %2312 = vmatprep.subr.bf16.mxu0 0
    %2313 = vmatpush1.bf16.xpose.msra.mxu0 0
    %2314 = vmatprep.subr.bf16.mxu0 0
    %2315 = vmatpush1.bf16.xpose.msra.mxu0 0
    %2316 = vmatprep.subr.bf16.mxu0 0
    %2317 = vmatpush1.bf16.xpose.msra.mxu0 0
    %2318 = vmatprep.subr.bf16.mxu0 0
    %2319 = vmatpush1.bf16.xpose.msra.mxu0 0
    %2320 = vmatprep.subr.bf16.mxu0 0
    %2321 = vmatpush1.bf16.xpose.msra.mxu0 0
    %2322 = vmatprep.subr.bf16.mxu0 0
    %2323 = vmatpush1.bf16.xpose.msra.mxu0 0
    %2324 = vmatprep.subr.bf16.mxu0 0
    %2325 = vmatpush1.bf16.xpose.msra.mxu0 %v2308
    %2326 = vmatprep.subr.bf16.mxu0 0
    %2327 = vmatpush2.bf16.xpose.msra.mxu0 0
    %2328 = vmatprep.subr.bf16.mxu0 0
    %2329 = vmatpush2.bf16.xpose.msra.mxu0 0
    %2330 = vmatprep.subr.bf16.mxu0 0
    %2331 = vmatpush2.bf16.xpose.msra.mxu0 0
    %2332 = vmatprep.subr.bf16.mxu0 0
    %2333 = vmatpush2.bf16.xpose.msra.mxu0 0
    %2334 = vmatprep.subr.bf16.mxu0 0
    %2335 = vmatpush2.bf16.xpose.msra.mxu0 0
    %2336 = vmatprep.subr.bf16.mxu0 0
    %2337 = vmatpush2.bf16.xpose.msra.mxu0 0
    %2338 = vmatprep.subr.bf16.mxu0 0
    %2339 = vmatpush2.bf16.xpose.msra.mxu0 0
    %2340 = vmatprep.subr.bf16.mxu0 0
    %2341 = vmatpush2.bf16.xpose.msra.mxu0 0
    %2342 = vmatprep.mubr.bf16.mxu0 0
    %2343 = vmatmul.mubr.bf16.gmra.mxu0 %v2305
    %v2344 = vpop.f32.mrf.mxu0
    %v2345 = vadd.f32 0.0, %v2344
    %v2346 = vpop.f32.mrf.mxu0
    %v2347 = vpop.f32.mrf.mxu0
    %v2348 = vpop.f32.mrf.mxu0
    %2349 = vdwg.mxu0
    %v2350 = vsel %vm572, %v2296, -inf
    %2351 = vmax.xlane.f32.xlu0 %v2350
    %v2352 = vpop.xlane.xlu0 %2351
    %v2353 = vsel %vm572, %v2345, -inf
    %2354 = vmax.xlane.f32.xlu0 %v2353
    %v2355 = vpop.xlane.xlu0 %2354
    %v2356 = vsub.f32 %v2296, %v2352
    %v2357 = vsub.f32 %v2345, %v2355
    %v2358 = vmul.f32 %v2356, 1.442695
    %v2359 = vpow.pop %v2358
    %v2360 = vmul.f32 %v2357, 1.442695
    %v2361 = vpow.pop %v2360
    %v2362 = vsel %vm572, %v2359, 0.0
    %2363 = vadd.xlane.f32.xlu0 %v2362
    %v2364 = vpop.xlane.xlu0 %2363
    %v2365 = vsel %vm572, %v2361, 0.0
    %2366 = vadd.xlane.f32.xlu0 %v2365
    %v2367 = vpop.xlane.xlu0 %2366
    %v2368 = vrcp.pop %v2364
    %v2369 = vrcp.pop %v2367
    %v2370 = vmul.f32 %v2359, %v2368
    %v2371 = vmul.f32 %v2361, %v2369
    %v2372 = vpack.c.bf16 %v2370, %v2370
    %v2373 = vpack.c.bf16 %v2371, %v2371
    %2374 = vrot.lane.b32.xlu0 %v2250, 64
    %v2375 = vpop.permute.xlu0 %2374
    %v2377 = vsel %vm572, %v2372, 0
    %v2380 = vsel %vm576, %v2375, 0
    %2382 = vmatprep.subr.bf16.mxu0 0
    %2383 = vmatpush1.bf16.msra.mxu0 0
    %2384 = vmatprep.subr.bf16.mxu0 0
    %2385 = vmatpush1.bf16.msra.mxu0 0
    %2386 = vmatprep.subr.bf16.mxu0 0
    %2387 = vmatpush1.bf16.msra.mxu0 0
    %2388 = vmatprep.subr.bf16.mxu0 0
    %2389 = vmatpush1.bf16.msra.mxu0 0
    %2390 = vmatprep.subr.bf16.mxu0 0
    %2391 = vmatpush1.bf16.msra.mxu0 0
    %2392 = vmatprep.subr.bf16.mxu0 0
    %2393 = vmatpush1.bf16.msra.mxu0 0
    %2394 = vmatprep.subr.bf16.mxu0 0
    %2395 = vmatpush1.bf16.msra.mxu0 0
    %2396 = vmatprep.subr.bf16.mxu0 0
    %2397 = vmatpush1.bf16.msra.mxu0 %v2380
    %2398 = vmatprep.subr.bf16.mxu0 0
    %2399 = vmatpush2.bf16.msra.mxu0 0
    %2400 = vmatprep.subr.bf16.mxu0 0
    %2401 = vmatpush2.bf16.msra.mxu0 0
    %2402 = vmatprep.subr.bf16.mxu0 0
    %2403 = vmatpush2.bf16.msra.mxu0 0
    %2404 = vmatprep.subr.bf16.mxu0 0
    %2405 = vmatpush2.bf16.msra.mxu0 0
    %2406 = vmatprep.subr.bf16.mxu0 0
    %2407 = vmatpush2.bf16.msra.mxu0 0
    %2408 = vmatprep.subr.bf16.mxu0 0
    %2409 = vmatpush2.bf16.msra.mxu0 0
    %2410 = vmatprep.subr.bf16.mxu0 0
    %2411 = vmatpush2.bf16.msra.mxu0 0
    %2412 = vmatprep.subr.bf16.mxu0 0
    %2413 = vmatpush2.bf16.msra.mxu0 0
    %2414 = vmatprep.mubr.bf16.mxu0 0
    %2415 = vmatmul.mubr.bf16.gmra.mxu0 %v2377
    %v2416 = vpop.f32.mrf.mxu0
    %v2417 = vadd.f32 0.0, %v2416
    %v2418 = vpop.f32.mrf.mxu0
    %v2419 = vpop.f32.mrf.mxu0
    %v2420 = vpop.f32.mrf.mxu0
    %2421 = vdwg.mxu0
    %2422 = vrot.lane.b32.xlu0 %v2251, 64
    %v2423 = vpop.permute.xlu0 %2422
    %v2425 = vsel %vm572, %v2373, 0
    %v2428 = vsel %vm576, %v2423, 0
    %2430 = vmatprep.subr.bf16.mxu0 0
    %2431 = vmatpush1.bf16.msra.mxu0 0
    %2432 = vmatprep.subr.bf16.mxu0 0
    %2433 = vmatpush1.bf16.msra.mxu0 0
    %2434 = vmatprep.subr.bf16.mxu0 0
    %2435 = vmatpush1.bf16.msra.mxu0 0
    %2436 = vmatprep.subr.bf16.mxu0 0
    %2437 = vmatpush1.bf16.msra.mxu0 0
    %2438 = vmatprep.subr.bf16.mxu0 0
    %2439 = vmatpush1.bf16.msra.mxu0 0
    %2440 = vmatprep.subr.bf16.mxu0 0
    %2441 = vmatpush1.bf16.msra.mxu0 0
    %2442 = vmatprep.subr.bf16.mxu0 0
    %2443 = vmatpush1.bf16.msra.mxu0 0
    %2444 = vmatprep.subr.bf16.mxu0 0
    %2445 = vmatpush1.bf16.msra.mxu0 %v2428
    %2446 = vmatprep.subr.bf16.mxu0 0
    %2447 = vmatpush2.bf16.msra.mxu0 0
    %2448 = vmatprep.subr.bf16.mxu0 0
    %2449 = vmatpush2.bf16.msra.mxu0 0
    %2450 = vmatprep.subr.bf16.mxu0 0
    %2451 = vmatpush2.bf16.msra.mxu0 0
    %2452 = vmatprep.subr.bf16.mxu0 0
    %2453 = vmatpush2.bf16.msra.mxu0 0
    %2454 = vmatprep.subr.bf16.mxu0 0
    %2455 = vmatpush2.bf16.msra.mxu0 0
    %2456 = vmatprep.subr.bf16.mxu0 0
    %2457 = vmatpush2.bf16.msra.mxu0 0
    %2458 = vmatprep.subr.bf16.mxu0 0
    %2459 = vmatpush2.bf16.msra.mxu0 0
    %2460 = vmatprep.subr.bf16.mxu0 0
    %2461 = vmatpush2.bf16.msra.mxu0 0
    %2462 = vmatprep.mubr.bf16.mxu0 0
    %2463 = vmatmul.mubr.bf16.gmra.mxu0 %v2425
    %v2464 = vpop.f32.mrf.mxu0
    %v2465 = vadd.f32 0.0, %v2464
    %v2466 = vpop.f32.mrf.mxu0
    %v2467 = vpop.f32.mrf.mxu0
    %v2468 = vpop.f32.mrf.mxu0
    %2469 = vdwg.mxu0
    %2470 = vst.msk [vmem:[#allocation2] sm:$0xff] %vm572, %v2417
    %2471 = vst.msk [vmem:[#allocation2 + $0x8] sm:$0xff] %vm572, %v2465
    %2472 = vrot.lane.b32.xlu0 %v2250, 120
    %v2473 = vpop.permute.xlu0 %2472
    %2474 = vrot.lane.b32.xlu0 %v2250, 88
    %v2475 = vpop.permute.xlu0 %2474
    %v2477 = vsel %vm572, %v2473, 0
    %v2480 = vsel %vm572, %v2475, 0
    %2482 = vmatprep.subr.bf16.mxu0 0
    %2483 = vmatpush1.bf16.xpose.msra.mxu0 0
    %2484 = vmatprep.subr.bf16.mxu0 0
    %2485 = vmatpush1.bf16.xpose.msra.mxu0 0
    %2486 = vmatprep.subr.bf16.mxu0 0
    %2487 = vmatpush1.bf16.xpose.msra.mxu0 0
    %2488 = vmatprep.subr.bf16.mxu0 0
    %2489 = vmatpush1.bf16.xpose.msra.mxu0 0
    %2490 = vmatprep.subr.bf16.mxu0 0
    %2491 = vmatpush1.bf16.xpose.msra.mxu0 0
    %2492 = vmatprep.subr.bf16.mxu0 0
    %2493 = vmatpush1.bf16.xpose.msra.mxu0 0
    %2494 = vmatprep.subr.bf16.mxu0 0
    %2495 = vmatpush1.bf16.xpose.msra.mxu0 0
    %2496 = vmatprep.subr.bf16.mxu0 0
    %2497 = vmatpush1.bf16.xpose.msra.mxu0 %v2480
    %2498 = vmatprep.subr.bf16.mxu0 0
    %2499 = vmatpush2.bf16.xpose.msra.mxu0 0
    %2500 = vmatprep.subr.bf16.mxu0 0
    %2501 = vmatpush2.bf16.xpose.msra.mxu0 0
    %2502 = vmatprep.subr.bf16.mxu0 0
    %2503 = vmatpush2.bf16.xpose.msra.mxu0 0
    %2504 = vmatprep.subr.bf16.mxu0 0
    %2505 = vmatpush2.bf16.xpose.msra.mxu0 0
    %2506 = vmatprep.subr.bf16.mxu0 0
    %2507 = vmatpush2.bf16.xpose.msra.mxu0 0
    %2508 = vmatprep.subr.bf16.mxu0 0
    %2509 = vmatpush2.bf16.xpose.msra.mxu0 0
    %2510 = vmatprep.subr.bf16.mxu0 0
    %2511 = vmatpush2.bf16.xpose.msra.mxu0 0
    %2512 = vmatprep.subr.bf16.mxu0 0
    %2513 = vmatpush2.bf16.xpose.msra.mxu0 0
    %2514 = vmatprep.mubr.bf16.mxu0 0
    %2515 = vmatmul.mubr.bf16.gmra.mxu0 %v2477
    %v2516 = vpop.f32.mrf.mxu0
    %v2517 = vadd.f32 0.0, %v2516
    %v2518 = vpop.f32.mrf.mxu0
    %v2519 = vpop.f32.mrf.mxu0
    %v2520 = vpop.f32.mrf.mxu0
    %2521 = vdwg.mxu0
    %2522 = vrot.lane.b32.xlu0 %v2251, 120
    %v2523 = vpop.permute.xlu0 %2522
    %2524 = vrot.lane.b32.xlu0 %v2251, 88
    %v2525 = vpop.permute.xlu0 %2524
    %v2527 = vsel %vm572, %v2523, 0
    %v2530 = vsel %vm572, %v2525, 0
    %2532 = vmatprep.subr.bf16.mxu0 0
    %2533 = vmatpush1.bf16.xpose.msra.mxu0 0
    %2534 = vmatprep.subr.bf16.mxu0 0
    %2535 = vmatpush1.bf16.xpose.msra.mxu0 0
    %2536 = vmatprep.subr.bf16.mxu0 0
    %2537 = vmatpush1.bf16.xpose.msra.mxu0 0
    %2538 = vmatprep.subr.bf16.mxu0 0
    %2539 = vmatpush1.bf16.xpose.msra.mxu0 0
    %2540 = vmatprep.subr.bf16.mxu0 0
    %2541 = vmatpush1.bf16.xpose.msra.mxu0 0
    %2542 = vmatprep.subr.bf16.mxu0 0
    %2543 = vmatpush1.bf16.xpose.msra.mxu0 0
    %2544 = vmatprep.subr.bf16.mxu0 0
    %2545 = vmatpush1.bf16.xpose.msra.mxu0 0
    %2546 = vmatprep.subr.bf16.mxu0 0
    %2547 = vmatpush1.bf16.xpose.msra.mxu0 %v2530
    %2548 = vmatprep.subr.bf16.mxu0 0
    %2549 = vmatpush2.bf16.xpose.msra.mxu0 0
    %2550 = vmatprep.subr.bf16.mxu0 0
    %2551 = vmatpush2.bf16.xpose.msra.mxu0 0
    %2552 = vmatprep.subr.bf16.mxu0 0
    %2553 = vmatpush2.bf16.xpose.msra.mxu0 0
    %2554 = vmatprep.subr.bf16.mxu0 0
    %2555 = vmatpush2.bf16.xpose.msra.mxu0 0
    %2556 = vmatprep.subr.bf16.mxu0 0
    %2557 = vmatpush2.bf16.xpose.msra.mxu0 0
    %2558 = vmatprep.subr.bf16.mxu0 0
    %2559 = vmatpush2.bf16.xpose.msra.mxu0 0
    %2560 = vmatprep.subr.bf16.mxu0 0
    %2561 = vmatpush2.bf16.xpose.msra.mxu0 0
    %2562 = vmatprep.subr.bf16.mxu0 0
    %2563 = vmatpush2.bf16.xpose.msra.mxu0 0
    %2564 = vmatprep.mubr.bf16.mxu0 0
    %2565 = vmatmul.mubr.bf16.gmra.mxu0 %v2527
    %v2566 = vpop.f32.mrf.mxu0
    %v2567 = vadd.f32 0.0, %v2566
    %v2568 = vpop.f32.mrf.mxu0
    %v2569 = vpop.f32.mrf.mxu0
    %v2570 = vpop.f32.mrf.mxu0
    %2571 = vdwg.mxu0
    %v2572 = vsel %vm572, %v2517, -inf
    %2573 = vmax.xlane.f32.xlu0 %v2572
    %v2574 = vpop.xlane.xlu0 %2573
    %v2575 = vsel %vm572, %v2567, -inf
    %2576 = vmax.xlane.f32.xlu0 %v2575
    %v2577 = vpop.xlane.xlu0 %2576
    %v2578 = vsub.f32 %v2517, %v2574
    %v2579 = vsub.f32 %v2567, %v2577
    %v2580 = vmul.f32 %v2578, 1.442695
    %v2581 = vpow.pop %v2580
    %v2582 = vmul.f32 %v2579, 1.442695
    %v2583 = vpow.pop %v2582
    %v2584 = vsel %vm572, %v2581, 0.0
    %2585 = vadd.xlane.f32.xlu0 %v2584
    %v2586 = vpop.xlane.xlu0 %2585
    %v2587 = vsel %vm572, %v2583, 0.0
    %2588 = vadd.xlane.f32.xlu0 %v2587
    %v2589 = vpop.xlane.xlu0 %2588
    %v2590 = vrcp.pop %v2586
    %v2591 = vrcp.pop %v2589
    %v2592 = vmul.f32 %v2581, %v2590
    %v2593 = vmul.f32 %v2583, %v2591
    %v2594 = vpack.c.bf16 %v2592, %v2592
    %v2595 = vpack.c.bf16 %v2593, %v2593
    %2596 = vrot.lane.b32.xlu0 %v2250, 56
    %v2597 = vpop.permute.xlu0 %2596
    %v2599 = vsel %vm572, %v2594, 0
    %v2602 = vsel %vm576, %v2597, 0
    %2604 = vmatprep.subr.bf16.mxu0 0
    %2605 = vmatpush1.bf16.msra.mxu0 0
    %2606 = vmatprep.subr.bf16.mxu0 0
    %2607 = vmatpush1.bf16.msra.mxu0 0
    %2608 = vmatprep.subr.bf16.mxu0 0
    %2609 = vmatpush1.bf16.msra.mxu0 0
    %2610 = vmatprep.subr.bf16.mxu0 0
    %2611 = vmatpush1.bf16.msra.mxu0 0
    %2612 = vmatprep.subr.bf16.mxu0 0
    %2613 = vmatpush1.bf16.msra.mxu0 0
    %2614 = vmatprep.subr.bf16.mxu0 0
    %2615 = vmatpush1.bf16.msra.mxu0 0
    %2616 = vmatprep.subr.bf16.mxu0 0
    %2617 = vmatpush1.bf16.msra.mxu0 0
    %2618 = vmatprep.subr.bf16.mxu0 0
    %2619 = vmatpush1.bf16.msra.mxu0 %v2602
    %2620 = vmatprep.subr.bf16.mxu0 0
    %2621 = vmatpush2.bf16.msra.mxu0 0
    %2622 = vmatprep.subr.bf16.mxu0 0
    %2623 = vmatpush2.bf16.msra.mxu0 0
    %2624 = vmatprep.subr.bf16.mxu0 0
    %2625 = vmatpush2.bf16.msra.mxu0 0
    %2626 = vmatprep.subr.bf16.mxu0 0
    %2627 = vmatpush2.bf16.msra.mxu0 0
    %2628 = vmatprep.subr.bf16.mxu0 0
    %2629 = vmatpush2.bf16.msra.mxu0 0
    %2630 = vmatprep.subr.bf16.mxu0 0
    %2631 = vmatpush2.bf16.msra.mxu0 0
    %2632 = vmatprep.subr.bf16.mxu0 0
    %2633 = vmatpush2.bf16.msra.mxu0 0
    %2634 = vmatprep.subr.bf16.mxu0 0
    %2635 = vmatpush2.bf16.msra.mxu0 0
    %2636 = vmatprep.mubr.bf16.mxu0 0
    %2637 = vmatmul.mubr.bf16.gmra.mxu0 %v2599
    %v2638 = vpop.f32.mrf.mxu0
    %v2639 = vadd.f32 0.0, %v2638
    %v2640 = vpop.f32.mrf.mxu0
    %v2641 = vpop.f32.mrf.mxu0
    %v2642 = vpop.f32.mrf.mxu0
    %2643 = vdwg.mxu0
    %2644 = vrot.lane.b32.xlu0 %v2251, 56
    %v2645 = vpop.permute.xlu0 %2644
    %v2647 = vsel %vm572, %v2595, 0
    %v2650 = vsel %vm576, %v2645, 0
    %2652 = vmatprep.subr.bf16.mxu0 0
    %2653 = vmatpush1.bf16.msra.mxu0 0
    %2654 = vmatprep.subr.bf16.mxu0 0
    %2655 = vmatpush1.bf16.msra.mxu0 0
    %2656 = vmatprep.subr.bf16.mxu0 0
    %2657 = vmatpush1.bf16.msra.mxu0 0
    %2658 = vmatprep.subr.bf16.mxu0 0
    %2659 = vmatpush1.bf16.msra.mxu0 0
    %2660 = vmatprep.subr.bf16.mxu0 0
    %2661 = vmatpush1.bf16.msra.mxu0 0
    %2662 = vmatprep.subr.bf16.mxu0 0
    %2663 = vmatpush1.bf16.msra.mxu0 0
    %2664 = vmatprep.subr.bf16.mxu0 0
    %2665 = vmatpush1.bf16.msra.mxu0 0
    %2666 = vmatprep.subr.bf16.mxu0 0
    %2667 = vmatpush1.bf16.msra.mxu0 %v2650
    %2668 = vmatprep.subr.bf16.mxu0 0
    %2669 = vmatpush2.bf16.msra.mxu0 0
    %2670 = vmatprep.subr.bf16.mxu0 0
    %2671 = vmatpush2.bf16.msra.mxu0 0
    %2672 = vmatprep.subr.bf16.mxu0 0
    %2673 = vmatpush2.bf16.msra.mxu0 0
    %2674 = vmatprep.subr.bf16.mxu0 0
    %2675 = vmatpush2.bf16.msra.mxu0 0
    %2676 = vmatprep.subr.bf16.mxu0 0
    %2677 = vmatpush2.bf16.msra.mxu0 0
    %2678 = vmatprep.subr.bf16.mxu0 0
    %2679 = vmatpush2.bf16.msra.mxu0 0
    %2680 = vmatprep.subr.bf16.mxu0 0
    %2681 = vmatpush2.bf16.msra.mxu0 0
    %2682 = vmatprep.subr.bf16.mxu0 0
    %2683 = vmatpush2.bf16.msra.mxu0 0
    %2684 = vmatprep.mubr.bf16.mxu0 0
    %2685 = vmatmul.mubr.bf16.gmra.mxu0 %v2647
    %v2686 = vpop.f32.mrf.mxu0
    %v2687 = vadd.f32 0.0, %v2686
    %v2688 = vpop.f32.mrf.mxu0
    %v2689 = vpop.f32.mrf.mxu0
    %v2690 = vpop.f32.mrf.mxu0
    %2691 = vdwg.mxu0
    %2694 = vrot.lane.b32.xlu0 %v2639, 8
    %v2695 = vpop.permute.xlu0 %2694
    %2696 = vrot.lane.b32.xlu0 %v2687, 8
    %v2697 = vpop.permute.xlu0 %2696
    %2700 = vst.msk [vmem:[#allocation2] sm:$0xff] %vm1341, %v2695
    %2701 = vst.msk [vmem:[#allocation2 + $0x8] sm:$0xff] %vm1341, %v2697
    %2702 = vrot.lane.b32.xlu0 %v2250, 112
    %v2703 = vpop.permute.xlu0 %2702
    %2704 = vrot.lane.b32.xlu0 %v2250, 80
    %v2705 = vpop.permute.xlu0 %2704
    %v2707 = vsel %vm572, %v2703, 0
    %v2710 = vsel %vm572, %v2705, 0
    %2712 = vmatprep.subr.bf16.mxu0 0
    %2713 = vmatpush1.bf16.xpose.msra.mxu0 0
    %2714 = vmatprep.subr.bf16.mxu0 0
    %2715 = vmatpush1.bf16.xpose.msra.mxu0 0
    %2716 = vmatprep.subr.bf16.mxu0 0
    %2717 = vmatpush1.bf16.xpose.msra.mxu0 0
    %2718 = vmatprep.subr.bf16.mxu0 0
    %2719 = vmatpush1.bf16.xpose.msra.mxu0 0
    %2720 = vmatprep.subr.bf16.mxu0 0
    %2721 = vmatpush1.bf16.xpose.msra.mxu0 0
    %2722 = vmatprep.subr.bf16.mxu0 0
    %2723 = vmatpush1.bf16.xpose.msra.mxu0 0
    %2724 = vmatprep.subr.bf16.mxu0 0
    %2725 = vmatpush1.bf16.xpose.msra.mxu0 0
    %2726 = vmatprep.subr.bf16.mxu0 0
    %2727 = vmatpush1.bf16.xpose.msra.mxu0 %v2710
    %2728 = vmatprep.subr.bf16.mxu0 0
    %2729 = vmatpush2.bf16.xpose.msra.mxu0 0
    %2730 = vmatprep.subr.bf16.mxu0 0
    %2731 = vmatpush2.bf16.xpose.msra.mxu0 0
    %2732 = vmatprep.subr.bf16.mxu0 0
    %2733 = vmatpush2.bf16.xpose.msra.mxu0 0
    %2734 = vmatprep.subr.bf16.mxu0 0
    %2735 = vmatpush2.bf16.xpose.msra.mxu0 0
    %2736 = vmatprep.subr.bf16.mxu0 0
    %2737 = vmatpush2.bf16.xpose.msra.mxu0 0
    %2738 = vmatprep.subr.bf16.mxu0 0
    %2739 = vmatpush2.bf16.xpose.msra.mxu0 0
    %2740 = vmatprep.subr.bf16.mxu0 0
    %2741 = vmatpush2.bf16.xpose.msra.mxu0 0
    %2742 = vmatprep.subr.bf16.mxu0 0
    %2743 = vmatpush2.bf16.xpose.msra.mxu0 0
    %2744 = vmatprep.mubr.bf16.mxu0 0
    %2745 = vmatmul.mubr.bf16.gmra.mxu0 %v2707
    %v2746 = vpop.f32.mrf.mxu0
    %v2747 = vadd.f32 0.0, %v2746
    %v2748 = vpop.f32.mrf.mxu0
    %v2749 = vpop.f32.mrf.mxu0
    %v2750 = vpop.f32.mrf.mxu0
    %2751 = vdwg.mxu0
    %2752 = vrot.lane.b32.xlu0 %v2251, 112
    %v2753 = vpop.permute.xlu0 %2752
    %2754 = vrot.lane.b32.xlu0 %v2251, 80
    %v2755 = vpop.permute.xlu0 %2754
    %v2757 = vsel %vm572, %v2753, 0
    %v2760 = vsel %vm572, %v2755, 0
    %2762 = vmatprep.subr.bf16.mxu0 0
    %2763 = vmatpush1.bf16.xpose.msra.mxu0 0
    %2764 = vmatprep.subr.bf16.mxu0 0
    %2765 = vmatpush1.bf16.xpose.msra.mxu0 0
    %2766 = vmatprep.subr.bf16.mxu0 0
    %2767 = vmatpush1.bf16.xpose.msra.mxu0 0
    %2768 = vmatprep.subr.bf16.mxu0 0
    %2769 = vmatpush1.bf16.xpose.msra.mxu0 0
    %2770 = vmatprep.subr.bf16.mxu0 0
    %2771 = vmatpush1.bf16.xpose.msra.mxu0 0
    %2772 = vmatprep.subr.bf16.mxu0 0
    %2773 = vmatpush1.bf16.xpose.msra.mxu0 0
    %2774 = vmatprep.subr.bf16.mxu0 0
    %2775 = vmatpush1.bf16.xpose.msra.mxu0 0
    %2776 = vmatprep.subr.bf16.mxu0 0
    %2777 = vmatpush1.bf16.xpose.msra.mxu0 %v2760
    %2778 = vmatprep.subr.bf16.mxu0 0
    %2779 = vmatpush2.bf16.xpose.msra.mxu0 0
    %2780 = vmatprep.subr.bf16.mxu0 0
    %2781 = vmatpush2.bf16.xpose.msra.mxu0 0
    %2782 = vmatprep.subr.bf16.mxu0 0
    %2783 = vmatpush2.bf16.xpose.msra.mxu0 0
    %2784 = vmatprep.subr.bf16.mxu0 0
    %2785 = vmatpush2.bf16.xpose.msra.mxu0 0
    %2786 = vmatprep.subr.bf16.mxu0 0
    %2787 = vmatpush2.bf16.xpose.msra.mxu0 0
    %2788 = vmatprep.subr.bf16.mxu0 0
    %2789 = vmatpush2.bf16.xpose.msra.mxu0 0
    %2790 = vmatprep.subr.bf16.mxu0 0
    %2791 = vmatpush2.bf16.xpose.msra.mxu0 0
    %2792 = vmatprep.subr.bf16.mxu0 0
    %2793 = vmatpush2.bf16.xpose.msra.mxu0 0
    %2794 = vmatprep.mubr.bf16.mxu0 0
    %2795 = vmatmul.mubr.bf16.gmra.mxu0 %v2757
    %v2796 = vpop.f32.mrf.mxu0
    %v2797 = vadd.f32 0.0, %v2796
    %v2798 = vpop.f32.mrf.mxu0
    %v2799 = vpop.f32.mrf.mxu0
    %v2800 = vpop.f32.mrf.mxu0
    %2801 = vdwg.mxu0
    %v2802 = vsel %vm572, %v2747, -inf
    %2803 = vmax.xlane.f32.xlu0 %v2802
    %v2804 = vpop.xlane.xlu0 %2803
    %v2805 = vsel %vm572, %v2797, -inf
    %2806 = vmax.xlane.f32.xlu0 %v2805
    %v2807 = vpop.xlane.xlu0 %2806
    %v2808 = vsub.f32 %v2747, %v2804
    %v2809 = vsub.f32 %v2797, %v2807
    %v2810 = vmul.f32 %v2808, 1.442695
    %v2811 = vpow.pop %v2810
    %v2812 = vmul.f32 %v2809, 1.442695
    %v2813 = vpow.pop %v2812
    %v2814 = vsel %vm572, %v2811, 0.0
    %2815 = vadd.xlane.f32.xlu0 %v2814
    %v2816 = vpop.xlane.xlu0 %2815
    %v2817 = vsel %vm572, %v2813, 0.0
    %2818 = vadd.xlane.f32.xlu0 %v2817
    %v2819 = vpop.xlane.xlu0 %2818
    %v2820 = vrcp.pop %v2816
    %v2821 = vrcp.pop %v2819
    %v2822 = vmul.f32 %v2811, %v2820
    %v2823 = vmul.f32 %v2813, %v2821
    %v2824 = vpack.c.bf16 %v2822, %v2822
    %v2825 = vpack.c.bf16 %v2823, %v2823
    %2826 = vrot.lane.b32.xlu0 %v2250, 48
    %v2827 = vpop.permute.xlu0 %2826
    %v2829 = vsel %vm572, %v2824, 0
    %v2832 = vsel %vm576, %v2827, 0
    %2834 = vmatprep.subr.bf16.mxu0 0
    %2835 = vmatpush1.bf16.msra.mxu0 0
    %2836 = vmatprep.subr.bf16.mxu0 0
    %2837 = vmatpush1.bf16.msra.mxu0 0
    %2838 = vmatprep.subr.bf16.mxu0 0
    %2839 = vmatpush1.bf16.msra.mxu0 0
    %2840 = vmatprep.subr.bf16.mxu0 0
    %2841 = vmatpush1.bf16.msra.mxu0 0
    %2842 = vmatprep.subr.bf16.mxu0 0
    %2843 = vmatpush1.bf16.msra.mxu0 0
    %2844 = vmatprep.subr.bf16.mxu0 0
    %2845 = vmatpush1.bf16.msra.mxu0 0
    %2846 = vmatprep.subr.bf16.mxu0 0
    %2847 = vmatpush1.bf16.msra.mxu0 0
    %2848 = vmatprep.subr.bf16.mxu0 0
    %2849 = vmatpush1.bf16.msra.mxu0 %v2832
    %2850 = vmatprep.subr.bf16.mxu0 0
    %2851 = vmatpush2.bf16.msra.mxu0 0
    %2852 = vmatprep.subr.bf16.mxu0 0
    %2853 = vmatpush2.bf16.msra.mxu0 0
    %2854 = vmatprep.subr.bf16.mxu0 0
    %2855 = vmatpush2.bf16.msra.mxu0 0
    %2856 = vmatprep.subr.bf16.mxu0 0
    %2857 = vmatpush2.bf16.msra.mxu0 0
    %2858 = vmatprep.subr.bf16.mxu0 0
    %2859 = vmatpush2.bf16.msra.mxu0 0
    %2860 = vmatprep.subr.bf16.mxu0 0
    %2861 = vmatpush2.bf16.msra.mxu0 0
    %2862 = vmatprep.subr.bf16.mxu0 0
    %2863 = vmatpush2.bf16.msra.mxu0 0
    %2864 = vmatprep.subr.bf16.mxu0 0
    %2865 = vmatpush2.bf16.msra.mxu0 0
    %2866 = vmatprep.mubr.bf16.mxu0 0
    %2867 = vmatmul.mubr.bf16.gmra.mxu0 %v2829
    %v2868 = vpop.f32.mrf.mxu0
    %v2869 = vadd.f32 0.0, %v2868
    %v2870 = vpop.f32.mrf.mxu0
    %v2871 = vpop.f32.mrf.mxu0
    %v2872 = vpop.f32.mrf.mxu0
    %2873 = vdwg.mxu0
    %2874 = vrot.lane.b32.xlu0 %v2251, 48
    %v2875 = vpop.permute.xlu0 %2874
    %v2877 = vsel %vm572, %v2825, 0
    %v2880 = vsel %vm576, %v2875, 0
    %2882 = vmatprep.subr.bf16.mxu0 0
    %2883 = vmatpush1.bf16.msra.mxu0 0
    %2884 = vmatprep.subr.bf16.mxu0 0
    %2885 = vmatpush1.bf16.msra.mxu0 0
    %2886 = vmatprep.subr.bf16.mxu0 0
    %2887 = vmatpush1.bf16.msra.mxu0 0
    %2888 = vmatprep.subr.bf16.mxu0 0
    %2889 = vmatpush1.bf16.msra.mxu0 0
    %2890 = vmatprep.subr.bf16.mxu0 0
    %2891 = vmatpush1.bf16.msra.mxu0 0
    %2892 = vmatprep.subr.bf16.mxu0 0
    %2893 = vmatpush1.bf16.msra.mxu0 0
    %2894 = vmatprep.subr.bf16.mxu0 0
    %2895 = vmatpush1.bf16.msra.mxu0 0
    %2896 = vmatprep.subr.bf16.mxu0 0
    %2897 = vmatpush1.bf16.msra.mxu0 %v2880
    %2898 = vmatprep.subr.bf16.mxu0 0
    %2899 = vmatpush2.bf16.msra.mxu0 0
    %2900 = vmatprep.subr.bf16.mxu0 0
    %2901 = vmatpush2.bf16.msra.mxu0 0
    %2902 = vmatprep.subr.bf16.mxu0 0
    %2903 = vmatpush2.bf16.msra.mxu0 0
    %2904 = vmatprep.subr.bf16.mxu0 0
    %2905 = vmatpush2.bf16.msra.mxu0 0
    %2906 = vmatprep.subr.bf16.mxu0 0
    %2907 = vmatpush2.bf16.msra.mxu0 0
    %2908 = vmatprep.subr.bf16.mxu0 0
    %2909 = vmatpush2.bf16.msra.mxu0 0
    %2910 = vmatprep.subr.bf16.mxu0 0
    %2911 = vmatpush2.bf16.msra.mxu0 0
    %2912 = vmatprep.subr.bf16.mxu0 0
    %2913 = vmatpush2.bf16.msra.mxu0 0
    %2914 = vmatprep.mubr.bf16.mxu0 0
    %2915 = vmatmul.mubr.bf16.gmra.mxu0 %v2877
    %v2916 = vpop.f32.mrf.mxu0
    %v2917 = vadd.f32 0.0, %v2916
    %v2918 = vpop.f32.mrf.mxu0
    %v2919 = vpop.f32.mrf.mxu0
    %v2920 = vpop.f32.mrf.mxu0
    %2921 = vdwg.mxu0
    %2924 = vrot.lane.b32.xlu0 %v2869, 16
    %v2925 = vpop.permute.xlu0 %2924
    %2926 = vrot.lane.b32.xlu0 %v2917, 16
    %v2927 = vpop.permute.xlu0 %2926
    %2930 = vst.msk [vmem:[#allocation2] sm:$0xff] %vm1572, %v2925
    %2931 = vst.msk [vmem:[#allocation2 + $0x8] sm:$0xff] %vm1572, %v2927
    %2932 = vrot.lane.b32.xlu0 %v2250, 104
    %v2933 = vpop.permute.xlu0 %2932
    %2934 = vrot.lane.b32.xlu0 %v2250, 72
    %v2935 = vpop.permute.xlu0 %2934
    %v2937 = vsel %vm572, %v2933, 0
    %v2940 = vsel %vm572, %v2935, 0
    %2942 = vmatprep.subr.bf16.mxu0 0
    %2943 = vmatpush1.bf16.xpose.msra.mxu0 0
    %2944 = vmatprep.subr.bf16.mxu0 0
    %2945 = vmatpush1.bf16.xpose.msra.mxu0 0
    %2946 = vmatprep.subr.bf16.mxu0 0
    %2947 = vmatpush1.bf16.xpose.msra.mxu0 0
    %2948 = vmatprep.subr.bf16.mxu0 0
    %2949 = vmatpush1.bf16.xpose.msra.mxu0 0
    %2950 = vmatprep.subr.bf16.mxu0 0
    %2951 = vmatpush1.bf16.xpose.msra.mxu0 0
    %2952 = vmatprep.subr.bf16.mxu0 0
    %2953 = vmatpush1.bf16.xpose.msra.mxu0 0
    %2954 = vmatprep.subr.bf16.mxu0 0
    %2955 = vmatpush1.bf16.xpose.msra.mxu0 0
    %2956 = vmatprep.subr.bf16.mxu0 0
    %2957 = vmatpush1.bf16.xpose.msra.mxu0 %v2940
    %2958 = vmatprep.subr.bf16.mxu0 0
    %2959 = vmatpush2.bf16.xpose.msra.mxu0 0
    %2960 = vmatprep.subr.bf16.mxu0 0
    %2961 = vmatpush2.bf16.xpose.msra.mxu0 0
    %2962 = vmatprep.subr.bf16.mxu0 0
    %2963 = vmatpush2.bf16.xpose.msra.mxu0 0
    %2964 = vmatprep.subr.bf16.mxu0 0
    %2965 = vmatpush2.bf16.xpose.msra.mxu0 0
    %2966 = vmatprep.subr.bf16.mxu0 0
    %2967 = vmatpush2.bf16.xpose.msra.mxu0 0
    %2968 = vmatprep.subr.bf16.mxu0 0
    %2969 = vmatpush2.bf16.xpose.msra.mxu0 0
    %2970 = vmatprep.subr.bf16.mxu0 0
    %2971 = vmatpush2.bf16.xpose.msra.mxu0 0
    %2972 = vmatprep.subr.bf16.mxu0 0
    %2973 = vmatpush2.bf16.xpose.msra.mxu0 0
    %2974 = vmatprep.mubr.bf16.mxu0 0
    %2975 = vmatmul.mubr.bf16.gmra.mxu0 %v2937
    %v2976 = vpop.f32.mrf.mxu0
    %v2977 = vadd.f32 0.0, %v2976
    %v2978 = vpop.f32.mrf.mxu0
    %v2979 = vpop.f32.mrf.mxu0
    %v2980 = vpop.f32.mrf.mxu0
    %2981 = vdwg.mxu0
    %2982 = vrot.lane.b32.xlu0 %v2251, 104
    %v2983 = vpop.permute.xlu0 %2982
    %2984 = vrot.lane.b32.xlu0 %v2251, 72
    %v2985 = vpop.permute.xlu0 %2984
    %v2987 = vsel %vm572, %v2983, 0
    %v2990 = vsel %vm572, %v2985, 0
    %2992 = vmatprep.subr.bf16.mxu0 0
    %2993 = vmatpush1.bf16.xpose.msra.mxu0 0
    %2994 = vmatprep.subr.bf16.mxu0 0
    %2995 = vmatpush1.bf16.xpose.msra.mxu0 0
    %2996 = vmatprep.subr.bf16.mxu0 0
    %2997 = vmatpush1.bf16.xpose.msra.mxu0 0
    %2998 = vmatprep.subr.bf16.mxu0 0
    %2999 = vmatpush1.bf16.xpose.msra.mxu0 0
    %3000 = vmatprep.subr.bf16.mxu0 0
    %3001 = vmatpush1.bf16.xpose.msra.mxu0 0
    %3002 = vmatprep.subr.bf16.mxu0 0
    %3003 = vmatpush1.bf16.xpose.msra.mxu0 0
    %3004 = vmatprep.subr.bf16.mxu0 0
    %3005 = vmatpush1.bf16.xpose.msra.mxu0 0
    %3006 = vmatprep.subr.bf16.mxu0 0
    %3007 = vmatpush1.bf16.xpose.msra.mxu0 %v2990
    %3008 = vmatprep.subr.bf16.mxu0 0
    %3009 = vmatpush2.bf16.xpose.msra.mxu0 0
    %3010 = vmatprep.subr.bf16.mxu0 0
    %3011 = vmatpush2.bf16.xpose.msra.mxu0 0
    %3012 = vmatprep.subr.bf16.mxu0 0
    %3013 = vmatpush2.bf16.xpose.msra.mxu0 0
    %3014 = vmatprep.subr.bf16.mxu0 0
    %3015 = vmatpush2.bf16.xpose.msra.mxu0 0
    %3016 = vmatprep.subr.bf16.mxu0 0
    %3017 = vmatpush2.bf16.xpose.msra.mxu0 0
    %3018 = vmatprep.subr.bf16.mxu0 0
    %3019 = vmatpush2.bf16.xpose.msra.mxu0 0
    %3020 = vmatprep.subr.bf16.mxu0 0
    %3021 = vmatpush2.bf16.xpose.msra.mxu0 0
    %3022 = vmatprep.subr.bf16.mxu0 0
    %3023 = vmatpush2.bf16.xpose.msra.mxu0 0
    %3024 = vmatprep.mubr.bf16.mxu0 0
    %3025 = vmatmul.mubr.bf16.gmra.mxu0 %v2987
    %v3026 = vpop.f32.mrf.mxu0
    %v3027 = vadd.f32 0.0, %v3026
    %v3028 = vpop.f32.mrf.mxu0
    %v3029 = vpop.f32.mrf.mxu0
    %v3030 = vpop.f32.mrf.mxu0
    %3031 = vdwg.mxu0
    %v3032 = vsel %vm572, %v2977, -inf
    %3033 = vmax.xlane.f32.xlu0 %v3032
    %v3034 = vpop.xlane.xlu0 %3033
    %v3035 = vsel %vm572, %v3027, -inf
    %3036 = vmax.xlane.f32.xlu0 %v3035
    %v3037 = vpop.xlane.xlu0 %3036
    %v3038 = vsub.f32 %v2977, %v3034
    %v3039 = vsub.f32 %v3027, %v3037
    %v3040 = vmul.f32 %v3038, 1.442695
    %v3041 = vpow.pop %v3040
    %v3042 = vmul.f32 %v3039, 1.442695
    %v3043 = vpow.pop %v3042
    %v3044 = vsel %vm572, %v3041, 0.0
    %3045 = vadd.xlane.f32.xlu0 %v3044
    %v3046 = vpop.xlane.xlu0 %3045
    %v3047 = vsel %vm572, %v3043, 0.0
    %3048 = vadd.xlane.f32.xlu0 %v3047
    %v3049 = vpop.xlane.xlu0 %3048
    %v3050 = vrcp.pop %v3046
    %v3051 = vrcp.pop %v3049
    %v3052 = vmul.f32 %v3041, %v3050
    %v3053 = vmul.f32 %v3043, %v3051
    %v3054 = vpack.c.bf16 %v3052, %v3052
    %v3055 = vpack.c.bf16 %v3053, %v3053
    %3056 = vrot.lane.b32.xlu0 %v2250, 40
    %v3057 = vpop.permute.xlu0 %3056
    %v3059 = vsel %vm572, %v3054, 0
    %v3062 = vsel %vm576, %v3057, 0
    %3064 = vmatprep.subr.bf16.mxu0 0
    %3065 = vmatpush1.bf16.msra.mxu0 0
    %3066 = vmatprep.subr.bf16.mxu0 0
    %3067 = vmatpush1.bf16.msra.mxu0 0
    %3068 = vmatprep.subr.bf16.mxu0 0
    %3069 = vmatpush1.bf16.msra.mxu0 0
    %3070 = vmatprep.subr.bf16.mxu0 0
    %3071 = vmatpush1.bf16.msra.mxu0 0
    %3072 = vmatprep.subr.bf16.mxu0 0
    %3073 = vmatpush1.bf16.msra.mxu0 0
    %3074 = vmatprep.subr.bf16.mxu0 0
    %3075 = vmatpush1.bf16.msra.mxu0 0
    %3076 = vmatprep.subr.bf16.mxu0 0
    %3077 = vmatpush1.bf16.msra.mxu0 0
    %3078 = vmatprep.subr.bf16.mxu0 0
    %3079 = vmatpush1.bf16.msra.mxu0 %v3062
    %3080 = vmatprep.subr.bf16.mxu0 0
    %3081 = vmatpush2.bf16.msra.mxu0 0
    %3082 = vmatprep.subr.bf16.mxu0 0
    %3083 = vmatpush2.bf16.msra.mxu0 0
    %3084 = vmatprep.subr.bf16.mxu0 0
    %3085 = vmatpush2.bf16.msra.mxu0 0
    %3086 = vmatprep.subr.bf16.mxu0 0
    %3087 = vmatpush2.bf16.msra.mxu0 0
    %3088 = vmatprep.subr.bf16.mxu0 0
    %3089 = vmatpush2.bf16.msra.mxu0 0
    %3090 = vmatprep.subr.bf16.mxu0 0
    %3091 = vmatpush2.bf16.msra.mxu0 0
    %3092 = vmatprep.subr.bf16.mxu0 0
    %3093 = vmatpush2.bf16.msra.mxu0 0
    %3094 = vmatprep.subr.bf16.mxu0 0
    %3095 = vmatpush2.bf16.msra.mxu0 0
    %3096 = vmatprep.mubr.bf16.mxu0 0
    %3097 = vmatmul.mubr.bf16.gmra.mxu0 %v3059
    %v3098 = vpop.f32.mrf.mxu0
    %v3099 = vadd.f32 0.0, %v3098
    %v3100 = vpop.f32.mrf.mxu0
    %v3101 = vpop.f32.mrf.mxu0
    %v3102 = vpop.f32.mrf.mxu0
    %3103 = vdwg.mxu0
    %3104 = vrot.lane.b32.xlu0 %v2251, 40
    %v3105 = vpop.permute.xlu0 %3104
    %v3107 = vsel %vm572, %v3055, 0
    %v3110 = vsel %vm576, %v3105, 0
    %3112 = vmatprep.subr.bf16.mxu0 0
    %3113 = vmatpush1.bf16.msra.mxu0 0
    %3114 = vmatprep.subr.bf16.mxu0 0
    %3115 = vmatpush1.bf16.msra.mxu0 0
    %3116 = vmatprep.subr.bf16.mxu0 0
    %3117 = vmatpush1.bf16.msra.mxu0 0
    %3118 = vmatprep.subr.bf16.mxu0 0
    %3119 = vmatpush1.bf16.msra.mxu0 0
    %3120 = vmatprep.subr.bf16.mxu0 0
    %3121 = vmatpush1.bf16.msra.mxu0 0
    %3122 = vmatprep.subr.bf16.mxu0 0
    %3123 = vmatpush1.bf16.msra.mxu0 0
    %3124 = vmatprep.subr.bf16.mxu0 0
    %3125 = vmatpush1.bf16.msra.mxu0 0
    %3126 = vmatprep.subr.bf16.mxu0 0
    %3127 = vmatpush1.bf16.msra.mxu0 %v3110
    %3128 = vmatprep.subr.bf16.mxu0 0
    %3129 = vmatpush2.bf16.msra.mxu0 0
    %3130 = vmatprep.subr.bf16.mxu0 0
    %3131 = vmatpush2.bf16.msra.mxu0 0
    %3132 = vmatprep.subr.bf16.mxu0 0
    %3133 = vmatpush2.bf16.msra.mxu0 0
    %3134 = vmatprep.subr.bf16.mxu0 0
    %3135 = vmatpush2.bf16.msra.mxu0 0
    %3136 = vmatprep.subr.bf16.mxu0 0
    %3137 = vmatpush2.bf16.msra.mxu0 0
    %3138 = vmatprep.subr.bf16.mxu0 0
    %3139 = vmatpush2.bf16.msra.mxu0 0
    %3140 = vmatprep.subr.bf16.mxu0 0
    %3141 = vmatpush2.bf16.msra.mxu0 0
    %3142 = vmatprep.subr.bf16.mxu0 0
    %3143 = vmatpush2.bf16.msra.mxu0 0
    %3144 = vmatprep.mubr.bf16.mxu0 0
    %3145 = vmatmul.mubr.bf16.gmra.mxu0 %v3107
    %v3146 = vpop.f32.mrf.mxu0
    %v3147 = vadd.f32 0.0, %v3146
    %v3148 = vpop.f32.mrf.mxu0
    %v3149 = vpop.f32.mrf.mxu0
    %v3150 = vpop.f32.mrf.mxu0
    %3151 = vdwg.mxu0
    %3154 = vrot.lane.b32.xlu0 %v3099, 24
    %v3155 = vpop.permute.xlu0 %3154
    %3156 = vrot.lane.b32.xlu0 %v3147, 24
    %v3157 = vpop.permute.xlu0 %3156
    %3160 = vst.msk [vmem:[#allocation2] sm:$0xff] %vm1803, %v3155
    %3161 = vst.msk [vmem:[#allocation2 + $0x8] sm:$0xff] %vm1803, %v3157
    %v3162 = vld [vmem:[#allocation2] sm:$0xff]
    %v3163 = vld [vmem:[#allocation2 + $0x8] sm:$0xff]
    %v3164 = vpack.c.bf16 %v3163, %v3162
    %s3165 = scalar_lea.vmem %s7, 16
    %v3166 = vld [vmem:[%s3165] sm:$0xf]
    %v3167 = vld [vmem:[%s3165 + $0x4] sm:$0xf]
    %v3168 = vld [vmem:[%s3165 + $0x8] sm:$0xf]
    %v3169 = vld [vmem:[%s3165 + $0xc] sm:$0xf]
    %v3170 = vlaneseq
    %v3171 = vshrl.u32 %v3170, 7
    %v3172 = vsub.s32 3, %v3171
    %v3173 = vrot.slane %v2145, %v3172
    %v3178 = vunpack.c.l.b16 %v3166
    %v3179 = vunpack.c.l.b16 %v3167
    %v3180 = vunpack.c.l.b16 %v3168
    %v3181 = vunpack.c.l.b16 %v3169
    %v3182 = vpack.c.b16 %v3179, %v3178
    %v3183 = vpack.c.b16 %v3181, %v3180
    %v3187 = vsel %vm520, %v3164, 0
    %3189 = vmatprep.subr.bf16.mxu0 0
    %3190 = vmatpush1.bf16.msra.mxu0 0
    %3191 = vmatprep.subr.bf16.mxu0 0
    %3192 = vmatpush1.bf16.msra.mxu0 0
    %3193 = vmatprep.subr.bf16.mxu0 0
    %3194 = vmatpush1.bf16.msra.mxu0 0
    %3195 = vmatprep.subr.bf16.mxu0 0
    %3196 = vmatpush1.bf16.msra.mxu0 0
    %3197 = vmatprep.subr.bf16.mxu0 0
    %3198 = vmatpush1.bf16.msra.mxu0 0
    %3199 = vmatprep.subr.bf16.mxu0 0
    %3200 = vmatpush1.bf16.msra.mxu0 0
    %3201 = vmatprep.subr.bf16.mxu0 0
    %3202 = vmatpush1.bf16.msra.mxu0 %v3183
    %3203 = vmatprep.subr.bf16.mxu0 0
    %3204 = vmatpush1.bf16.msra.mxu0 %v3182
    %3205 = vmatprep.subr.bf16.mxu0 0
    %3206 = vmatpush2.bf16.msra.mxu0 0
    %3207 = vmatprep.subr.bf16.mxu0 0
    %3208 = vmatpush2.bf16.msra.mxu0 0
    %3209 = vmatprep.subr.bf16.mxu0 0
    %3210 = vmatpush2.bf16.msra.mxu0 0
    %3211 = vmatprep.subr.bf16.mxu0 0
    %3212 = vmatpush2.bf16.msra.mxu0 0
    %3213 = vmatprep.subr.bf16.mxu0 0
    %3214 = vmatpush2.bf16.msra.mxu0 0
    %3215 = vmatprep.subr.bf16.mxu0 0
    %3216 = vmatpush2.bf16.msra.mxu0 0
    %3217 = vmatprep.subr.bf16.mxu0 0
    %3218 = vmatpush2.bf16.msra.mxu0 0
    %3219 = vmatprep.subr.bf16.mxu0 0
    %3220 = vmatpush2.bf16.msra.mxu0 0
    %3221 = vmatprep.mubr.bf16.mxu0 0
    %3222 = vmatmul.mubr.bf16.gmra.mxu0 %v3187
    %v3223 = vpop.f32.mrf.mxu0
    %v3224 = vadd.f32 %v3173, %v3223
    %v3225 = vpop.f32.mrf.mxu0
    %v3226 = vpop.f32.mrf.mxu0
    %v3227 = vadd.f32 %v3173, %v3226
    %v3228 = vpop.f32.mrf.mxu0
    %3229 = vdwg.mxu0
    %v3230 = vadd.f32 %v2142, %v3224
    %v3231 = vadd.f32 %v2143, %v3227
    %v3232 = vsel %vm520, %v3230, 0.0
    %3233 = vadd.xlane.f32.xlu0 %v3232
    %v3234 = vpop.xlane.xlu0 %3233
    %v3235 = vsel %vm520, %v3231, 0.0
    %3236 = vadd.xlane.f32.xlu0 %v3235
    %v3237 = vpop.xlane.xlu0 %3236
    %v3238 = vmul.f32 %v3234, %v527
    %v3239 = vmul.f32 %v3237, %v527
    %v3240 = vsub.f32 %v3230, %v3238
    %v3241 = vsub.f32 %v3231, %v3239
    %v3242 = vmul.f32 %v3240, %v3240
    %v3243 = vmul.f32 %v3241, %v3241
    %v3244 = vsel %vm520, %v3242, 0.0
    %3245 = vadd.xlane.f32.xlu0 %v3244
    %v3246 = vpop.xlane.xlu0 %3245
    %v3247 = vsel %vm520, %v3243, 0.0
    %3248 = vadd.xlane.f32.xlu0 %v3247
    %v3249 = vpop.xlane.xlu0 %3248
    %v3250 = vmul.f32 %v3246, %v527
    %v3251 = vmul.f32 %v3249, %v527
    %v3252 = vadd.f32 %v3250, 1e-05
    %v3253 = vadd.f32 %v3251, 1e-05
    %v3254 = vrsqrt.pop %v3252
    %v3255 = vrsqrt.pop %v3253
    %v3256 = vmul.f32 %v3240, %v3254
    %v3257 = vmul.f32 %v3241, %v3255
    %v3258 = vlaneseq
    %v3259 = vshrl.u32 %v3258, 7
    %v3260 = vsub.s32 4, %v3259
    %v3261 = vrot.slane %v2145, %v3260
    %v3262 = vmul.f32 %v3256, %v3261
    %v3263 = vmul.f32 %v3257, %v3261
    %v3264 = vlaneseq
    %v3265 = vshrl.u32 %v3264, 7
    %v3266 = vsub.s32 5, %v3265
    %v3267 = vrot.slane %v2145, %v3266
    %v3268 = vadd.f32 %v3262, %v3267
    %v3269 = vadd.f32 %v3263, %v3267
    %v3270 = vpack.c.bf16 %v3269, %v3268
    %s3271 = scalar_lea.vmem %s8, 16
    %v3272 = vld [vmem:[%s3271] sm:$0xf]
    %v3273 = vld [vmem:[%s3271 + $0x4] sm:$0xf]
    %v3274 = vld [vmem:[%s3271 + $0x8] sm:$0xf]
    %v3275 = vld [vmem:[%s3271 + $0xc] sm:$0xf]
    %v3276 = vlaneseq
    %v3277 = vshrl.u32 %v3276, 7
    %v3278 = vsub.s32 6, %v3277
    %v3279 = vrot.slane %v2145, %v3278
    %v3284 = vunpack.c.l.b16 %v3272
    %v3285 = vunpack.c.l.b16 %v3273
    %v3286 = vunpack.c.l.b16 %v3274
    %v3287 = vunpack.c.l.b16 %v3275
    %v3288 = vpack.c.b16 %v3285, %v3284
    %v3289 = vpack.c.b16 %v3287, %v3286
    %v3293 = vsel %vm520, %v3270, 0
    %3295 = vmatprep.subr.bf16.mxu0 0
    %3296 = vmatpush1.bf16.msra.mxu0 0
    %3297 = vmatprep.subr.bf16.mxu0 0
    %3298 = vmatpush1.bf16.msra.mxu0 0
    %3299 = vmatprep.subr.bf16.mxu0 0
    %3300 = vmatpush1.bf16.msra.mxu0 0
    %3301 = vmatprep.subr.bf16.mxu0 0
    %3302 = vmatpush1.bf16.msra.mxu0 0
    %3303 = vmatprep.subr.bf16.mxu0 0
    %3304 = vmatpush1.bf16.msra.mxu0 0
    %3305 = vmatprep.subr.bf16.mxu0 0
    %3306 = vmatpush1.bf16.msra.mxu0 0
    %3307 = vmatprep.subr.bf16.mxu0 0
    %3308 = vmatpush1.bf16.msra.mxu0 %v3289
    %3309 = vmatprep.subr.bf16.mxu0 0
    %3310 = vmatpush1.bf16.msra.mxu0 %v3288
    %3311 = vmatprep.subr.bf16.mxu0 0
    %3312 = vmatpush2.bf16.msra.mxu0 0
    %3313 = vmatprep.subr.bf16.mxu0 0
    %3314 = vmatpush2.bf16.msra.mxu0 0
    %3315 = vmatprep.subr.bf16.mxu0 0
    %3316 = vmatpush2.bf16.msra.mxu0 0
    %3317 = vmatprep.subr.bf16.mxu0 0
    %3318 = vmatpush2.bf16.msra.mxu0 0
    %3319 = vmatprep.subr.bf16.mxu0 0
    %3320 = vmatpush2.bf16.msra.mxu0 0
    %3321 = vmatprep.subr.bf16.mxu0 0
    %3322 = vmatpush2.bf16.msra.mxu0 0
    %3323 = vmatprep.subr.bf16.mxu0 0
    %3324 = vmatpush2.bf16.msra.mxu0 0
    %3325 = vmatprep.subr.bf16.mxu0 0
    %3326 = vmatpush2.bf16.msra.mxu0 0
    %3327 = vmatprep.mubr.bf16.mxu0 0
    %3328 = vmatmul.mubr.bf16.gmra.mxu0 %v3293
    %v3329 = vpop.f32.mrf.mxu0
    %v3330 = vadd.f32 %v3279, %v3329
    %v3331 = vpop.f32.mrf.mxu0
    %v3332 = vpop.f32.mrf.mxu0
    %v3333 = vadd.f32 %v3279, %v3332
    %v3334 = vpop.f32.mrf.mxu0
    %3335 = vdwg.mxu0
    %v3336 = vmul.f32 %v3330, 0.5
    %v3337 = vmul.f32 %v3333, 0.5
    %v3338 = vmul.f32 %v3330, 0.70710677
    %v3339 = vmul.f32 %v3333, 0.70710677
    %vm3340 = vcmp.ge.f32.partialorder %v3338, 0.0
    %vm3341 = vcmp.ge.f32.partialorder %v3339, 0.0
    %v3342 = vsel %vm3340, 1.0, -1.0
    %v3343 = vsel %vm3341, 1.0, -1.0
    %v3344 = vand.u32 2147483647, %v3338
    %v3345 = vand.u32 2147483647, %v3339
    %v3346 = vmul.f32 %v3344, 0.3275911
    %v3347 = vmul.f32 %v3345, 0.3275911
    %v3348 = vadd.f32 %v3346, 1.0
    %v3349 = vadd.f32 %v3347, 1.0
    %v3350 = vrcp.pop %v3348
    %v3351 = vmul.f32 1.0, %v3350
    %v3352 = vrcp.pop %v3349
    %v3353 = vmul.f32 1.0, %v3352
    %v3354 = vmul.f32 %v3351, 1.0614054
    %v3355 = vmul.f32 %v3353, 1.0614054
    %v3356 = vadd.f32 %v3354, -1.4531521
    %v3357 = vadd.f32 %v3355, -1.4531521
    %v3358 = vmul.f32 %v3356, %v3351
    %v3359 = vmul.f32 %v3357, %v3353
    %v3360 = vadd.f32 %v3358, 1.4214138
    %v3361 = vadd.f32 %v3359, 1.4214138
    %v3362 = vmul.f32 %v3360, %v3351
    %v3363 = vmul.f32 %v3361, %v3353
    %v3364 = vadd.f32 %v3362, -0.28449672
    %v3365 = vadd.f32 %v3363, -0.28449672
    %v3366 = vmul.f32 %v3364, %v3351
    %v3367 = vmul.f32 %v3365, %v3353
    %v3368 = vadd.f32 %v3366, 0.2548296
    %v3369 = vadd.f32 %v3367, 0.2548296
    %v3370 = vmul.f32 %v3368, %v3351
    %v3371 = vmul.f32 %v3369, %v3353
    %v3372 = vsub.f32 0.0, %v3344
    %v3373 = vsub.f32 0.0, %v3345
    %v3374 = vmul.f32 %v3372, %v3344
    %v3375 = vmul.f32 %v3373, %v3345
    %v3376 = vmul.f32 %v3374, 1.442695
    %v3377 = vpow.pop %v3376
    %v3378 = vmul.f32 %v3375, 1.442695
    %v3379 = vpow.pop %v3378
    %v3380 = vmul.f32 %v3370, %v3377
    %v3381 = vmul.f32 %v3371, %v3379
    %v3382 = vsub.f32 1.0, %v3380
    %v3383 = vsub.f32 1.0, %v3381
    %v3384 = vmul.f32 %v3342, %v3382
    %v3385 = vmul.f32 %v3343, %v3383
    %v3386 = vadd.f32 %v3384, 1.0
    %v3387 = vadd.f32 %v3385, 1.0
    %v3388 = vmul.f32 %v3336, %v3386
    %v3389 = vmul.f32 %v3337, %v3387
    %v3390 = vpack.c.bf16 %v3389, %v3388
    %s3391 = scalar_lea.vmem %s9, 64
    %v3392 = vld [vmem:[%s3391] sm:$0xf]
    %v3393 = vld [vmem:[%s3391 + $0x4] sm:$0xf]
    %v3394 = vld [vmem:[%s3391 + $0x8] sm:$0xf]
    %v3395 = vld [vmem:[%s3391 + $0xc] sm:$0xf]
    %v3396 = vld [vmem:[%s3391 + $0x10] sm:$0xf]
    %v3397 = vld [vmem:[%s3391 + $0x14] sm:$0xf]
    %v3398 = vld [vmem:[%s3391 + $0x18] sm:$0xf]
    %v3399 = vld [vmem:[%s3391 + $0x1c] sm:$0xf]
    %v3400 = vld [vmem:[%s3391 + $0x20] sm:$0xf]
    %v3401 = vld [vmem:[%s3391 + $0x24] sm:$0xf]
    %v3402 = vld [vmem:[%s3391 + $0x28] sm:$0xf]
    %v3403 = vld [vmem:[%s3391 + $0x2c] sm:$0xf]
    %v3404 = vld [vmem:[%s3391 + $0x30] sm:$0xf]
    %v3405 = vld [vmem:[%s3391 + $0x34] sm:$0xf]
    %v3406 = vld [vmem:[%s3391 + $0x38] sm:$0xf]
    %v3407 = vld [vmem:[%s3391 + $0x3c] sm:$0xf]
    %v3408 = vlaneseq
    %v3409 = vshrl.u32 %v3408, 7
    %v3410 = vsub.s32 7, %v3409
    %v3411 = vrot.slane %v2145, %v3410
    %v3428 = vunpack.c.l.b16 %v3392
    %v3429 = vunpack.c.l.b16 %v3393
    %v3430 = vunpack.c.l.b16 %v3394
    %v3431 = vunpack.c.l.b16 %v3395
    %v3432 = vunpack.c.l.b16 %v3396
    %v3433 = vunpack.c.l.b16 %v3397
    %v3434 = vunpack.c.l.b16 %v3398
    %v3435 = vunpack.c.l.b16 %v3399
    %v3436 = vunpack.c.l.b16 %v3400
    %v3437 = vunpack.c.l.b16 %v3401
    %v3438 = vunpack.c.l.b16 %v3402
    %v3439 = vunpack.c.l.b16 %v3403
    %v3440 = vunpack.c.l.b16 %v3404
    %v3441 = vunpack.c.l.b16 %v3405
    %v3442 = vunpack.c.l.b16 %v3406
    %v3443 = vunpack.c.l.b16 %v3407
    %v3444 = vpack.c.b16 %v3429, %v3428
    %v3445 = vpack.c.b16 %v3431, %v3430
    %v3446 = vpack.c.b16 %v3433, %v3432
    %v3447 = vpack.c.b16 %v3435, %v3434
    %v3448 = vpack.c.b16 %v3437, %v3436
    %v3449 = vpack.c.b16 %v3439, %v3438
    %v3450 = vpack.c.b16 %v3441, %v3440
    %v3451 = vpack.c.b16 %v3443, %v3442
    %3460 = vmatprep.subr.bf16.mxu0 0
    %3461 = vmatpush1.bf16.msra.mxu0 %v3451
    %3462 = vmatprep.subr.bf16.mxu0 0
    %3463 = vmatpush1.bf16.msra.mxu0 %v3450
    %3464 = vmatprep.subr.bf16.mxu0 0
    %3465 = vmatpush1.bf16.msra.mxu0 %v3449
    %3466 = vmatprep.subr.bf16.mxu0 0
    %3467 = vmatpush1.bf16.msra.mxu0 %v3448
    %3468 = vmatprep.subr.bf16.mxu0 0
    %3469 = vmatpush1.bf16.msra.mxu0 %v3447
    %3470 = vmatprep.subr.bf16.mxu0 0
    %3471 = vmatpush1.bf16.msra.mxu0 %v3446
    %3472 = vmatprep.subr.bf16.mxu0 0
    %3473 = vmatpush1.bf16.msra.mxu0 %v3445
    %3474 = vmatprep.subr.bf16.mxu0 0
    %3475 = vmatpush1.bf16.msra.mxu0 %v3444
    %3476 = vmatprep.subr.bf16.mxu0 0
    %3477 = vmatpush2.bf16.msra.mxu0 0
    %3478 = vmatprep.subr.bf16.mxu0 0
    %3479 = vmatpush2.bf16.msra.mxu0 0
    %3480 = vmatprep.subr.bf16.mxu0 0
    %3481 = vmatpush2.bf16.msra.mxu0 0
    %3482 = vmatprep.subr.bf16.mxu0 0
    %3483 = vmatpush2.bf16.msra.mxu0 0
    %3484 = vmatprep.subr.bf16.mxu0 0
    %3485 = vmatpush2.bf16.msra.mxu0 0
    %3486 = vmatprep.subr.bf16.mxu0 0
    %3487 = vmatpush2.bf16.msra.mxu0 0
    %3488 = vmatprep.subr.bf16.mxu0 0
    %3489 = vmatpush2.bf16.msra.mxu0 0
    %3490 = vmatprep.subr.bf16.mxu0 0
    %3491 = vmatpush2.bf16.msra.mxu0 0
    %3492 = vmatprep.mubr.bf16.mxu0 0
    %3493 = vmatmul.mubr.bf16.gmra.mxu0 %v3390
    %v3494 = vpop.f32.mrf.mxu0
    %v3495 = vadd.f32 %v3411, %v3494
    %v3496 = vpop.f32.mrf.mxu0
    %v3497 = vpop.f32.mrf.mxu0
    %v3498 = vadd.f32 %v3411, %v3497
    %v3499 = vpop.f32.mrf.mxu0
    %3500 = vdwg.mxu0
    %v3501 = vadd.f32 %v3230, %v3495
    %v3502 = vadd.f32 %v3231, %v3498
    %v3503 = vsel %vm520, %v3501, 0.0
    %3504 = vadd.xlane.f32.xlu0 %v3503
    %v3505 = vpop.xlane.xlu0 %3504
    %v3506 = vsel %vm520, %v3502, 0.0
    %3507 = vadd.xlane.f32.xlu0 %v3506
    %v3508 = vpop.xlane.xlu0 %3507
    %v3509 = vmul.f32 %v3505, %v527
    %v3510 = vmul.f32 %v3508, %v527
    %v3511 = vsub.f32 %v3501, %v3509
    %v3512 = vsub.f32 %v3502, %v3510
    %v3513 = vmul.f32 %v3511, %v3511
    %v3514 = vmul.f32 %v3512, %v3512
    %v3515 = vsel %vm520, %v3513, 0.0
    %3516 = vadd.xlane.f32.xlu0 %v3515
    %v3517 = vpop.xlane.xlu0 %3516
    %v3518 = vsel %vm520, %v3514, 0.0
    %3519 = vadd.xlane.f32.xlu0 %v3518
    %v3520 = vpop.xlane.xlu0 %3519
    %v3521 = vmul.f32 %v3517, %v527
    %v3522 = vmul.f32 %v3520, %v527
    %v3523 = vadd.f32 %v3521, 1e-05
    %v3524 = vadd.f32 %v3522, 1e-05
    %v3525 = vrsqrt.pop %v3523
    %v3526 = vrsqrt.pop %v3524
    %v3527 = vmul.f32 %v3511, %v3525
    %v3528 = vmul.f32 %v3512, %v3526
    %v3529 = vlaneseq
    %v3530 = vshrl.u32 %v3529, 7
    %v3531 = vsub.s32 5, %v3530
    %v3532 = vrot.slane %v40, %v3531
    %v3533 = vmul.f32 %v3527, %v3532
    %v3534 = vmul.f32 %v3528, %v3532
    %v3535 = vlaneseq
    %v3536 = vshrl.u32 %v3535, 7
    %v3537 = vsub.s32 6, %v3536
    %v3538 = vrot.slane %v40, %v3537
    %v3539 = vadd.f32 %v3533, %v3538
    %v3540 = vadd.f32 %v3534, %v3538
    %v3541 = vsel %vm520, %v3539, -inf
    %v3542 = vrot.slane %v3541, 4
    %v3543 = vmax.f32 %v3541, %v3542
    %v3544 = vrot.slane %v3543, 2
    %v3545 = vmax.f32 %v3543, %v3544
    %v3546 = vrot.slane %v3545, 1
    %v3547 = vmax.f32 %v3545, %v3546
    %v3548 = vsel %vm520, %v3540, -inf
    %v3549 = vrot.slane %v3548, 4
    %v3550 = vmax.f32 %v3548, %v3549
    %v3551 = vrot.slane %v3550, 2
    %v3552 = vmax.f32 %v3550, %v3551
    %v3553 = vrot.slane %v3552, 1
    %v3554 = vmax.f32 %v3552, %v3553
    %v3555 = vmax.f32 %v3547, 0.0
    %v3556 = vmax.f32 %v3554, 0.0
    %vm3559 = vcmask 1041409
    %v3560 = vsel %vm3559, %v3556, %v3555
    %vm3562 = vcmask 254976
    %3563 = vst.msk [vmem:[#allocation3] sm:$0x3] %vm3562, %v3560
    // Predicated region
    $region46: #{tpu_custom_call.1} parent=1 // pred_check
      _
    $region47: #{tpu_custom_call.1} parent=1 // pred_check_branch
      %3565 = sbr.rel (0) target = $region49
    $region48: #{tpu_custom_call.1} parent=1 // pred_region
      %s3567 = ssub.s32 32, 32
      %3568 = vsyncadd [#allocation4], %s3567
      %s3570 = sshll.u32 [#allocation3], 4
      %s3571 = int_to_ptr.vmem [resolvable:$true] %s3570
      %3573 = dma.vmem_to_hbm [thread:$0]  %s3571, 32, %s11, [#allocation4]
    $region49: #{tpu_custom_call.1} parent=1 // pred_fallthru
      _
    // Predicated region
    $region50: #{tpu_custom_call.1} parent=1 // pred_check
      _
    $region51: #{tpu_custom_call.1} parent=1 // pred_check_branch
      %3575 = sbr.rel (0) target = $region53
    $region52: #{tpu_custom_call.1} parent=1 // pred_region
      %3576 = dma.done [#allocation4], 32
    $region53: #{tpu_custom_call.1} parent=1 // pred_fallthru
      _
    %3577 = vsyncpa [#allocation4], 1

</llo_original>
